<compile_context>
chip_gen: v7x
topology: tpu7x:2x2x1
jax: 0.10.0
libtpu: 0.0.40
codegen_flags: <defaults>
</compile_context>

<pallas_src>
import functools

import jax
import jax.numpy as jnp
from jax.experimental import pallas as pl
from jax.experimental.pallas import tpu as pltpu


# ------------------------------------------------------------------ fused kernel
def _fused_kernel(B, T,
                  adj_b_ref, adj_t_ref, node_ref,
                  w_gcn_ref, b_gcn_ref, perm_ref,
                  w3_ref, b0_ref, whh0_ref, wl1_ref, b1_ref,
                  watt_ref, wfc_ref, bfc_ref,
                  wffn_ref, bffn_ref, whead_ref, bhead_ref,
                  out_ref, gx_ref):
    f32 = jnp.float32
    dot = functools.partial(jnp.dot, preferred_element_type=f32)
    S, N, _ = adj_b_ref.shape            # samples (= B*T), nodes
    Fout = w_gcn_ref.shape[1] // 2       # GCN output features per modality
    H2 = whh0_ref.shape[0]               # 2*H  (bike | taxi hidden)
    H = H2 // 2

    # ---------------- spatial stage: GCN for both modalities ------------------
    # out[b,t] = ReLU(adj[b,t] @ (node[b,t] @ W) + bias); the feature projection is
    # ONE batched matmul over all samples & modalities (block-diag W).
    proj = dot(node_ref[...], w_gcn_ref[...])             # (S*N, 2F): [bike | taxi]
    aggs_b, aggs_t = [], []
    for t in range(T):                                    # assemble in TIME-major order
        for b in range(B):
            s = b * T + t                                 # storage order of the inputs
            p = proj[s * N:(s + 1) * N, :]                # (N, 2F), vreg-aligned slice
            aggs_b.append(dot(adj_b_ref[s], p[:, :Fout]))
            aggs_t.append(dot(adj_t_ref[s], p[:, Fout:]))
    h = jnp.concatenate([jnp.concatenate(aggs_b, axis=0),
                         jnp.concatenate(aggs_t, axis=0)], axis=1)   # (S*N, 2F)
    h = jnp.maximum(h + b_gcn_ref[...], 0.0)

    # Regroup rows (sample-major, node-minor) -> (node-major, sample-minor) with a
    # constant permutation matmul: the MXU does the sublane data movement that the
    # (N,Fout)->N*Fout flatten needs, no in-register reshape required.
    hg = dot(perm_ref[...], h)                            # (N*S, 2F), row = n*S + s

    # Layer-0 input projection for every time step (independent of the recurrence,
    # so the scheduler can overlap it with the serial h-chain):
    #   gx[s] = flatten(gcn_bike[s]) @ Wih0_bike + flatten(gcn_taxi[s]) @ Wih0_taxi
    #         = sum_n hg[n*S:(n+1)*S] @ W3[n]
    acc = dot(hg[0:S, :], w3_ref[0])
    for n in range(1, N):
        acc = acc + dot(hg[n * S:(n + 1) * S, :], w3_ref[n])
    gx_ref[...] = acc + b0_ref[...]                       # (S, 8H), row = t*B + b

    # ---------------- temporal stage: 2-layer LSTM, modality block-diag -------
    # Gate columns packed [i_b,i_t,f_b,f_t,o_b,o_t,g_b,g_t] (H each) -> one sigmoid
    # over (B, 6H) and one tanh over (B, 2H); gate tensor is (B, 128) lanes.
    def cell(gates, c_prev):
        sg = jax.nn.sigmoid(gates[:, :3 * H2])
        g = jnp.tanh(gates[:, 3 * H2:])
        i_, f_, o_ = sg[:, :H2], sg[:, H2:2 * H2], sg[:, 2 * H2:]
        c = f_ * c_prev + i_ * g
        return o_ * jnp.tanh(c), c

    zeros = jnp.zeros((B, H2), f32)
    h0, c0, h1, c1 = zeros, zeros, zeros, zeros
    es, hs = [], []
    for t in range(T):                                    # T = 4, fully unrolled
        g0 = gx_ref[pl.ds(t * B, B), :] + dot(h0, whh0_ref[...])
        h0, c0 = cell(g0, c0)
        # layer-1: input + recurrent matmuls merged into one issue
        g1 = dot(jnp.concatenate([h0, h1], axis=1), wl1_ref[...]) + b1_ref[...]
        h1, c1 = cell(g1, c1)
        # per-modality temporal-attention scores; tanh output is bounded so plain
        # exp is numerically identical to max-subtracted softmax.
        es.append(jnp.exp(jnp.tanh(dot(h1, watt_ref[...]))))      # (B, 2)
        hs.append(h1)

    esum = es[0]
    for t in range(1, T):
        esum = esum + es[t]
    inv = 1.0 / esum                                      # exact reciprocal (review note)
    ctx_b = jnp.zeros((B, H), f32)
    ctx_t = jnp.zeros((B, H), f32)
    for t in range(T):
        w = es[t] * inv                                   # (B, 2) softmax weights
        ctx_b = ctx_b + w[:, 0:1] * hs[t][:, :H]
        ctx_t = ctx_t + w[:, 1:2] * hs[t][:, H:]
    ctx = jnp.concatenate([ctx_b, ctx_t], axis=1)         # (B, 2H)

    # ---------------- prediction heads (all merged) ----------------------------
    l = dot(ctx, wfc_ref[...]) + bfc_ref[...]             # (B, 2N) = [l1 | l2]
    Nn = l.shape[1] // 2
    ffn = jnp.maximum(dot(l[:, :Nn] + l[:, Nn:], wffn_ref[...]) + bffn_ref[...], 0.0)
    head_in = jnp.concatenate([ffn, l], axis=1)           # (B, 6N) = [ffn | l1 | l2]
    out_ref[...] = jnp.maximum(dot(head_in, whead_ref[...]) + bhead_ref[...], 0.0)


# ------------------------------------------------------------------ model wrapper
def net_forward_fn(params, bike_node, bike_adj, taxi_node, taxi_adj):
    B, T, N, Fin = bike_node.shape
    S = B * T
    # free, contiguous host-side reshapes / concat only
    node_cat = jnp.concatenate([bike_node, taxi_node], axis=-1).reshape(S * N, 2 * Fin)
    adj_b = bike_adj.reshape(S, N, N)
    adj_t = taxi_adj.reshape(S, N, N)
    H8 = params["b0"].shape[-1]
    out = pl.pallas_call(
        functools.partial(_fused_kernel, B, T),
        out_shape=jax.ShapeDtypeStruct((B, 4 * N), jnp.float32),
        scratch_shapes=[pltpu.VMEM((S, H8), jnp.float32)],       # gx staging buffer
        cost_estimate=pl.CostEstimate(flops=600_000, transcendentals=4_096,
                                      bytes_accessed=64_000),
    )(adj_b, adj_t, node_cat,
      params["w_gcn"], params["b_gcn"], params["perm"],
      params["w3_ih0"], params["b0"], params["whh0"], params["wl1"], params["b1"],
      params["watt"], params["wfc"], params["bfc"],
      params["wffn"], params["bffn"], params["whead"], params["bhead"])
    return out[:, :N], out[:, N:2 * N], out[:, 2 * N:3 * N], out[:, 3 * N:]


net_forward = jax.jit(net_forward_fn)


# ------------------------------------------------------------------ parameters
def make_params(key, batch_size, window_size, node_num, in_features, out_features,
                lstm_features):
    N, H, Fin, Fout = node_num, lstm_features, in_features, out_features
    D0, S = N * Fout, batch_size * window_size
    ks = iter(jax.random.split(key, 64))
    nrm = lambda shape, s=0.1: (s * jax.random.normal(next(ks), shape)).astype(jnp.float32)

    # natural (per-modality / per-head) parameters, PyTorch-like layouts
    gcn_w = [nrm((Fin, Fout)) for _ in range(2)]
    gcn_b = [nrm((1, Fout)) for _ in range(2)]

    def rnn_branch():
        return dict(wih0=nrm((D0, 4 * H)), whh0=nrm((H, 4 * H)), b0=nrm((1, 4 * H)),
                    wih1=nrm((H, 4 * H)), whh1=nrm((H, 4 * H)), b1=nrm((1, 4 * H)),
                    watt=nrm((1, H)), wfc=nrm((H, N)), bfc=nrm((1, N)))
    r = [rnn_branch(), rnn_branch()]

    ffn_w, ffn_b = nrm((N, 4 * N)), nrm((1, 4 * N))
    heads = [(nrm((N, N)), nrm((1, N))) for _ in range(4)]

    # ---- packing helpers: modality block-diag LSTM, packed gate column order
    #      [i_b, i_t, f_b, f_t, o_b, o_t, g_b, g_t]  (natural per-modality order i,f,g,o)
    def place_gates(w, m):
        i_, f_, g_, o_ = (w[:, k * H:(k + 1) * H] for k in range(4))
        z = jnp.zeros_like(i_)
        blocks = [i_, z, f_, z, o_, z, g_, z] if m == 0 else [z, i_, z, f_, z, o_, z, g_]
        return jnp.concatenate(blocks, axis=1)

    # GCN (both modalities side by side)
    w_gcn = jnp.zeros((2 * Fin, 2 * Fout), jnp.float32)
    w_gcn = w_gcn.at[:Fin, :Fout].set(gcn_w[0]).at[Fin:, Fout:].set(gcn_w[1])
    b_gcn = jnp.concatenate(gcn_b, axis=1)

    # constant row-regroup permutation used in-kernel: target row n*S+s <- source row s*N+n
    src = (jnp.arange(N)[:, None] + N * jnp.arange(S)[None, :]).reshape(-1)
    perm = jnp.eye(S * N, dtype=jnp.float32)[src]

    # per-node layer-0 input blocks: rows [bike features of node n ; taxi features of node n]
    w3 = jnp.stack([
        jnp.concatenate([place_gates(r[0]["wih0"][n * Fout:(n + 1) * Fout], 0),
                         place_gates(r[1]["wih0"][n * Fout:(n + 1) * Fout], 1)], axis=0)
        for n in range(N)])                                            # (N, 2F, 8H)

    whh0 = jnp.concatenate([place_gates(r[0]["whh0"], 0),
                            place_gates(r[1]["whh0"], 1)], axis=0)     # (2H, 8H)
    # layer-1: input [h0_b, h0_t, h1_b, h1_t] -> stacked [wih1_b; wih1_t; whh1_b; whh1_t]
    wl1 = jnp.concatenate([place_gates(r[0]["wih1"], 0), place_gates(r[1]["wih1"], 1),
                           place_gates(r[0]["whh1"], 0), place_gates(r[1]["whh1"], 1)],
                          axis=0)                                      # (4H, 8H)
    b0 = place_gates(r[0]["b0"], 0) + place_gates(r[1]["b0"], 1)
    b1 = place_gates(r[0]["b1"], 0) + place_gates(r[1]["b1"], 1)

    watt = jnp.zeros((2 * H, 2), jnp.float32)                          # block-diag score vecs
    watt = watt.at[:H, 0].set(r[0]["watt"][0]).at[H:, 1].set(r[1]["watt"][0])

    wfc = jnp.zeros((2 * H, 2 * N), jnp.float32)                       # block-diag FC
    wfc = wfc.at[:H, :N].set(r[0]["wfc"]).at[H:, N:].set(r[1]["wfc"])
    bfc = jnp.concatenate([r[0]["bfc"], r[1]["bfc"]], axis=1)

    # ffn1 columns permuted so contiguous chunk k == reshape(B, N, 4)[:, :, k]
    col_perm = jnp.array([4 * n + k for k in range(4) for n in range(N)], dtype=jnp.int32)
    wffn, bffn = ffn_w[:, col_perm], ffn_b[:, col_perm]

    # four Linear(N,N)+ReLU heads merged into ONE matmul:
    #   head_in = [ffn | l1 | l2];  rows = [blockdiag(W1..W4); l1-routing; l2-routing]
    zero = jnp.zeros((N, N), jnp.float32)
    whead_diag = jnp.zeros((4 * N, 4 * N), jnp.float32)
    for k, (w, _) in enumerate(heads):
        whead_diag = whead_diag.at[k * N:(k + 1) * N, k * N:(k + 1) * N].set(w)
    wl1_route = jnp.concatenate([heads[0][0], heads[1][0], zero, zero], axis=1)
    wl2_route = jnp.concatenate([zero, zero, heads[2][0], heads[3][0]], axis=1)
    whead = jnp.concatenate([whead_diag, wl1_route, wl2_route], axis=0)   # (6N, 4N)
    bhead = jnp.concatenate([b for _, b in heads], axis=1)                # (1, 4N)

    return dict(w_gcn=w_gcn, b_gcn=b_gcn, perm=perm, w3_ih0=w3, b0=b0, whh0=whh0,
                wl1=wl1, b1=b1, watt=watt, wfc=wfc, bfc=bfc,
                wffn=wffn, bffn=bffn, whead=whead, bhead=bhead)


# ------------------------------------------------------------------ driver
if __name__ == "__main__":
    batch_size, window_size, node_num = 2, 4, 8
    in_features, out_features, lstm_features = 2, 4, 16

    key = jax.random.PRNGKey(0)
    k_param, k_bn, k_ba, k_tn, k_ta = jax.random.split(key, 5)
    params = make_params(k_param, batch_size, window_size, node_num,
                         in_features, out_features, lstm_features)

    bike_node = jax.random.normal(k_bn, (batch_size, window_size, node_num, in_features), jnp.float32)
    bike_adj = jax.random.normal(k_ba, (batch_size, window_size, node_num, node_num), jnp.float32)
    taxi_node = jax.random.normal(k_tn, (batch_size, window_size, node_num, in_features), jnp.float32)
    taxi_adj = jax.random.normal(k_ta, (batch_size, window_size, node_num, node_num), jnp.float32)

    outs = net_forward(params, bike_node, bike_adj, taxi_node, taxi_adj)
    outs = jax.block_until_ready(outs)
    assert all(o.shape == (batch_size, node_num) for o in outs)
    print("KERNEL_OK")
</pallas_src>

<mosaic_0001>
module attributes {stable_mosaic.version = 11 : i64} {
  func.func @_fused_kernel(%arg0: memref<8x8x8xf32, #tpu.memory_space<vmem>>, %arg1: memref<8x8x8xf32, #tpu.memory_space<vmem>>, %arg2: memref<64x4xf32, #tpu.memory_space<vmem>>, %arg3: memref<4x8xf32, #tpu.memory_space<vmem>>, %arg4: memref<1x8xf32, #tpu.memory_space<vmem>>, %arg5: memref<64x64xf32, #tpu.memory_space<vmem>>, %arg6: memref<8x8x128xf32, #tpu.memory_space<vmem>>, %arg7: memref<1x128xf32, #tpu.memory_space<vmem>>, %arg8: memref<32x128xf32, #tpu.memory_space<vmem>>, %arg9: memref<64x128xf32, #tpu.memory_space<vmem>>, %arg10: memref<1x128xf32, #tpu.memory_space<vmem>>, %arg11: memref<32x2xf32, #tpu.memory_space<vmem>>, %arg12: memref<32x16xf32, #tpu.memory_space<vmem>>, %arg13: memref<1x16xf32, #tpu.memory_space<vmem>>, %arg14: memref<8x32xf32, #tpu.memory_space<vmem>>, %arg15: memref<1x32xf32, #tpu.memory_space<vmem>>, %arg16: memref<48x32xf32, #tpu.memory_space<vmem>>, %arg17: memref<1x32xf32, #tpu.memory_space<vmem>>, %arg18: memref<2x32xf32, #tpu.memory_space<vmem>>, %arg19: memref<8x128xf32, #tpu.memory_space<vmem>>) attributes {dimension_semantics = [], scalar_prefetch = 0 : i64, scratch_operands = 1 : i64, tpu.core_type = #tpu.core_type<tc>} {
    %c0 = arith.constant 0 : index
    %c0_0 = arith.constant 0 : index
    %0 = vector.load %arg2[%c0, %c0_0] : memref<64x4xf32, #tpu.memory_space<vmem>>, vector<64x4xf32>
    %c0_1 = arith.constant 0 : index
    %c0_2 = arith.constant 0 : index
    %1 = vector.load %arg3[%c0_1, %c0_2] : memref<4x8xf32, #tpu.memory_space<vmem>>, vector<4x8xf32>
    %cst = arith.constant dense<0.000000e+00> : vector<64x8xf32>
    %2 = tpu.matmul %0, %1, %cst {dimension_numbers = #tpu.dot_dimension_numbers<[1], [0], [0], [1], [0, 0, 1, 1], [], []>} : vector<64x4xf32>, vector<4x8xf32>, vector<64x8xf32> -> vector<64x8xf32>
    %3 = vector.extract_strided_slice %2 {offsets = [0, 0], sizes = [8, 8], strides = [1, 1]} : vector<64x8xf32> to vector<8x8xf32>
    %c0_3 = arith.constant 0 : index
    %c0_4 = arith.constant 0 : index
    %c0_5 = arith.constant 0 : index
    %4 = vector.load %arg0[%c0_3, %c0_4, %c0_5] : memref<8x8x8xf32, #tpu.memory_space<vmem>>, vector<1x8x8xf32>
    %5 = vector.shape_cast %4 : vector<1x8x8xf32> to vector<8x8xf32>
    %6 = vector.extract_strided_slice %3 {offsets = [0, 0], sizes = [8, 4], strides = [1, 1]} : vector<8x8xf32> to vector<8x4xf32>
    %cst_6 = arith.constant dense<0.000000e+00> : vector<8x4xf32>
    %7 = tpu.matmul %5, %6, %cst_6 {dimension_numbers = #tpu.dot_dimension_numbers<[1], [0], [0], [1], [0, 0, 1, 1], [], []>} : vector<8x8xf32>, vector<8x4xf32>, vector<8x4xf32> -> vector<8x4xf32>
    %c0_7 = arith.constant 0 : index
    %c0_8 = arith.constant 0 : index
    %c0_9 = arith.constant 0 : index
    %8 = vector.load %arg1[%c0_7, %c0_8, %c0_9] : memref<8x8x8xf32, #tpu.memory_space<vmem>>, vector<1x8x8xf32>
    %9 = vector.shape_cast %8 : vector<1x8x8xf32> to vector<8x8xf32>
    %10 = vector.extract_strided_slice %3 {offsets = [0, 4], sizes = [8, 4], strides = [1, 1]} : vector<8x8xf32> to vector<8x4xf32>
    %cst_10 = arith.constant dense<0.000000e+00> : vector<8x4xf32>
    %11 = tpu.matmul %9, %10, %cst_10 {dimension_numbers = #tpu.dot_dimension_numbers<[1], [0], [0], [1], [0, 0, 1, 1], [], []>} : vector<8x8xf32>, vector<8x4xf32>, vector<8x4xf32> -> vector<8x4xf32>
    %12 = vector.extract_strided_slice %2 {offsets = [32, 0], sizes = [8, 8], strides = [1, 1]} : vector<64x8xf32> to vector<8x8xf32>
    %c4 = arith.constant 4 : index
    %c0_11 = arith.constant 0 : index
    %c0_12 = arith.constant 0 : index
    %13 = vector.load %arg0[%c4, %c0_11, %c0_12] : memref<8x8x8xf32, #tpu.memory_space<vmem>>, vector<1x8x8xf32>
    %14 = vector.shape_cast %13 : vector<1x8x8xf32> to vector<8x8xf32>
    %15 = vector.extract_strided_slice %12 {offsets = [0, 0], sizes = [8, 4], strides = [1, 1]} : vector<8x8xf32> to vector<8x4xf32>
    %cst_13 = arith.constant dense<0.000000e+00> : vector<8x4xf32>
    %16 = tpu.matmul %14, %15, %cst_13 {dimension_numbers = #tpu.dot_dimension_numbers<[1], [0], [0], [1], [0, 0, 1, 1], [], []>} : vector<8x8xf32>, vector<8x4xf32>, vector<8x4xf32> -> vector<8x4xf32>
    %c4_14 = arith.constant 4 : index
    %c0_15 = arith.constant 0 : index
    %c0_16 = arith.constant 0 : index
    %17 = vector.load %arg1[%c4_14, %c0_15, %c0_16] : memref<8x8x8xf32, #tpu.memory_space<vmem>>, vector<1x8x8xf32>
    %18 = vector.shape_cast %17 : vector<1x8x8xf32> to vector<8x8xf32>
    %19 = vector.extract_strided_slice %12 {offsets = [0, 4], sizes = [8, 4], strides = [1, 1]} : vector<8x8xf32> to vector<8x4xf32>
    %cst_17 = arith.constant dense<0.000000e+00> : vector<8x4xf32>
    %20 = tpu.matmul %18, %19, %cst_17 {dimension_numbers = #tpu.dot_dimension_numbers<[1], [0], [0], [1], [0, 0, 1, 1], [], []>} : vector<8x8xf32>, vector<8x4xf32>, vector<8x4xf32> -> vector<8x4xf32>
    %21 = vector.extract_strided_slice %2 {offsets = [8, 0], sizes = [8, 8], strides = [1, 1]} : vector<64x8xf32> to vector<8x8xf32>
    %c1 = arith.constant 1 : index
    %c0_18 = arith.constant 0 : index
    %c0_19 = arith.constant 0 : index
    %22 = vector.load %arg0[%c1, %c0_18, %c0_19] : memref<8x8x8xf32, #tpu.memory_space<vmem>>, vector<1x8x8xf32>
    %23 = vector.shape_cast %22 : vector<1x8x8xf32> to vector<8x8xf32>
    %24 = vector.extract_strided_slice %21 {offsets = [0, 0], sizes = [8, 4], strides = [1, 1]} : vector<8x8xf32> to vector<8x4xf32>
    %cst_20 = arith.constant dense<0.000000e+00> : vector<8x4xf32>
    %25 = tpu.matmul %23, %24, %cst_20 {dimension_numbers = #tpu.dot_dimension_numbers<[1], [0], [0], [1], [0, 0, 1, 1], [], []>} : vector<8x8xf32>, vector<8x4xf32>, vector<8x4xf32> -> vector<8x4xf32>
    %c1_21 = arith.constant 1 : index
    %c0_22 = arith.constant 0 : index
    %c0_23 = arith.constant 0 : index
    %26 = vector.load %arg1[%c1_21, %c0_22, %c0_23] : memref<8x8x8xf32, #tpu.memory_space<vmem>>, vector<1x8x8xf32>
    %27 = vector.shape_cast %26 : vector<1x8x8xf32> to vector<8x8xf32>
    %28 = vector.extract_strided_slice %21 {offsets = [0, 4], sizes = [8, 4], strides = [1, 1]} : vector<8x8xf32> to vector<8x4xf32>
    %cst_24 = arith.constant dense<0.000000e+00> : vector<8x4xf32>
    %29 = tpu.matmul %27, %28, %cst_24 {dimension_numbers = #tpu.dot_dimension_numbers<[1], [0], [0], [1], [0, 0, 1, 1], [], []>} : vector<8x8xf32>, vector<8x4xf32>, vector<8x4xf32> -> vector<8x4xf32>
    %30 = vector.extract_strided_slice %2 {offsets = [40, 0], sizes = [8, 8], strides = [1, 1]} : vector<64x8xf32> to vector<8x8xf32>
    %c5 = arith.constant 5 : index
    %c0_25 = arith.constant 0 : index
    %c0_26 = arith.constant 0 : index
    %31 = vector.load %arg0[%c5, %c0_25, %c0_26] : memref<8x8x8xf32, #tpu.memory_space<vmem>>, vector<1x8x8xf32>
    %32 = vector.shape_cast %31 : vector<1x8x8xf32> to vector<8x8xf32>
    %33 = vector.extract_strided_slice %30 {offsets = [0, 0], sizes = [8, 4], strides = [1, 1]} : vector<8x8xf32> to vector<8x4xf32>
    %cst_27 = arith.constant dense<0.000000e+00> : vector<8x4xf32>
    %34 = tpu.matmul %32, %33, %cst_27 {dimension_numbers = #tpu.dot_dimension_numbers<[1], [0], [0], [1], [0, 0, 1, 1], [], []>} : vector<8x8xf32>, vector<8x4xf32>, vector<8x4xf32> -> vector<8x4xf32>
    %c5_28 = arith.constant 5 : index
    %c0_29 = arith.constant 0 : index
    %c0_30 = arith.constant 0 : index
    %35 = vector.load %arg1[%c5_28, %c0_29, %c0_30] : memref<8x8x8xf32, #tpu.memory_space<vmem>>, vector<1x8x8xf32>
    %36 = vector.shape_cast %35 : vector<1x8x8xf32> to vector<8x8xf32>
    %37 = vector.extract_strided_slice %30 {offsets = [0, 4], sizes = [8, 4], strides = [1, 1]} : vector<8x8xf32> to vector<8x4xf32>
    %cst_31 = arith.constant dense<0.000000e+00> : vector<8x4xf32>
    %38 = tpu.matmul %36, %37, %cst_31 {dimension_numbers = #tpu.dot_dimension_numbers<[1], [0], [0], [1], [0, 0, 1, 1], [], []>} : vector<8x8xf32>, vector<8x4xf32>, vector<8x4xf32> -> vector<8x4xf32>
    %39 = vector.extract_strided_slice %2 {offsets = [16, 0], sizes = [8, 8], strides = [1, 1]} : vector<64x8xf32> to vector<8x8xf32>
    %c2 = arith.constant 2 : index
    %c0_32 = arith.constant 0 : index
    %c0_33 = arith.constant 0 : index
    %40 = vector.load %arg0[%c2, %c0_32, %c0_33] : memref<8x8x8xf32, #tpu.memory_space<vmem>>, vector<1x8x8xf32>
    %41 = vector.shape_cast %40 : vector<1x8x8xf32> to vector<8x8xf32>
    %42 = vector.extract_strided_slice %39 {offsets = [0, 0], sizes = [8, 4], strides = [1, 1]} : vector<8x8xf32> to vector<8x4xf32>
    %cst_34 = arith.constant dense<0.000000e+00> : vector<8x4xf32>
    %43 = tpu.matmul %41, %42, %cst_34 {dimension_numbers = #tpu.dot_dimension_numbers<[1], [0], [0], [1], [0, 0, 1, 1], [], []>} : vector<8x8xf32>, vector<8x4xf32>, vector<8x4xf32> -> vector<8x4xf32>
    %c2_35 = arith.constant 2 : index
    %c0_36 = arith.constant 0 : index
    %c0_37 = arith.constant 0 : index
    %44 = vector.load %arg1[%c2_35, %c0_36, %c0_37] : memref<8x8x8xf32, #tpu.memory_space<vmem>>, vector<1x8x8xf32>
    %45 = vector.shape_cast %44 : vector<1x8x8xf32> to vector<8x8xf32>
    %46 = vector.extract_strided_slice %39 {offsets = [0, 4], sizes = [8, 4], strides = [1, 1]} : vector<8x8xf32> to vector<8x4xf32>
    %cst_38 = arith.constant dense<0.000000e+00> : vector<8x4xf32>
    %47 = tpu.matmul %45, %46, %cst_38 {dimension_numbers = #tpu.dot_dimension_numbers<[1], [0], [0], [1], [0, 0, 1, 1], [], []>} : vector<8x8xf32>, vector<8x4xf32>, vector<8x4xf32> -> vector<8x4xf32>
    %48 = vector.extract_strided_slice %2 {offsets = [48, 0], sizes = [8, 8], strides = [1, 1]} : vector<64x8xf32> to vector<8x8xf32>
    %c6 = arith.constant 6 : index
    %c0_39 = arith.constant 0 : index
    %c0_40 = arith.constant 0 : index
    %49 = vector.load %arg0[%c6, %c0_39, %c0_40] : memref<8x8x8xf32, #tpu.memory_space<vmem>>, vector<1x8x8xf32>
    %50 = vector.shape_cast %49 : vector<1x8x8xf32> to vector<8x8xf32>
    %51 = vector.extract_strided_slice %48 {offsets = [0, 0], sizes = [8, 4], strides = [1, 1]} : vector<8x8xf32> to vector<8x4xf32>
    %cst_41 = arith.constant dense<0.000000e+00> : vector<8x4xf32>
    %52 = tpu.matmul %50, %51, %cst_41 {dimension_numbers = #tpu.dot_dimension_numbers<[1], [0], [0], [1], [0, 0, 1, 1], [], []>} : vector<8x8xf32>, vector<8x4xf32>, vector<8x4xf32> -> vector<8x4xf32>
    %c6_42 = arith.constant 6 : index
    %c0_43 = arith.constant 0 : index
    %c0_44 = arith.constant 0 : index
    %53 = vector.load %arg1[%c6_42, %c0_43, %c0_44] : memref<8x8x8xf32, #tpu.memory_space<vmem>>, vector<1x8x8xf32>
    %54 = vector.shape_cast %53 : vector<1x8x8xf32> to vector<8x8xf32>
    %55 = vector.extract_strided_slice %48 {offsets = [0, 4], sizes = [8, 4], strides = [1, 1]} : vector<8x8xf32> to vector<8x4xf32>
    %cst_45 = arith.constant dense<0.000000e+00> : vector<8x4xf32>
    %56 = tpu.matmul %54, %55, %cst_45 {dimension_numbers = #tpu.dot_dimension_numbers<[1], [0], [0], [1], [0, 0, 1, 1], [], []>} : vector<8x8xf32>, vector<8x4xf32>, vector<8x4xf32> -> vector<8x4xf32>
    %57 = vector.extract_strided_slice %2 {offsets = [24, 0], sizes = [8, 8], strides = [1, 1]} : vector<64x8xf32> to vector<8x8xf32>
    %c3 = arith.constant 3 : index
    %c0_46 = arith.constant 0 : index
    %c0_47 = arith.constant 0 : index
    %58 = vector.load %arg0[%c3, %c0_46, %c0_47] : memref<8x8x8xf32, #tpu.memory_space<vmem>>, vector<1x8x8xf32>
    %59 = vector.shape_cast %58 : vector<1x8x8xf32> to vector<8x8xf32>
    %60 = vector.extract_strided_slice %57 {offsets = [0, 0], sizes = [8, 4], strides = [1, 1]} : vector<8x8xf32> to vector<8x4xf32>
    %cst_48 = arith.constant dense<0.000000e+00> : vector<8x4xf32>
    %61 = tpu.matmul %59, %60, %cst_48 {dimension_numbers = #tpu.dot_dimension_numbers<[1], [0], [0], [1], [0, 0, 1, 1], [], []>} : vector<8x8xf32>, vector<8x4xf32>, vector<8x4xf32> -> vector<8x4xf32>
    %c3_49 = arith.constant 3 : index
    %c0_50 = arith.constant 0 : index
    %c0_51 = arith.constant 0 : index
    %62 = vector.load %arg1[%c3_49, %c0_50, %c0_51] : memref<8x8x8xf32, #tpu.memory_space<vmem>>, vector<1x8x8xf32>
    %63 = vector.shape_cast %62 : vector<1x8x8xf32> to vector<8x8xf32>
    %64 = vector.extract_strided_slice %57 {offsets = [0, 4], sizes = [8, 4], strides = [1, 1]} : vector<8x8xf32> to vector<8x4xf32>
    %cst_52 = arith.constant dense<0.000000e+00> : vector<8x4xf32>
    %65 = tpu.matmul %63, %64, %cst_52 {dimension_numbers = #tpu.dot_dimension_numbers<[1], [0], [0], [1], [0, 0, 1, 1], [], []>} : vector<8x8xf32>, vector<8x4xf32>, vector<8x4xf32> -> vector<8x4xf32>
    %66 = vector.extract_strided_slice %2 {offsets = [56, 0], sizes = [8, 8], strides = [1, 1]} : vector<64x8xf32> to vector<8x8xf32>
    %c7 = arith.constant 7 : index
    %c0_53 = arith.constant 0 : index
    %c0_54 = arith.constant 0 : index
    %67 = vector.load %arg0[%c7, %c0_53, %c0_54] : memref<8x8x8xf32, #tpu.memory_space<vmem>>, vector<1x8x8xf32>
    %68 = vector.shape_cast %67 : vector<1x8x8xf32> to vector<8x8xf32>
    %69 = vector.extract_strided_slice %66 {offsets = [0, 0], sizes = [8, 4], strides = [1, 1]} : vector<8x8xf32> to vector<8x4xf32>
    %cst_55 = arith.constant dense<0.000000e+00> : vector<8x4xf32>
    %70 = tpu.matmul %68, %69, %cst_55 {dimension_numbers = #tpu.dot_dimension_numbers<[1], [0], [0], [1], [0, 0, 1, 1], [], []>} : vector<8x8xf32>, vector<8x4xf32>, vector<8x4xf32> -> vector<8x4xf32>
    %c7_56 = arith.constant 7 : index
    %c0_57 = arith.constant 0 : index
    %c0_58 = arith.constant 0 : index
    %71 = vector.load %arg1[%c7_56, %c0_57, %c0_58] : memref<8x8x8xf32, #tpu.memory_space<vmem>>, vector<1x8x8xf32>
    %72 = vector.shape_cast %71 : vector<1x8x8xf32> to vector<8x8xf32>
    %73 = vector.extract_strided_slice %66 {offsets = [0, 4], sizes = [8, 4], strides = [1, 1]} : vector<8x8xf32> to vector<8x4xf32>
    %cst_59 = arith.constant dense<0.000000e+00> : vector<8x4xf32>
    %74 = tpu.matmul %72, %73, %cst_59 {dimension_numbers = #tpu.dot_dimension_numbers<[1], [0], [0], [1], [0, 0, 1, 1], [], []>} : vector<8x8xf32>, vector<8x4xf32>, vector<8x4xf32> -> vector<8x4xf32>
    %75 = tpu.concatenate %7, %16, %25, %34, %43, %52, %61, %70 in 0 : vector<8x4xf32>, vector<8x4xf32>, vector<8x4xf32>, vector<8x4xf32>, vector<8x4xf32>, vector<8x4xf32>, vector<8x4xf32>, vector<8x4xf32> -> vector<64x4xf32>
    %76 = tpu.concatenate %11, %20, %29, %38, %47, %56, %65, %74 in 0 : vector<8x4xf32>, vector<8x4xf32>, vector<8x4xf32>, vector<8x4xf32>, vector<8x4xf32>, vector<8x4xf32>, vector<8x4xf32>, vector<8x4xf32> -> vector<64x4xf32>
    %77 = tpu.concatenate %75, %76 in 1 : vector<64x4xf32>, vector<64x4xf32> -> vector<64x8xf32>
    %c0_60 = arith.constant 0 : index
    %c0_61 = arith.constant 0 : index
    %78 = vector.load %arg4[%c0_60, %c0_61] : memref<1x8xf32, #tpu.memory_space<vmem>>, vector<1x8xf32>
    %79 = vector.broadcast %78 : vector<1x8xf32> to vector<64x8xf32>
    %80 = arith.addf %77, %79 : vector<64x8xf32>
    %cst_62 = arith.constant 0.000000e+00 : f32
    %81 = vector.broadcast %cst_62 : f32 to vector<64x8xf32>
    %82 = arith.maximumf %80, %81 : vector<64x8xf32>
    %c0_63 = arith.constant 0 : index
    %c0_64 = arith.constant 0 : index
    %83 = vector.load %arg5[%c0_63, %c0_64] : memref<64x64xf32, #tpu.memory_space<vmem>>, vector<64x64xf32>
    %cst_65 = arith.constant dense<0.000000e+00> : vector<64x8xf32>
    %84 = tpu.matmul %83, %82, %cst_65 {dimension_numbers = #tpu.dot_dimension_numbers<[1], [0], [0], [1], [0, 0, 1, 1], [], []>} : vector<64x64xf32>, vector<64x8xf32>, vector<64x8xf32> -> vector<64x8xf32>
    %85 = vector.extract_strided_slice %84 {offsets = [0, 0], sizes = [8, 8], strides = [1, 1]} : vector<64x8xf32> to vector<8x8xf32>
    %c0_66 = arith.constant 0 : index
    %c0_67 = arith.constant 0 : index
    %c0_68 = arith.constant 0 : index
    %86 = vector.load %arg6[%c0_66, %c0_67, %c0_68] : memref<8x8x128xf32, #tpu.memory_space<vmem>>, vector<1x8x128xf32>
    %87 = vector.shape_cast %86 : vector<1x8x128xf32> to vector<8x128xf32>
    %cst_69 = arith.constant dense<0.000000e+00> : vector<8x128xf32>
    %88 = tpu.matmul %85, %87, %cst_69 {dimension_numbers = #tpu.dot_dimension_numbers<[1], [0], [0], [1], [0, 0, 1, 1], [], []>} : vector<8x8xf32>, vector<8x128xf32>, vector<8x128xf32> -> vector<8x128xf32>
    %89 = vector.extract_strided_slice %84 {offsets = [8, 0], sizes = [8, 8], strides = [1, 1]} : vector<64x8xf32> to vector<8x8xf32>
    %c1_70 = arith.constant 1 : index
    %c0_71 = arith.constant 0 : index
    %c0_72 = arith.constant 0 : index
    %90 = vector.load %arg6[%c1_70, %c0_71, %c0_72] : memref<8x8x128xf32, #tpu.memory_space<vmem>>, vector<1x8x128xf32>
    %91 = vector.shape_cast %90 : vector<1x8x128xf32> to vector<8x128xf32>
    %cst_73 = arith.constant dense<0.000000e+00> : vector<8x128xf32>
    %92 = tpu.matmul %89, %91, %cst_73 {dimension_numbers = #tpu.dot_dimension_numbers<[1], [0], [0], [1], [0, 0, 1, 1], [], []>} : vector<8x8xf32>, vector<8x128xf32>, vector<8x128xf32> -> vector<8x128xf32>
    %93 = arith.addf %88, %92 : vector<8x128xf32>
    %94 = vector.extract_strided_slice %84 {offsets = [16, 0], sizes = [8, 8], strides = [1, 1]} : vector<64x8xf32> to vector<8x8xf32>
    %c2_74 = arith.constant 2 : index
    %c0_75 = arith.constant 0 : index
    %c0_76 = arith.constant 0 : index
    %95 = vector.load %arg6[%c2_74, %c0_75, %c0_76] : memref<8x8x128xf32, #tpu.memory_space<vmem>>, vector<1x8x128xf32>
    %96 = vector.shape_cast %95 : vector<1x8x128xf32> to vector<8x128xf32>
    %cst_77 = arith.constant dense<0.000000e+00> : vector<8x128xf32>
    %97 = tpu.matmul %94, %96, %cst_77 {dimension_numbers = #tpu.dot_dimension_numbers<[1], [0], [0], [1], [0, 0, 1, 1], [], []>} : vector<8x8xf32>, vector<8x128xf32>, vector<8x128xf32> -> vector<8x128xf32>
    %98 = arith.addf %93, %97 : vector<8x128xf32>
    %99 = vector.extract_strided_slice %84 {offsets = [24, 0], sizes = [8, 8], strides = [1, 1]} : vector<64x8xf32> to vector<8x8xf32>
    %c3_78 = arith.constant 3 : index
    %c0_79 = arith.constant 0 : index
    %c0_80 = arith.constant 0 : index
    %100 = vector.load %arg6[%c3_78, %c0_79, %c0_80] : memref<8x8x128xf32, #tpu.memory_space<vmem>>, vector<1x8x128xf32>
    %101 = vector.shape_cast %100 : vector<1x8x128xf32> to vector<8x128xf32>
    %cst_81 = arith.constant dense<0.000000e+00> : vector<8x128xf32>
    %102 = tpu.matmul %99, %101, %cst_81 {dimension_numbers = #tpu.dot_dimension_numbers<[1], [0], [0], [1], [0, 0, 1, 1], [], []>} : vector<8x8xf32>, vector<8x128xf32>, vector<8x128xf32> -> vector<8x128xf32>
    %103 = arith.addf %98, %102 : vector<8x128xf32>
    %104 = vector.extract_strided_slice %84 {offsets = [32, 0], sizes = [8, 8], strides = [1, 1]} : vector<64x8xf32> to vector<8x8xf32>
    %c4_82 = arith.constant 4 : index
    %c0_83 = arith.constant 0 : index
    %c0_84 = arith.constant 0 : index
    %105 = vector.load %arg6[%c4_82, %c0_83, %c0_84] : memref<8x8x128xf32, #tpu.memory_space<vmem>>, vector<1x8x128xf32>
    %106 = vector.shape_cast %105 : vector<1x8x128xf32> to vector<8x128xf32>
    %cst_85 = arith.constant dense<0.000000e+00> : vector<8x128xf32>
    %107 = tpu.matmul %104, %106, %cst_85 {dimension_numbers = #tpu.dot_dimension_numbers<[1], [0], [0], [1], [0, 0, 1, 1], [], []>} : vector<8x8xf32>, vector<8x128xf32>, vector<8x128xf32> -> vector<8x128xf32>
    %108 = arith.addf %103, %107 : vector<8x128xf32>
    %109 = vector.extract_strided_slice %84 {offsets = [40, 0], sizes = [8, 8], strides = [1, 1]} : vector<64x8xf32> to vector<8x8xf32>
    %c5_86 = arith.constant 5 : index
    %c0_87 = arith.constant 0 : index
    %c0_88 = arith.constant 0 : index
    %110 = vector.load %arg6[%c5_86, %c0_87, %c0_88] : memref<8x8x128xf32, #tpu.memory_space<vmem>>, vector<1x8x128xf32>
    %111 = vector.shape_cast %110 : vector<1x8x128xf32> to vector<8x128xf32>
    %cst_89 = arith.constant dense<0.000000e+00> : vector<8x128xf32>
    %112 = tpu.matmul %109, %111, %cst_89 {dimension_numbers = #tpu.dot_dimension_numbers<[1], [0], [0], [1], [0, 0, 1, 1], [], []>} : vector<8x8xf32>, vector<8x128xf32>, vector<8x128xf32> -> vector<8x128xf32>
    %113 = arith.addf %108, %112 : vector<8x128xf32>
    %114 = vector.extract_strided_slice %84 {offsets = [48, 0], sizes = [8, 8], strides = [1, 1]} : vector<64x8xf32> to vector<8x8xf32>
    %c6_90 = arith.constant 6 : index
    %c0_91 = arith.constant 0 : index
    %c0_92 = arith.constant 0 : index
    %115 = vector.load %arg6[%c6_90, %c0_91, %c0_92] : memref<8x8x128xf32, #tpu.memory_space<vmem>>, vector<1x8x128xf32>
    %116 = vector.shape_cast %115 : vector<1x8x128xf32> to vector<8x128xf32>
    %cst_93 = arith.constant dense<0.000000e+00> : vector<8x128xf32>
    %117 = tpu.matmul %114, %116, %cst_93 {dimension_numbers = #tpu.dot_dimension_numbers<[1], [0], [0], [1], [0, 0, 1, 1], [], []>} : vector<8x8xf32>, vector<8x128xf32>, vector<8x128xf32> -> vector<8x128xf32>
    %118 = arith.addf %113, %117 : vector<8x128xf32>
    %119 = vector.extract_strided_slice %84 {offsets = [56, 0], sizes = [8, 8], strides = [1, 1]} : vector<64x8xf32> to vector<8x8xf32>
    %c7_94 = arith.constant 7 : index
    %c0_95 = arith.constant 0 : index
    %c0_96 = arith.constant 0 : index
    %120 = vector.load %arg6[%c7_94, %c0_95, %c0_96] : memref<8x8x128xf32, #tpu.memory_space<vmem>>, vector<1x8x128xf32>
    %121 = vector.shape_cast %120 : vector<1x8x128xf32> to vector<8x128xf32>
    %cst_97 = arith.constant dense<0.000000e+00> : vector<8x128xf32>
    %122 = tpu.matmul %119, %121, %cst_97 {dimension_numbers = #tpu.dot_dimension_numbers<[1], [0], [0], [1], [0, 0, 1, 1], [], []>} : vector<8x8xf32>, vector<8x128xf32>, vector<8x128xf32> -> vector<8x128xf32>
    %123 = arith.addf %118, %122 : vector<8x128xf32>
    %c0_98 = arith.constant 0 : index
    %c0_99 = arith.constant 0 : index
    %124 = vector.load %arg7[%c0_98, %c0_99] : memref<1x128xf32, #tpu.memory_space<vmem>>, vector<1x128xf32>
    %125 = vector.broadcast %124 : vector<1x128xf32> to vector<8x128xf32>
    %126 = arith.addf %123, %125 : vector<8x128xf32>
    %c0_100 = arith.constant 0 : index
    %c0_101 = arith.constant 0 : index
    %127 = vector.load %arg19[%c0_100, %c0_101] : memref<8x128xf32, #tpu.memory_space<vmem>>, vector<8x128xf32>
    tpu.vector_store %arg19[%c0_100, %c0_101], %126 {strides = array<i32>} : memref<8x128xf32, #tpu.memory_space<vmem>>, vector<8x128xf32>,
    %cst_102 = arith.constant 0.000000e+00 : f32
    %128 = vector.broadcast %cst_102 : f32 to vector<2x32xf32>
    %c0_103 = arith.constant 0 : index
    %c0_104 = arith.constant 0 : index
    %129 = vector.load %arg19[%c0_103, %c0_104] : memref<8x128xf32, #tpu.memory_space<vmem>>, vector<2x128xf32>
    %c0_105 = arith.constant 0 : index
    %c0_106 = arith.constant 0 : index
    %130 = vector.load %arg8[%c0_105, %c0_106] : memref<32x128xf32, #tpu.memory_space<vmem>>, vector<32x128xf32>
    %cst_107 = arith.constant dense<0.000000e+00> : vector<2x128xf32>
    %131 = tpu.matmul %128, %130, %cst_107 {dimension_numbers = #tpu.dot_dimension_numbers<[1], [0], [0], [1], [0, 0, 1, 1], [], []>} : vector<2x32xf32>, vector<32x128xf32>, vector<2x128xf32> -> vector<2x128xf32>
    %132 = arith.addf %129, %131 : vector<2x128xf32>
    %133 = vector.extract_strided_slice %132 {offsets = [0, 0], sizes = [2, 96], strides = [1, 1]} : vector<2x128xf32> to vector<2x96xf32>
    %134 = arith.negf %133 : vector<2x96xf32>
    %135 = math.exp %134 : vector<2x96xf32>
    %cst_108 = arith.constant 1.000000e+00 : f32
    %136 = vector.broadcast %cst_108 : f32 to vector<2x96xf32>
    %137 = arith.addf %136, %135 : vector<2x96xf32>
    %138 = arith.divf %136, %137 : vector<2x96xf32>
    %139 = vector.extract_strided_slice %132 {offsets = [0, 96], sizes = [2, 32], strides = [1, 1]} : vector<2x128xf32> to vector<2x32xf32>
    %140 = math.tanh %139 : vector<2x32xf32>
    %141 = vector.extract_strided_slice %138 {offsets = [0, 0], sizes = [2, 32], strides = [1, 1]} : vector<2x96xf32> to vector<2x32xf32>
    %142 = vector.extract_strided_slice %138 {offsets = [0, 32], sizes = [2, 32], strides = [1, 1]} : vector<2x96xf32> to vector<2x32xf32>
    %143 = vector.extract_strided_slice %138 {offsets = [0, 64], sizes = [2, 32], strides = [1, 1]} : vector<2x96xf32> to vector<2x32xf32>
    %144 = arith.mulf %142, %128 : vector<2x32xf32>
    %145 = arith.mulf %141, %140 : vector<2x32xf32>
    %146 = arith.addf %144, %145 : vector<2x32xf32>
    %147 = math.tanh %146 : vector<2x32xf32>
    %148 = arith.mulf %143, %147 : vector<2x32xf32>
    %149 = tpu.concatenate %148, %128 in 1 : vector<2x32xf32>, vector<2x32xf32> -> vector<2x64xf32>
    %c0_109 = arith.constant 0 : index
    %c0_110 = arith.constant 0 : index
    %150 = vector.load %arg9[%c0_109, %c0_110] : memref<64x128xf32, #tpu.memory_space<vmem>>, vector<64x128xf32>
    %cst_111 = arith.constant dense<0.000000e+00> : vector<2x128xf32>
    %151 = tpu.matmul %149, %150, %cst_111 {dimension_numbers = #tpu.dot_dimension_numbers<[1], [0], [0], [1], [0, 0, 1, 1], [], []>} : vector<2x64xf32>, vector<64x128xf32>, vector<2x128xf32> -> vector<2x128xf32>
    %c0_112 = arith.constant 0 : index
    %c0_113 = arith.constant 0 : index
    %152 = vector.load %arg10[%c0_112, %c0_113] : memref<1x128xf32, #tpu.memory_space<vmem>>, vector<1x128xf32>
    %153 = vector.broadcast %152 : vector<1x128xf32> to vector<2x128xf32>
    %154 = arith.addf %151, %153 : vector<2x128xf32>
    %155 = vector.extract_strided_slice %154 {offsets = [0, 0], sizes = [2, 96], strides = [1, 1]} : vector<2x128xf32> to vector<2x96xf32>
    %156 = arith.negf %155 : vector<2x96xf32>
    %157 = math.exp %156 : vector<2x96xf32>
    %cst_114 = arith.constant 1.000000e+00 : f32
    %158 = vector.broadcast %cst_114 : f32 to vector<2x96xf32>
    %159 = arith.addf %158, %157 : vector<2x96xf32>
    %160 = arith.divf %158, %159 : vector<2x96xf32>
    %161 = vector.extract_strided_slice %154 {offsets = [0, 96], sizes = [2, 32], strides = [1, 1]} : vector<2x128xf32> to vector<2x32xf32>
    %162 = math.tanh %161 : vector<2x32xf32>
    %163 = vector.extract_strided_slice %160 {offsets = [0, 0], sizes = [2, 32], strides = [1, 1]} : vector<2x96xf32> to vector<2x32xf32>
    %164 = vector.extract_strided_slice %160 {offsets = [0, 32], sizes = [2, 32], strides = [1, 1]} : vector<2x96xf32> to vector<2x32xf32>
    %165 = vector.extract_strided_slice %160 {offsets = [0, 64], sizes = [2, 32], strides = [1, 1]} : vector<2x96xf32> to vector<2x32xf32>
    %166 = arith.mulf %164, %128 : vector<2x32xf32>
    %167 = arith.mulf %163, %162 : vector<2x32xf32>
    %168 = arith.addf %166, %167 : vector<2x32xf32>
    %169 = math.tanh %168 : vector<2x32xf32>
    %170 = arith.mulf %165, %169 : vector<2x32xf32>
    %c0_115 = arith.constant 0 : index
    %c0_116 = arith.constant 0 : index
    %171 = vector.load %arg11[%c0_115, %c0_116] : memref<32x2xf32, #tpu.memory_space<vmem>>, vector<32x2xf32>
    %cst_117 = arith.constant dense<0.000000e+00> : vector<2x2xf32>
    %172 = tpu.matmul %170, %171, %cst_117 {dimension_numbers = #tpu.dot_dimension_numbers<[1], [0], [0], [1], [0, 0, 1, 1], [], []>} : vector<2x32xf32>, vector<32x2xf32>, vector<2x2xf32> -> vector<2x2xf32>
    %173 = math.tanh %172 : vector<2x2xf32>
    %174 = math.exp %173 : vector<2x2xf32>
    %c2_118 = arith.constant 2 : index
    %c0_119 = arith.constant 0 : index
    %175 = vector.load %arg19[%c2_118, %c0_119] : memref<8x128xf32, #tpu.memory_space<vmem>>, vector<2x128xf32>
    %c0_120 = arith.constant 0 : index
    %c0_121 = arith.constant 0 : index
    %176 = vector.load %arg8[%c0_120, %c0_121] : memref<32x128xf32, #tpu.memory_space<vmem>>, vector<32x128xf32>
    %cst_122 = arith.constant dense<0.000000e+00> : vector<2x128xf32>
    %177 = tpu.matmul %148, %176, %cst_122 {dimension_numbers = #tpu.dot_dimension_numbers<[1], [0], [0], [1], [0, 0, 1, 1], [], []>} : vector<2x32xf32>, vector<32x128xf32>, vector<2x128xf32> -> vector<2x128xf32>
    %178 = arith.addf %175, %177 : vector<2x128xf32>
    %179 = vector.extract_strided_slice %178 {offsets = [0, 0], sizes = [2, 96], strides = [1, 1]} : vector<2x128xf32> to vector<2x96xf32>
    %180 = arith.negf %179 : vector<2x96xf32>
    %181 = math.exp %180 : vector<2x96xf32>
    %cst_123 = arith.constant 1.000000e+00 : f32
    %182 = vector.broadcast %cst_123 : f32 to vector<2x96xf32>
    %183 = arith.addf %182, %181 : vector<2x96xf32>
    %184 = arith.divf %182, %183 : vector<2x96xf32>
    %185 = vector.extract_strided_slice %178 {offsets = [0, 96], sizes = [2, 32], strides = [1, 1]} : vector<2x128xf32> to vector<2x32xf32>
    %186 = math.tanh %185 : vector<2x32xf32>
    %187 = vector.extract_strided_slice %184 {offsets = [0, 0], sizes = [2, 32], strides = [1, 1]} : vector<2x96xf32> to vector<2x32xf32>
    %188 = vector.extract_strided_slice %184 {offsets = [0, 32], sizes = [2, 32], strides = [1, 1]} : vector<2x96xf32> to vector<2x32xf32>
    %189 = vector.extract_strided_slice %184 {offsets = [0, 64], sizes = [2, 32], strides = [1, 1]} : vector<2x96xf32> to vector<2x32xf32>
    %190 = arith.mulf %188, %146 : vector<2x32xf32>
    %191 = arith.mulf %187, %186 : vector<2x32xf32>
    %192 = arith.addf %190, %191 : vector<2x32xf32>
    %193 = math.tanh %192 : vector<2x32xf32>
    %194 = arith.mulf %189, %193 : vector<2x32xf32>
    %195 = tpu.concatenate %194, %170 in 1 : vector<2x32xf32>, vector<2x32xf32> -> vector<2x64xf32>
    %c0_124 = arith.constant 0 : index
    %c0_125 = arith.constant 0 : index
    %196 = vector.load %arg9[%c0_124, %c0_125] : memref<64x128xf32, #tpu.memory_space<vmem>>, vector<64x128xf32>
    %cst_126 = arith.constant dense<0.000000e+00> : vector<2x128xf32>
    %197 = tpu.matmul %195, %196, %cst_126 {dimension_numbers = #tpu.dot_dimension_numbers<[1], [0], [0], [1], [0, 0, 1, 1], [], []>} : vector<2x64xf32>, vector<64x128xf32>, vector<2x128xf32> -> vector<2x128xf32>
    %c0_127 = arith.constant 0 : index
    %c0_128 = arith.constant 0 : index
    %198 = vector.load %arg10[%c0_127, %c0_128] : memref<1x128xf32, #tpu.memory_space<vmem>>, vector<1x128xf32>
    %199 = vector.broadcast %198 : vector<1x128xf32> to vector<2x128xf32>
    %200 = arith.addf %197, %199 : vector<2x128xf32>
    %201 = vector.extract_strided_slice %200 {offsets = [0, 0], sizes = [2, 96], strides = [1, 1]} : vector<2x128xf32> to vector<2x96xf32>
    %202 = arith.negf %201 : vector<2x96xf32>
    %203 = math.exp %202 : vector<2x96xf32>
    %cst_129 = arith.constant 1.000000e+00 : f32
    %204 = vector.broadcast %cst_129 : f32 to vector<2x96xf32>
    %205 = arith.addf %204, %203 : vector<2x96xf32>
    %206 = arith.divf %204, %205 : vector<2x96xf32>
    %207 = vector.extract_strided_slice %200 {offsets = [0, 96], sizes = [2, 32], strides = [1, 1]} : vector<2x128xf32> to vector<2x32xf32>
    %208 = math.tanh %207 : vector<2x32xf32>
    %209 = vector.extract_strided_slice %206 {offsets = [0, 0], sizes = [2, 32], strides = [1, 1]} : vector<2x96xf32> to vector<2x32xf32>
    %210 = vector.extract_strided_slice %206 {offsets = [0, 32], sizes = [2, 32], strides = [1, 1]} : vector<2x96xf32> to vector<2x32xf32>
    %211 = vector.extract_strided_slice %206 {offsets = [0, 64], sizes = [2, 32], strides = [1, 1]} : vector<2x96xf32> to vector<2x32xf32>
    %212 = arith.mulf %210, %168 : vector<2x32xf32>
    %213 = arith.mulf %209, %208 : vector<2x32xf32>
    %214 = arith.addf %212, %213 : vector<2x32xf32>
    %215 = math.tanh %214 : vector<2x32xf32>
    %216 = arith.mulf %211, %215 : vector<2x32xf32>
    %c0_130 = arith.constant 0 : index
    %c0_131 = arith.constant 0 : index
    %217 = vector.load %arg11[%c0_130, %c0_131] : memref<32x2xf32, #tpu.memory_space<vmem>>, vector<32x2xf32>
    %cst_132 = arith.constant dense<0.000000e+00> : vector<2x2xf32>
    %218 = tpu.matmul %216, %217, %cst_132 {dimension_numbers = #tpu.dot_dimension_numbers<[1], [0], [0], [1], [0, 0, 1, 1], [], []>} : vector<2x32xf32>, vector<32x2xf32>, vector<2x2xf32> -> vector<2x2xf32>
    %219 = math.tanh %218 : vector<2x2xf32>
    %220 = math.exp %219 : vector<2x2xf32>
    %c4_133 = arith.constant 4 : index
    %c0_134 = arith.constant 0 : index
    %221 = vector.load %arg19[%c4_133, %c0_134] : memref<8x128xf32, #tpu.memory_space<vmem>>, vector<2x128xf32>
    %c0_135 = arith.constant 0 : index
    %c0_136 = arith.constant 0 : index
    %222 = vector.load %arg8[%c0_135, %c0_136] : memref<32x128xf32, #tpu.memory_space<vmem>>, vector<32x128xf32>
    %cst_137 = arith.constant dense<0.000000e+00> : vector<2x128xf32>
    %223 = tpu.matmul %194, %222, %cst_137 {dimension_numbers = #tpu.dot_dimension_numbers<[1], [0], [0], [1], [0, 0, 1, 1], [], []>} : vector<2x32xf32>, vector<32x128xf32>, vector<2x128xf32> -> vector<2x128xf32>
    %224 = arith.addf %221, %223 : vector<2x128xf32>
    %225 = vector.extract_strided_slice %224 {offsets = [0, 0], sizes = [2, 96], strides = [1, 1]} : vector<2x128xf32> to vector<2x96xf32>
    %226 = arith.negf %225 : vector<2x96xf32>
    %227 = math.exp %226 : vector<2x96xf32>
    %cst_138 = arith.constant 1.000000e+00 : f32
    %228 = vector.broadcast %cst_138 : f32 to vector<2x96xf32>
    %229 = arith.addf %228, %227 : vector<2x96xf32>
    %230 = arith.divf %228, %229 : vector<2x96xf32>
    %231 = vector.extract_strided_slice %224 {offsets = [0, 96], sizes = [2, 32], strides = [1, 1]} : vector<2x128xf32> to vector<2x32xf32>
    %232 = math.tanh %231 : vector<2x32xf32>
    %233 = vector.extract_strided_slice %230 {offsets = [0, 0], sizes = [2, 32], strides = [1, 1]} : vector<2x96xf32> to vector<2x32xf32>
    %234 = vector.extract_strided_slice %230 {offsets = [0, 32], sizes = [2, 32], strides = [1, 1]} : vector<2x96xf32> to vector<2x32xf32>
    %235 = vector.extract_strided_slice %230 {offsets = [0, 64], sizes = [2, 32], strides = [1, 1]} : vector<2x96xf32> to vector<2x32xf32>
    %236 = arith.mulf %234, %192 : vector<2x32xf32>
    %237 = arith.mulf %233, %232 : vector<2x32xf32>
    %238 = arith.addf %236, %237 : vector<2x32xf32>
    %239 = math.tanh %238 : vector<2x32xf32>
    %240 = arith.mulf %235, %239 : vector<2x32xf32>
    %241 = tpu.concatenate %240, %216 in 1 : vector<2x32xf32>, vector<2x32xf32> -> vector<2x64xf32>
    %c0_139 = arith.constant 0 : index
    %c0_140 = arith.constant 0 : index
    %242 = vector.load %arg9[%c0_139, %c0_140] : memref<64x128xf32, #tpu.memory_space<vmem>>, vector<64x128xf32>
    %cst_141 = arith.constant dense<0.000000e+00> : vector<2x128xf32>
    %243 = tpu.matmul %241, %242, %cst_141 {dimension_numbers = #tpu.dot_dimension_numbers<[1], [0], [0], [1], [0, 0, 1, 1], [], []>} : vector<2x64xf32>, vector<64x128xf32>, vector<2x128xf32> -> vector<2x128xf32>
    %c0_142 = arith.constant 0 : index
    %c0_143 = arith.constant 0 : index
    %244 = vector.load %arg10[%c0_142, %c0_143] : memref<1x128xf32, #tpu.memory_space<vmem>>, vector<1x128xf32>
    %245 = vector.broadcast %244 : vector<1x128xf32> to vector<2x128xf32>
    %246 = arith.addf %243, %245 : vector<2x128xf32>
    %247 = vector.extract_strided_slice %246 {offsets = [0, 0], sizes = [2, 96], strides = [1, 1]} : vector<2x128xf32> to vector<2x96xf32>
    %248 = arith.negf %247 : vector<2x96xf32>
    %249 = math.exp %248 : vector<2x96xf32>
    %cst_144 = arith.constant 1.000000e+00 : f32
    %250 = vector.broadcast %cst_144 : f32 to vector<2x96xf32>
    %251 = arith.addf %250, %249 : vector<2x96xf32>
    %252 = arith.divf %250, %251 : vector<2x96xf32>
    %253 = vector.extract_strided_slice %246 {offsets = [0, 96], sizes = [2, 32], strides = [1, 1]} : vector<2x128xf32> to vector<2x32xf32>
    %254 = math.tanh %253 : vector<2x32xf32>
    %255 = vector.extract_strided_slice %252 {offsets = [0, 0], sizes = [2, 32], strides = [1, 1]} : vector<2x96xf32> to vector<2x32xf32>
    %256 = vector.extract_strided_slice %252 {offsets = [0, 32], sizes = [2, 32], strides = [1, 1]} : vector<2x96xf32> to vector<2x32xf32>
    %257 = vector.extract_strided_slice %252 {offsets = [0, 64], sizes = [2, 32], strides = [1, 1]} : vector<2x96xf32> to vector<2x32xf32>
    %258 = arith.mulf %256, %214 : vector<2x32xf32>
    %259 = arith.mulf %255, %254 : vector<2x32xf32>
    %260 = arith.addf %258, %259 : vector<2x32xf32>
    %261 = math.tanh %260 : vector<2x32xf32>
    %262 = arith.mulf %257, %261 : vector<2x32xf32>
    %c0_145 = arith.constant 0 : index
    %c0_146 = arith.constant 0 : index
    %263 = vector.load %arg11[%c0_145, %c0_146] : memref<32x2xf32, #tpu.memory_space<vmem>>, vector<32x2xf32>
    %cst_147 = arith.constant dense<0.000000e+00> : vector<2x2xf32>
    %264 = tpu.matmul %262, %263, %cst_147 {dimension_numbers = #tpu.dot_dimension_numbers<[1], [0], [0], [1], [0, 0, 1, 1], [], []>} : vector<2x32xf32>, vector<32x2xf32>, vector<2x2xf32> -> vector<2x2xf32>
    %265 = math.tanh %264 : vector<2x2xf32>
    %266 = math.exp %265 : vector<2x2xf32>
    %c6_148 = arith.constant 6 : index
    %c0_149 = arith.constant 0 : index
    %267 = vector.load %arg19[%c6_148, %c0_149] : memref<8x128xf32, #tpu.memory_space<vmem>>, vector<2x128xf32>
    %c0_150 = arith.constant 0 : index
    %c0_151 = arith.constant 0 : index
    %268 = vector.load %arg8[%c0_150, %c0_151] : memref<32x128xf32, #tpu.memory_space<vmem>>, vector<32x128xf32>
    %cst_152 = arith.constant dense<0.000000e+00> : vector<2x128xf32>
    %269 = tpu.matmul %240, %268, %cst_152 {dimension_numbers = #tpu.dot_dimension_numbers<[1], [0], [0], [1], [0, 0, 1, 1], [], []>} : vector<2x32xf32>, vector<32x128xf32>, vector<2x128xf32> -> vector<2x128xf32>
    %270 = arith.addf %267, %269 : vector<2x128xf32>
    %271 = vector.extract_strided_slice %270 {offsets = [0, 0], sizes = [2, 96], strides = [1, 1]} : vector<2x128xf32> to vector<2x96xf32>
    %272 = arith.negf %271 : vector<2x96xf32>
    %273 = math.exp %272 : vector<2x96xf32>
    %cst_153 = arith.constant 1.000000e+00 : f32
    %274 = vector.broadcast %cst_153 : f32 to vector<2x96xf32>
    %275 = arith.addf %274, %273 : vector<2x96xf32>
    %276 = arith.divf %274, %275 : vector<2x96xf32>
    %277 = vector.extract_strided_slice %270 {offsets = [0, 96], sizes = [2, 32], strides = [1, 1]} : vector<2x128xf32> to vector<2x32xf32>
    %278 = math.tanh %277 : vector<2x32xf32>
    %279 = vector.extract_strided_slice %276 {offsets = [0, 0], sizes = [2, 32], strides = [1, 1]} : vector<2x96xf32> to vector<2x32xf32>
    %280 = vector.extract_strided_slice %276 {offsets = [0, 32], sizes = [2, 32], strides = [1, 1]} : vector<2x96xf32> to vector<2x32xf32>
    %281 = vector.extract_strided_slice %276 {offsets = [0, 64], sizes = [2, 32], strides = [1, 1]} : vector<2x96xf32> to vector<2x32xf32>
    %282 = arith.mulf %280, %238 : vector<2x32xf32>
    %283 = arith.mulf %279, %278 : vector<2x32xf32>
    %284 = arith.addf %282, %283 : vector<2x32xf32>
    %285 = math.tanh %284 : vector<2x32xf32>
    %286 = arith.mulf %281, %285 : vector<2x32xf32>
    %287 = tpu.concatenate %286, %262 in 1 : vector<2x32xf32>, vector<2x32xf32> -> vector<2x64xf32>
    %c0_154 = arith.constant 0 : index
    %c0_155 = arith.constant 0 : index
    %288 = vector.load %arg9[%c0_154, %c0_155] : memref<64x128xf32, #tpu.memory_space<vmem>>, vector<64x128xf32>
    %cst_156 = arith.constant dense<0.000000e+00> : vector<2x128xf32>
    %289 = tpu.matmul %287, %288, %cst_156 {dimension_numbers = #tpu.dot_dimension_numbers<[1], [0], [0], [1], [0, 0, 1, 1], [], []>} : vector<2x64xf32>, vector<64x128xf32>, vector<2x128xf32> -> vector<2x128xf32>
    %c0_157 = arith.constant 0 : index
    %c0_158 = arith.constant 0 : index
    %290 = vector.load %arg10[%c0_157, %c0_158] : memref<1x128xf32, #tpu.memory_space<vmem>>, vector<1x128xf32>
    %291 = vector.broadcast %290 : vector<1x128xf32> to vector<2x128xf32>
    %292 = arith.addf %289, %291 : vector<2x128xf32>
    %293 = vector.extract_strided_slice %292 {offsets = [0, 0], sizes = [2, 96], strides = [1, 1]} : vector<2x128xf32> to vector<2x96xf32>
    %294 = arith.negf %293 : vector<2x96xf32>
    %295 = math.exp %294 : vector<2x96xf32>
    %cst_159 = arith.constant 1.000000e+00 : f32
    %296 = vector.broadcast %cst_159 : f32 to vector<2x96xf32>
    %297 = arith.addf %296, %295 : vector<2x96xf32>
    %298 = arith.divf %296, %297 : vector<2x96xf32>
    %299 = vector.extract_strided_slice %292 {offsets = [0, 96], sizes = [2, 32], strides = [1, 1]} : vector<2x128xf32> to vector<2x32xf32>
    %300 = math.tanh %299 : vector<2x32xf32>
    %301 = vector.extract_strided_slice %298 {offsets = [0, 0], sizes = [2, 32], strides = [1, 1]} : vector<2x96xf32> to vector<2x32xf32>
    %302 = vector.extract_strided_slice %298 {offsets = [0, 32], sizes = [2, 32], strides = [1, 1]} : vector<2x96xf32> to vector<2x32xf32>
    %303 = vector.extract_strided_slice %298 {offsets = [0, 64], sizes = [2, 32], strides = [1, 1]} : vector<2x96xf32> to vector<2x32xf32>
    %304 = arith.mulf %302, %260 : vector<2x32xf32>
    %305 = arith.mulf %301, %300 : vector<2x32xf32>
    %306 = arith.addf %304, %305 : vector<2x32xf32>
    %307 = math.tanh %306 : vector<2x32xf32>
    %308 = arith.mulf %303, %307 : vector<2x32xf32>
    %c0_160 = arith.constant 0 : index
    %c0_161 = arith.constant 0 : index
    %309 = vector.load %arg11[%c0_160, %c0_161] : memref<32x2xf32, #tpu.memory_space<vmem>>, vector<32x2xf32>
    %cst_162 = arith.constant dense<0.000000e+00> : vector<2x2xf32>
    %310 = tpu.matmul %308, %309, %cst_162 {dimension_numbers = #tpu.dot_dimension_numbers<[1], [0], [0], [1], [0, 0, 1, 1], [], []>} : vector<2x32xf32>, vector<32x2xf32>, vector<2x2xf32> -> vector<2x2xf32>
    %311 = math.tanh %310 : vector<2x2xf32>
    %312 = math.exp %311 : vector<2x2xf32>
    %313 = arith.addf %174, %220 : vector<2x2xf32>
    %314 = arith.addf %313, %266 : vector<2x2xf32>
    %315 = arith.addf %314, %312 : vector<2x2xf32>
    %cst_163 = arith.constant 1.000000e+00 : f32
    %316 = vector.broadcast %cst_163 : f32 to vector<2x2xf32>
    %317 = arith.divf %316, %315 : vector<2x2xf32>
    %cst_164 = arith.constant 0.000000e+00 : f32
    %318 = vector.broadcast %cst_164 : f32 to vector<2x16xf32>
    %cst_165 = arith.constant 0.000000e+00 : f32
    %319 = vector.broadcast %cst_165 : f32 to vector<2x16xf32>
    %320 = arith.mulf %174, %317 : vector<2x2xf32>
    %321 = vector.extract_strided_slice %320 {offsets = [0, 0], sizes = [2, 1], strides = [1, 1]} : vector<2x2xf32> to vector<2x1xf32>
    %322 = vector.extract_strided_slice %170 {offsets = [0, 0], sizes = [2, 16], strides = [1, 1]} : vector<2x32xf32> to vector<2x16xf32>
    %323 = vector.broadcast %321 : vector<2x1xf32> to vector<2x16xf32>
    %324 = arith.mulf %323, %322 : vector<2x16xf32>
    %325 = arith.addf %318, %324 : vector<2x16xf32>
    %326 = vector.extract_strided_slice %320 {offsets = [0, 1], sizes = [2, 1], strides = [1, 1]} : vector<2x2xf32> to vector<2x1xf32>
    %327 = vector.extract_strided_slice %170 {offsets = [0, 16], sizes = [2, 16], strides = [1, 1]} : vector<2x32xf32> to vector<2x16xf32>
    %328 = vector.broadcast %326 : vector<2x1xf32> to vector<2x16xf32>
    %329 = arith.mulf %328, %327 : vector<2x16xf32>
    %330 = arith.addf %319, %329 : vector<2x16xf32>
    %331 = arith.mulf %220, %317 : vector<2x2xf32>
    %332 = vector.extract_strided_slice %331 {offsets = [0, 0], sizes = [2, 1], strides = [1, 1]} : vector<2x2xf32> to vector<2x1xf32>
    %333 = vector.extract_strided_slice %216 {offsets = [0, 0], sizes = [2, 16], strides = [1, 1]} : vector<2x32xf32> to vector<2x16xf32>
    %334 = vector.broadcast %332 : vector<2x1xf32> to vector<2x16xf32>
    %335 = arith.mulf %334, %333 : vector<2x16xf32>
    %336 = arith.addf %325, %335 : vector<2x16xf32>
    %337 = vector.extract_strided_slice %331 {offsets = [0, 1], sizes = [2, 1], strides = [1, 1]} : vector<2x2xf32> to vector<2x1xf32>
    %338 = vector.extract_strided_slice %216 {offsets = [0, 16], sizes = [2, 16], strides = [1, 1]} : vector<2x32xf32> to vector<2x16xf32>
    %339 = vector.broadcast %337 : vector<2x1xf32> to vector<2x16xf32>
    %340 = arith.mulf %339, %338 : vector<2x16xf32>
    %341 = arith.addf %330, %340 : vector<2x16xf32>
    %342 = arith.mulf %266, %317 : vector<2x2xf32>
    %343 = vector.extract_strided_slice %342 {offsets = [0, 0], sizes = [2, 1], strides = [1, 1]} : vector<2x2xf32> to vector<2x1xf32>
    %344 = vector.extract_strided_slice %262 {offsets = [0, 0], sizes = [2, 16], strides = [1, 1]} : vector<2x32xf32> to vector<2x16xf32>
    %345 = vector.broadcast %343 : vector<2x1xf32> to vector<2x16xf32>
    %346 = arith.mulf %345, %344 : vector<2x16xf32>
    %347 = arith.addf %336, %346 : vector<2x16xf32>
    %348 = vector.extract_strided_slice %342 {offsets = [0, 1], sizes = [2, 1], strides = [1, 1]} : vector<2x2xf32> to vector<2x1xf32>
    %349 = vector.extract_strided_slice %262 {offsets = [0, 16], sizes = [2, 16], strides = [1, 1]} : vector<2x32xf32> to vector<2x16xf32>
    %350 = vector.broadcast %348 : vector<2x1xf32> to vector<2x16xf32>
    %351 = arith.mulf %350, %349 : vector<2x16xf32>
    %352 = arith.addf %341, %351 : vector<2x16xf32>
    %353 = arith.mulf %312, %317 : vector<2x2xf32>
    %354 = vector.extract_strided_slice %353 {offsets = [0, 0], sizes = [2, 1], strides = [1, 1]} : vector<2x2xf32> to vector<2x1xf32>
    %355 = vector.extract_strided_slice %308 {offsets = [0, 0], sizes = [2, 16], strides = [1, 1]} : vector<2x32xf32> to vector<2x16xf32>
    %356 = vector.broadcast %354 : vector<2x1xf32> to vector<2x16xf32>
    %357 = arith.mulf %356, %355 : vector<2x16xf32>
    %358 = arith.addf %347, %357 : vector<2x16xf32>
    %359 = vector.extract_strided_slice %353 {offsets = [0, 1], sizes = [2, 1], strides = [1, 1]} : vector<2x2xf32> to vector<2x1xf32>
    %360 = vector.extract_strided_slice %308 {offsets = [0, 16], sizes = [2, 16], strides = [1, 1]} : vector<2x32xf32> to vector<2x16xf32>
    %361 = vector.broadcast %359 : vector<2x1xf32> to vector<2x16xf32>
    %362 = arith.mulf %361, %360 : vector<2x16xf32>
    %363 = arith.addf %352, %362 : vector<2x16xf32>
    %364 = tpu.concatenate %358, %363 in 1 : vector<2x16xf32>, vector<2x16xf32> -> vector<2x32xf32>
    %c0_166 = arith.constant 0 : index
    %c0_167 = arith.constant 0 : index
    %365 = vector.load %arg12[%c0_166, %c0_167] : memref<32x16xf32, #tpu.memory_space<vmem>>, vector<32x16xf32>
    %cst_168 = arith.constant dense<0.000000e+00> : vector<2x16xf32>
    %366 = tpu.matmul %364, %365, %cst_168 {dimension_numbers = #tpu.dot_dimension_numbers<[1], [0], [0], [1], [0, 0, 1, 1], [], []>} : vector<2x32xf32>, vector<32x16xf32>, vector<2x16xf32> -> vector<2x16xf32>
    %c0_169 = arith.constant 0 : index
    %c0_170 = arith.constant 0 : index
    %367 = vector.load %arg13[%c0_169, %c0_170] : memref<1x16xf32, #tpu.memory_space<vmem>>, vector<1x16xf32>
    %368 = vector.broadcast %367 : vector<1x16xf32> to vector<2x16xf32>
    %369 = arith.addf %366, %368 : vector<2x16xf32>
    %370 = vector.extract_strided_slice %369 {offsets = [0, 0], sizes = [2, 8], strides = [1, 1]} : vector<2x16xf32> to vector<2x8xf32>
    %371 = vector.extract_strided_slice %369 {offsets = [0, 8], sizes = [2, 8], strides = [1, 1]} : vector<2x16xf32> to vector<2x8xf32>
    %372 = arith.addf %370, %371 : vector<2x8xf32>
    %c0_171 = arith.constant 0 : index
    %c0_172 = arith.constant 0 : index
    %373 = vector.load %arg14[%c0_171, %c0_172] : memref<8x32xf32, #tpu.memory_space<vmem>>, vector<8x32xf32>
    %cst_173 = arith.constant dense<0.000000e+00> : vector<2x32xf32>
    %374 = tpu.matmul %372, %373, %cst_173 {dimension_numbers = #tpu.dot_dimension_numbers<[1], [0], [0], [1], [0, 0, 1, 1], [], []>} : vector<2x8xf32>, vector<8x32xf32>, vector<2x32xf32> -> vector<2x32xf32>
    %c0_174 = arith.constant 0 : index
    %c0_175 = arith.constant 0 : index
    %375 = vector.load %arg15[%c0_174, %c0_175] : memref<1x32xf32, #tpu.memory_space<vmem>>, vector<1x32xf32>
    %376 = vector.broadcast %375 : vector<1x32xf32> to vector<2x32xf32>
    %377 = arith.addf %374, %376 : vector<2x32xf32>
    %cst_176 = arith.constant 0.000000e+00 : f32
    %378 = vector.broadcast %cst_176 : f32 to vector<2x32xf32>
    %379 = arith.maximumf %377, %378 : vector<2x32xf32>
    %380 = tpu.concatenate %379, %369 in 1 : vector<2x32xf32>, vector<2x16xf32> -> vector<2x48xf32>
    %c0_177 = arith.constant 0 : index
    %c0_178 = arith.constant 0 : index
    %381 = vector.load %arg16[%c0_177, %c0_178] : memref<48x32xf32, #tpu.memory_space<vmem>>, vector<48x32xf32>
    %cst_179 = arith.constant dense<0.000000e+00> : vector<2x32xf32>
    %382 = tpu.matmul %380, %381, %cst_179 {dimension_numbers = #tpu.dot_dimension_numbers<[1], [0], [0], [1], [0, 0, 1, 1], [], []>} : vector<2x48xf32>, vector<48x32xf32>, vector<2x32xf32> -> vector<2x32xf32>
    %c0_180 = arith.constant 0 : index
    %c0_181 = arith.constant 0 : index
    %383 = vector.load %arg17[%c0_180, %c0_181] : memref<1x32xf32, #tpu.memory_space<vmem>>, vector<1x32xf32>
    %384 = vector.broadcast %383 : vector<1x32xf32> to vector<2x32xf32>
    %385 = arith.addf %382, %384 : vector<2x32xf32>
    %cst_182 = arith.constant 0.000000e+00 : f32
    %386 = vector.broadcast %cst_182 : f32 to vector<2x32xf32>
    %387 = arith.maximumf %385, %386 : vector<2x32xf32>
    %c0_183 = arith.constant 0 : index
    %c0_184 = arith.constant 0 : index
    %388 = vector.load %arg18[%c0_183, %c0_184] : memref<2x32xf32, #tpu.memory_space<vmem>>, vector<2x32xf32>
    tpu.vector_store %arg18[%c0_183, %c0_184], %387 {strides = array<i32>} : memref<2x32xf32, #tpu.memory_space<vmem>>, vector<2x32xf32>,
    return
  }
}

</mosaic_0001>

<llo_original>
// kernel: net_forward_fn.1
$region0: #{net_forward_fn.1}
  #allocation0 [shape = 'u32[]', space=smem, size = 0x4, offset = 0x4, fixed_abs, tag = 'smem constant byte address 0x4 - core index']
  #allocation1 [shape = 'u32[144,128]{1,0:T(1,128)}', space=vmem, size = 0x12000, scoped, tag = 'internal scratch']
  #allocation2 [shape = 'f32[8,128]{1,0:T(8,128)}', space=vmem, size = 0x1000, scoped, tag = 'scratch operand']
  %s0 = inlined_call_operand.vmem [shape: f32[8,8,8], index: 0, kind: input, shape index: {}]
  %s1 = inlined_call_operand.vmem [shape: f32[8,8,8], index: 1, kind: input, shape index: {}]
  %s2 = inlined_call_operand.vmem [shape: f32[64,4], index: 2, kind: input, shape index: {}]
  %s3 = inlined_call_operand.hbm [shape: f32[4,8], index: 3, kind: input, shape index: {}]
  %s4 = inlined_call_operand.hbm [shape: f32[1,8], index: 4, kind: input, shape index: {}]
  %s5 = inlined_call_operand.vmem [shape: f32[64,64], index: 5, kind: input, shape index: {}]
  %s6 = inlined_call_operand.vmem [shape: f32[8,8,128], index: 6, kind: input, shape index: {}]
  %s7 = inlined_call_operand.hbm [shape: f32[1,128], index: 7, kind: input, shape index: {}]
  %s8 = inlined_call_operand.vmem [shape: f32[32,128], index: 8, kind: input, shape index: {}]
  %s9 = inlined_call_operand.vmem [shape: f32[64,128], index: 9, kind: input, shape index: {}]
  %s10 = inlined_call_operand.hbm [shape: f32[1,128], index: 10, kind: input, shape index: {}]
  %s11 = inlined_call_operand.vmem [shape: f32[32,2], index: 11, kind: input, shape index: {}]
  %s12 = inlined_call_operand.vmem [shape: f32[32,16], index: 12, kind: input, shape index: {}]
  %s13 = inlined_call_operand.hbm [shape: f32[1,16], index: 13, kind: input, shape index: {}]
  %s14 = inlined_call_operand.hbm [shape: f32[8,32], index: 14, kind: input, shape index: {}]
  %s15 = inlined_call_operand.hbm [shape: f32[1,32], index: 15, kind: input, shape index: {}]
  %s16 = inlined_call_operand.vmem [shape: f32[48,32], index: 16, kind: input, shape index: {}]
  %s17 = inlined_call_operand.hbm [shape: f32[1,32], index: 17, kind: input, shape index: {}]
  %s18 = inlined_call_operand.vmem [shape: f32[2,32], index: 18, kind: output, shape index: {}]
  %s19 = sld [smem:[#allocation0]]
  $region114: #{net_forward_fn.1} parent=0
    _
  %s21 = ssub.s32 1, %s19
  %s22 = scalar_select 0, %s21, %s19
  $region1: #{net_forward_fn.1} parent=0
    #allocation3 [shape = 'u8[2048]{0}', space=vmem, size = 0x800, scoped, tag = 'input window, operand 3, single buffered']
    #allocation4 [shape = 's32[1]{0}', space=sflag, size = 0x4, scoped, tag = 'scoped memory for net_forward_fn.1']
    #allocation5 [shape = 'u8[512]{0}', space=vmem, size = 0x400, scoped, tag = 'input window, operand 4, single buffered']
    #allocation6 [shape = 's32[1]{0}', space=sflag, size = 0x4, scoped, tag = 'scoped memory for net_forward_fn.1']
    #allocation7 [shape = 'u8[512]{0}', space=vmem, size = 0x400, scoped, tag = 'input window, operand 7, single buffered']
    #allocation8 [shape = 'u8[512]{0}', space=vmem, size = 0x400, scoped, tag = 'input window, operand 10, single buffered']
    #allocation9 [shape = 's32[1]{0}', space=sflag, size = 0x4, scoped, tag = 'scoped memory for net_forward_fn.1']
    #allocation10 [shape = 'u8[512]{0}', space=vmem, size = 0x400, scoped, tag = 'input window, operand 13, single buffered']
    #allocation11 [shape = 'u8[4096]{0}', space=vmem, size = 0x1000, scoped, tag = 'input window, operand 14, single buffered']
    #allocation12 [shape = 's32[1]{0}', space=sflag, size = 0x4, scoped, tag = 'scoped memory for net_forward_fn.1']
    #allocation13 [shape = 'u8[512]{0}', space=vmem, size = 0x400, scoped, tag = 'input window, operand 15, single buffered']
    #allocation14 [shape = 'u8[512]{0}', space=vmem, size = 0x400, scoped, tag = 'input window, operand 17, single buffered']
    #allocation15 [shape = 's32[1]{0}', space=sflag, size = 0x4, scoped, tag = 'scoped memory for net_forward_fn.1']
    %23 = vsyncpa [#allocation4], 0
    %24 = vsyncpa [#allocation6], 0
    %25 = vsyncpa [#allocation9], 0
    %26 = vsyncpa [#allocation12], 0
    %27 = vsyncpa [#allocation15], 0
    // Predicated region
    $region2: #{net_forward_fn.1} parent=1 // pred_check
      _
    $region3: #{net_forward_fn.1} parent=1 // pred_check_branch
      %29 = sbr.rel (0) target = $region5
    $region4: #{net_forward_fn.1} parent=1 // pred_region
      _
    $region5: #{net_forward_fn.1} parent=1 // pred_fallthru
      _
    // Predicated region
    $region6: #{net_forward_fn.1} parent=1 // pred_check
      _
    $region7: #{net_forward_fn.1} parent=1 // pred_check_branch
      %31 = sbr.rel (0) target = $region9
    $region8: #{net_forward_fn.1} parent=1 // pred_region
      _
    $region9: #{net_forward_fn.1} parent=1 // pred_fallthru
      _
    // Predicated region
    $region10: #{net_forward_fn.1} parent=1 // pred_check
      _
    $region11: #{net_forward_fn.1} parent=1 // pred_check_branch
      %33 = sbr.rel (0) target = $region13
    $region12: #{net_forward_fn.1} parent=1 // pred_region
      _
    $region13: #{net_forward_fn.1} parent=1 // pred_fallthru
      _
    // Predicated region
    $region14: #{net_forward_fn.1} parent=1 // pred_check
      _
    $region15: #{net_forward_fn.1} parent=1 // pred_check_branch
      %35 = sbr.rel (0) target = $region17
    $region16: #{net_forward_fn.1} parent=1 // pred_region
      %s37 = ssub.s32 64, 64
      %38 = vsyncadd [#allocation4], %s37
      %s40 = sshll.u32 [#allocation3], 4
      %s41 = int_to_ptr.vmem [resolvable:$true] %s40
      %43 = dma.hbm_to_vmem [thread:$0]  %s3, 64, %s41, [#allocation4]
    $region17: #{net_forward_fn.1} parent=1 // pred_fallthru
      _
    // Predicated region
    $region18: #{net_forward_fn.1} parent=1 // pred_check
      _
    $region19: #{net_forward_fn.1} parent=1 // pred_check_branch
      %45 = sbr.rel (0) target = $region21
    $region20: #{net_forward_fn.1} parent=1 // pred_region
      %s47 = ssub.s32 16, 16
      %48 = vsyncadd [#allocation6], %s47
      %s50 = sshll.u32 [#allocation5], 4
      %s51 = int_to_ptr.vmem [resolvable:$true] %s50
      %53 = dma.hbm_to_vmem [thread:$0]  %s4, 16, %s51, [#allocation6]
    $region21: #{net_forward_fn.1} parent=1 // pred_fallthru
      _
    // Predicated region
    $region22: #{net_forward_fn.1} parent=1 // pred_check
      _
    $region23: #{net_forward_fn.1} parent=1 // pred_check_branch
      %55 = sbr.rel (0) target = $region25
    $region24: #{net_forward_fn.1} parent=1 // pred_region
      _
    $region25: #{net_forward_fn.1} parent=1 // pred_fallthru
      _
    // Predicated region
    $region26: #{net_forward_fn.1} parent=1 // pred_check
      _
    $region27: #{net_forward_fn.1} parent=1 // pred_check_branch
      %57 = sbr.rel (0) target = $region29
    $region28: #{net_forward_fn.1} parent=1 // pred_region
      _
    $region29: #{net_forward_fn.1} parent=1 // pred_fallthru
      _
    // Predicated region
    $region30: #{net_forward_fn.1} parent=1 // pred_check
      _
    $region31: #{net_forward_fn.1} parent=1 // pred_check_branch
      %59 = sbr.rel (0) target = $region33
    $region32: #{net_forward_fn.1} parent=1 // pred_region
      %s61 = ssub.s32 16, 16
      %62 = vsyncadd [#allocation6], %s61
      %s64 = sshll.u32 [#allocation7], 4
      %s65 = int_to_ptr.vmem [resolvable:$true] %s64
      %67 = dma.hbm_to_vmem [thread:$0]  %s7, 16, %s65, [#allocation6]
    $region33: #{net_forward_fn.1} parent=1 // pred_fallthru
      _
    // Predicated region
    $region34: #{net_forward_fn.1} parent=1 // pred_check
      _
    $region35: #{net_forward_fn.1} parent=1 // pred_check_branch
      %69 = sbr.rel (0) target = $region37
    $region36: #{net_forward_fn.1} parent=1 // pred_region
      _
    $region37: #{net_forward_fn.1} parent=1 // pred_fallthru
      _
    // Predicated region
    $region38: #{net_forward_fn.1} parent=1 // pred_check
      _
    $region39: #{net_forward_fn.1} parent=1 // pred_check_branch
      %71 = sbr.rel (0) target = $region41
    $region40: #{net_forward_fn.1} parent=1 // pred_region
      _
    $region41: #{net_forward_fn.1} parent=1 // pred_fallthru
      _
    // Predicated region
    $region42: #{net_forward_fn.1} parent=1 // pred_check
      _
    $region43: #{net_forward_fn.1} parent=1 // pred_check_branch
      %73 = sbr.rel (0) target = $region45
    $region44: #{net_forward_fn.1} parent=1 // pred_region
      %s75 = ssub.s32 16, 16
      %76 = vsyncadd [#allocation9], %s75
      %s78 = sshll.u32 [#allocation8], 4
      %s79 = int_to_ptr.vmem [resolvable:$true] %s78
      %81 = dma.hbm_to_vmem [thread:$0]  %s10, 16, %s79, [#allocation9]
    $region45: #{net_forward_fn.1} parent=1 // pred_fallthru
      _
    // Predicated region
    $region46: #{net_forward_fn.1} parent=1 // pred_check
      _
    $region47: #{net_forward_fn.1} parent=1 // pred_check_branch
      %83 = sbr.rel (0) target = $region49
    $region48: #{net_forward_fn.1} parent=1 // pred_region
      _
    $region49: #{net_forward_fn.1} parent=1 // pred_fallthru
      _
    // Predicated region
    $region50: #{net_forward_fn.1} parent=1 // pred_check
      _
    $region51: #{net_forward_fn.1} parent=1 // pred_check_branch
      %85 = sbr.rel (0) target = $region53
    $region52: #{net_forward_fn.1} parent=1 // pred_region
      _
    $region53: #{net_forward_fn.1} parent=1 // pred_fallthru
      _
    // Predicated region
    $region54: #{net_forward_fn.1} parent=1 // pred_check
      _
    $region55: #{net_forward_fn.1} parent=1 // pred_check_branch
      %87 = sbr.rel (0) target = $region57
    $region56: #{net_forward_fn.1} parent=1 // pred_region
      %s89 = ssub.s32 16, 16
      %90 = vsyncadd [#allocation9], %s89
      %s92 = sshll.u32 [#allocation10], 4
      %s93 = int_to_ptr.vmem [resolvable:$true] %s92
      %95 = dma.hbm_to_vmem [thread:$0]  %s13, 16, %s93, [#allocation9]
    $region57: #{net_forward_fn.1} parent=1 // pred_fallthru
      _
    // Predicated region
    $region58: #{net_forward_fn.1} parent=1 // pred_check
      _
    $region59: #{net_forward_fn.1} parent=1 // pred_check_branch
      %97 = sbr.rel (0) target = $region61
    $region60: #{net_forward_fn.1} parent=1 // pred_region
      %s99 = ssub.s32 128, 128
      %100 = vsyncadd [#allocation12], %s99
      %s102 = sshll.u32 [#allocation11], 4
      %s103 = int_to_ptr.vmem [resolvable:$true] %s102
      %105 = dma.hbm_to_vmem [thread:$0]  %s14, 128, %s103, [#allocation12]
    $region61: #{net_forward_fn.1} parent=1 // pred_fallthru
      _
    // Predicated region
    $region62: #{net_forward_fn.1} parent=1 // pred_check
      _
    $region63: #{net_forward_fn.1} parent=1 // pred_check_branch
      %107 = sbr.rel (0) target = $region65
    $region64: #{net_forward_fn.1} parent=1 // pred_region
      %s109 = ssub.s32 16, 16
      %110 = vsyncadd [#allocation12], %s109
      %s112 = sshll.u32 [#allocation13], 4
      %s113 = int_to_ptr.vmem [resolvable:$true] %s112
      %115 = dma.hbm_to_vmem [thread:$0]  %s15, 16, %s113, [#allocation12]
    $region65: #{net_forward_fn.1} parent=1 // pred_fallthru
      _
    // Predicated region
    $region66: #{net_forward_fn.1} parent=1 // pred_check
      _
    $region67: #{net_forward_fn.1} parent=1 // pred_check_branch
      %117 = sbr.rel (0) target = $region69
    $region68: #{net_forward_fn.1} parent=1 // pred_region
      _
    $region69: #{net_forward_fn.1} parent=1 // pred_fallthru
      _
    // Predicated region
    $region70: #{net_forward_fn.1} parent=1 // pred_check
      _
    $region71: #{net_forward_fn.1} parent=1 // pred_check_branch
      %119 = sbr.rel (0) target = $region73
    $region72: #{net_forward_fn.1} parent=1 // pred_region
      %s121 = ssub.s32 16, 16
      %122 = vsyncadd [#allocation15], %s121
      %s124 = sshll.u32 [#allocation14], 4
      %s125 = int_to_ptr.vmem [resolvable:$true] %s124
      %127 = dma.hbm_to_vmem [thread:$0]  %s17, 16, %s125, [#allocation15]
    $region73: #{net_forward_fn.1} parent=1 // pred_fallthru
      _
    // Predicated region
    $region74: #{net_forward_fn.1} parent=1 // pred_check
      _
    $region75: #{net_forward_fn.1} parent=1 // pred_check_branch
      %129 = sbr.rel (0) target = $region77
    $region76: #{net_forward_fn.1} parent=1 // pred_region
      %130 = dma.done [#allocation4], 64
    $region77: #{net_forward_fn.1} parent=1 // pred_fallthru
      _
    // Predicated region
    $region78: #{net_forward_fn.1} parent=1 // pred_check
      _
    $region79: #{net_forward_fn.1} parent=1 // pred_check_branch
      %132 = sbr.rel (0) target = $region81
    $region80: #{net_forward_fn.1} parent=1 // pred_region
      %133 = dma.done [#allocation6], 16
    $region81: #{net_forward_fn.1} parent=1 // pred_fallthru
      _
    // Predicated region
    $region82: #{net_forward_fn.1} parent=1 // pred_check
      _
    $region83: #{net_forward_fn.1} parent=1 // pred_check_branch
      %135 = sbr.rel (0) target = $region85
    $region84: #{net_forward_fn.1} parent=1 // pred_region
      %136 = dma.done [#allocation6], 16
    $region85: #{net_forward_fn.1} parent=1 // pred_fallthru
      _
    // Predicated region
    $region86: #{net_forward_fn.1} parent=1 // pred_check
      _
    $region87: #{net_forward_fn.1} parent=1 // pred_check_branch
      %138 = sbr.rel (0) target = $region89
    $region88: #{net_forward_fn.1} parent=1 // pred_region
      %139 = dma.done [#allocation9], 16
    $region89: #{net_forward_fn.1} parent=1 // pred_fallthru
      _
    // Predicated region
    $region90: #{net_forward_fn.1} parent=1 // pred_check
      _
    $region91: #{net_forward_fn.1} parent=1 // pred_check_branch
      %141 = sbr.rel (0) target = $region93
    $region92: #{net_forward_fn.1} parent=1 // pred_region
      %142 = dma.done [#allocation9], 16
    $region93: #{net_forward_fn.1} parent=1 // pred_fallthru
      _
    // Predicated region
    $region94: #{net_forward_fn.1} parent=1 // pred_check
      _
    $region95: #{net_forward_fn.1} parent=1 // pred_check_branch
      %144 = sbr.rel (0) target = $region97
    $region96: #{net_forward_fn.1} parent=1 // pred_region
      %145 = dma.done [#allocation12], 128
    $region97: #{net_forward_fn.1} parent=1 // pred_fallthru
      _
    // Predicated region
    $region98: #{net_forward_fn.1} parent=1 // pred_check
      _
    $region99: #{net_forward_fn.1} parent=1 // pred_check_branch
      %147 = sbr.rel (0) target = $region101
    $region100: #{net_forward_fn.1} parent=1 // pred_region
      %148 = dma.done [#allocation12], 16
    $region101: #{net_forward_fn.1} parent=1 // pred_fallthru
      _
    // Predicated region
    $region102: #{net_forward_fn.1} parent=1 // pred_check
      _
    $region103: #{net_forward_fn.1} parent=1 // pred_check_branch
      %150 = sbr.rel (0) target = $region105
    $region104: #{net_forward_fn.1} parent=1 // pred_region
      %151 = dma.done [#allocation15], 16
    $region105: #{net_forward_fn.1} parent=1 // pred_fallthru
      _
    %v152 = vld [vmem:[%s2] sm:$0xff]
    %v153 = vld [vmem:[%s2 + $0x8] sm:$0xff]
    %v154 = vld [vmem:[%s2 + $0x10] sm:$0xff]
    %v155 = vld [vmem:[%s2 + $0x18] sm:$0xff]
    %v156 = vld [vmem:[%s2 + $0x20] sm:$0xff]
    %v157 = vld [vmem:[%s2 + $0x28] sm:$0xff]
    %v158 = vld [vmem:[%s2 + $0x30] sm:$0xff]
    %v159 = vld [vmem:[%s2 + $0x38] sm:$0xff]
    %v160 = vld [vmem:[#allocation3] sm:$0xf]
    %vm161 = vcmask 31744
    %v163 = vsel %vm161, %v152, 0
    %v166 = vsel %vm161, %v153, 0
    %v169 = vsel %vm161, %v154, 0
    %v172 = vsel %vm161, %v155, 0
    %v175 = vsel %vm161, %v156, 0
    %v178 = vsel %vm161, %v157, 0
    %v181 = vsel %vm161, %v158, 0
    %v184 = vsel %vm161, %v159, 0
    %vm186 = vcmask 1043456
    %v188 = vsel %vm186, %v160, 0
    %190 = vmatprep.subr.mxu0 0.0
    %191 = vmatpush1.msra.mxu0 %v188
    %192 = vmatprep.subr.mxu0 0.0
    %193 = vmatpush1.msra.mxu0 0.0
    %194 = vmatprep.subr.mxu0 0.0
    %195 = vmatpush1.msra.mxu0 0.0
    %196 = vmatprep.subr.mxu0 0.0
    %197 = vmatpush1.msra.mxu0 0.0
    %198 = vmatprep.subr.mxu0 0.0
    %199 = vmatpush1.msra.mxu0 0.0
    %200 = vmatprep.subr.mxu0 0.0
    %201 = vmatpush1.msra.mxu0 0.0
    %202 = vmatprep.subr.mxu0 0.0
    %203 = vmatpush1.msra.mxu0 0.0
    %204 = vmatprep.subr.mxu0 0.0
    %205 = vmatpush1.msra.mxu0 0.0
    %206 = vmatprep.subr.mxu0 0.0
    %207 = vmatpush1.msra.mxu0 0.0
    %208 = vmatprep.subr.mxu0 0.0
    %209 = vmatpush1.msra.mxu0 0.0
    %210 = vmatprep.subr.mxu0 0.0
    %211 = vmatpush1.msra.mxu0 0.0
    %212 = vmatprep.subr.mxu0 0.0
    %213 = vmatpush1.msra.mxu0 0.0
    %214 = vmatprep.subr.mxu0 0.0
    %215 = vmatpush1.msra.mxu0 0.0
    %216 = vmatprep.subr.mxu0 0.0
    %217 = vmatpush1.msra.mxu0 0.0
    %218 = vmatprep.subr.mxu0 0.0
    %219 = vmatpush1.msra.mxu0 0.0
    %220 = vmatprep.subr.mxu0 0.0
    %221 = vmatpush1.msra.mxu0 0.0
    %222 = vmatprep.subr.mxu0 0.0
    %223 = vmatpush1.msra.mxu0 0.0
    %224 = vmatprep.subr.mxu0 0.0
    %225 = vmatpush1.msra.mxu0 0.0
    %226 = vmatprep.subr.mxu0 0.0
    %227 = vmatpush1.msra.mxu0 0.0
    %228 = vmatprep.subr.mxu0 0.0
    %229 = vmatpush1.msra.mxu0 0.0
    %230 = vmatprep.subr.mxu0 0.0
    %231 = vmatpush1.msra.mxu0 0.0
    %232 = vmatprep.subr.mxu0 0.0
    %233 = vmatpush1.msra.mxu0 0.0
    %234 = vmatprep.subr.mxu0 0.0
    %235 = vmatpush1.msra.mxu0 0.0
    %236 = vmatprep.subr.mxu0 0.0
    %237 = vmatpush1.msra.mxu0 0.0
    %238 = vmatprep.subr.mxu0 0.0
    %239 = vmatpush1.msra.mxu0 0.0
    %240 = vmatprep.subr.mxu0 0.0
    %241 = vmatpush1.msra.mxu0 0.0
    %242 = vmatprep.subr.mxu0 0.0
    %243 = vmatpush1.msra.mxu0 0.0
    %244 = vmatprep.subr.mxu0 0.0
    %245 = vmatpush1.msra.mxu0 0.0
    %246 = vmatprep.subr.mxu0 0.0
    %247 = vmatpush1.msra.mxu0 0.0
    %248 = vmatprep.subr.mxu0 0.0
    %249 = vmatpush1.msra.mxu0 0.0
    %250 = vmatprep.subr.mxu0 0.0
    %251 = vmatpush1.msra.mxu0 0.0
    %252 = vmatprep.subr.mxu0 0.0
    %253 = vmatpush1.msra.mxu0 0.0
    %254 = vmatprep.mubr.f32.mxu0 0.0
    %255 = vmatmul.mubr.f32.gmra.mrb[0].mxu0 %v163
    %v256 = vpop.f32.mrb[0].mxu0
    %v257 = vadd.f32 0.0, %v256
    %v258 = vpop.f32.mrb[0].mxu0
    %259 = vmatprep.mubr.f32.mxu0 0.0
    %260 = vmatmul.mubr.f32.gmra.mrb[0].mxu0 %v166
    %v261 = vpop.f32.mrb[0].mxu0
    %v262 = vadd.f32 0.0, %v261
    %v263 = vpop.f32.mrb[0].mxu0
    %264 = vmatprep.mubr.f32.mxu0 0.0
    %265 = vmatmul.mubr.f32.gmra.mrb[0].mxu0 %v169
    %v266 = vpop.f32.mrb[0].mxu0
    %v267 = vadd.f32 0.0, %v266
    %v268 = vpop.f32.mrb[0].mxu0
    %269 = vmatprep.mubr.f32.mxu0 0.0
    %270 = vmatmul.mubr.f32.gmra.mrb[0].mxu0 %v172
    %v271 = vpop.f32.mrb[0].mxu0
    %v272 = vadd.f32 0.0, %v271
    %v273 = vpop.f32.mrb[0].mxu0
    %274 = vmatprep.mubr.f32.mxu0 0.0
    %275 = vmatmul.mubr.f32.gmra.mrb[0].mxu0 %v175
    %v276 = vpop.f32.mrb[0].mxu0
    %v277 = vadd.f32 0.0, %v276
    %v278 = vpop.f32.mrb[0].mxu0
    %279 = vmatprep.mubr.f32.mxu0 0.0
    %280 = vmatmul.mubr.f32.gmra.mrb[0].mxu0 %v178
    %v281 = vpop.f32.mrb[0].mxu0
    %v282 = vadd.f32 0.0, %v281
    %v283 = vpop.f32.mrb[0].mxu0
    %284 = vmatprep.mubr.f32.mxu0 0.0
    %285 = vmatmul.mubr.f32.gmra.mrb[0].mxu0 %v181
    %v286 = vpop.f32.mrb[0].mxu0
    %v287 = vadd.f32 0.0, %v286
    %v288 = vpop.f32.mrb[0].mxu0
    %289 = vmatprep.mubr.f32.mxu0 0.0
    %290 = vmatmul.mubr.f32.gmra.mrb[0].mxu0 %v184
    %v291 = vpop.f32.mrb[0].mxu0
    %v292 = vadd.f32 0.0, %v291
    %v293 = vpop.f32.mrb[0].mxu0
    %294 = vdwg.mxu0
    %v295 = vld [vmem:[%s0] sm:$0xff]
    %vm296 = vcmask 64512
    %v298 = vsel %vm296, %v295, 0
    %300 = vmatprep.subr.mxu0 0.0
    %301 = vmatpush1.msra.mxu0 %v257
    %302 = vmatprep.subr.mxu0 0.0
    %303 = vmatpush1.msra.mxu0 0.0
    %304 = vmatprep.subr.mxu0 0.0
    %305 = vmatpush1.msra.mxu0 0.0
    %306 = vmatprep.subr.mxu0 0.0
    %307 = vmatpush1.msra.mxu0 0.0
    %308 = vmatprep.subr.mxu0 0.0
    %309 = vmatpush1.msra.mxu0 0.0
    %310 = vmatprep.subr.mxu0 0.0
    %311 = vmatpush1.msra.mxu0 0.0
    %312 = vmatprep.subr.mxu0 0.0
    %313 = vmatpush1.msra.mxu0 0.0
    %314 = vmatprep.subr.mxu0 0.0
    %315 = vmatpush1.msra.mxu0 0.0
    %316 = vmatprep.subr.mxu0 0.0
    %317 = vmatpush1.msra.mxu0 0.0
    %318 = vmatprep.subr.mxu0 0.0
    %319 = vmatpush1.msra.mxu0 0.0
    %320 = vmatprep.subr.mxu0 0.0
    %321 = vmatpush1.msra.mxu0 0.0
    %322 = vmatprep.subr.mxu0 0.0
    %323 = vmatpush1.msra.mxu0 0.0
    %324 = vmatprep.subr.mxu0 0.0
    %325 = vmatpush1.msra.mxu0 0.0
    %326 = vmatprep.subr.mxu0 0.0
    %327 = vmatpush1.msra.mxu0 0.0
    %328 = vmatprep.subr.mxu0 0.0
    %329 = vmatpush1.msra.mxu0 0.0
    %330 = vmatprep.subr.mxu0 0.0
    %331 = vmatpush1.msra.mxu0 0.0
    %332 = vmatprep.subr.mxu0 0.0
    %333 = vmatpush1.msra.mxu0 0.0
    %334 = vmatprep.subr.mxu0 0.0
    %335 = vmatpush1.msra.mxu0 0.0
    %336 = vmatprep.subr.mxu0 0.0
    %337 = vmatpush1.msra.mxu0 0.0
    %338 = vmatprep.subr.mxu0 0.0
    %339 = vmatpush1.msra.mxu0 0.0
    %340 = vmatprep.subr.mxu0 0.0
    %341 = vmatpush1.msra.mxu0 0.0
    %342 = vmatprep.subr.mxu0 0.0
    %343 = vmatpush1.msra.mxu0 0.0
    %344 = vmatprep.subr.mxu0 0.0
    %345 = vmatpush1.msra.mxu0 0.0
    %346 = vmatprep.subr.mxu0 0.0
    %347 = vmatpush1.msra.mxu0 0.0
    %348 = vmatprep.subr.mxu0 0.0
    %349 = vmatpush1.msra.mxu0 0.0
    %350 = vmatprep.subr.mxu0 0.0
    %351 = vmatpush1.msra.mxu0 0.0
    %352 = vmatprep.subr.mxu0 0.0
    %353 = vmatpush1.msra.mxu0 0.0
    %354 = vmatprep.subr.mxu0 0.0
    %355 = vmatpush1.msra.mxu0 0.0
    %356 = vmatprep.subr.mxu0 0.0
    %357 = vmatpush1.msra.mxu0 0.0
    %358 = vmatprep.subr.mxu0 0.0
    %359 = vmatpush1.msra.mxu0 0.0
    %360 = vmatprep.subr.mxu0 0.0
    %361 = vmatpush1.msra.mxu0 0.0
    %362 = vmatprep.subr.mxu0 0.0
    %363 = vmatpush1.msra.mxu0 0.0
    %364 = vmatprep.mubr.f32.mxu0 0.0
    %365 = vmatmul.mubr.f32.gmra.mrb[0].mxu0 %v298
    %v366 = vpop.f32.mrb[0].mxu0
    %v367 = vadd.f32 0.0, %v366
    %v368 = vpop.f32.mrb[0].mxu0
    %369 = vdwg.mxu0
    %v370 = vld [vmem:[%s1] sm:$0xff]
    %372 = vrot.lane.b32.xlu0 %v257, 124
    %v373 = vpop.permute.xlu0 %372
    %v376 = vsel %vm296, %v370, 0
    %378 = vmatprep.subr.mxu0 0.0
    %379 = vmatpush1.msra.mxu0 %v373
    %380 = vmatprep.subr.mxu0 0.0
    %381 = vmatpush1.msra.mxu0 0.0
    %382 = vmatprep.subr.mxu0 0.0
    %383 = vmatpush1.msra.mxu0 0.0
    %384 = vmatprep.subr.mxu0 0.0
    %385 = vmatpush1.msra.mxu0 0.0
    %386 = vmatprep.subr.mxu0 0.0
    %387 = vmatpush1.msra.mxu0 0.0
    %388 = vmatprep.subr.mxu0 0.0
    %389 = vmatpush1.msra.mxu0 0.0
    %390 = vmatprep.subr.mxu0 0.0
    %391 = vmatpush1.msra.mxu0 0.0
    %392 = vmatprep.subr.mxu0 0.0
    %393 = vmatpush1.msra.mxu0 0.0
    %394 = vmatprep.subr.mxu0 0.0
    %395 = vmatpush1.msra.mxu0 0.0
    %396 = vmatprep.subr.mxu0 0.0
    %397 = vmatpush1.msra.mxu0 0.0
    %398 = vmatprep.subr.mxu0 0.0
    %399 = vmatpush1.msra.mxu0 0.0
    %400 = vmatprep.subr.mxu0 0.0
    %401 = vmatpush1.msra.mxu0 0.0
    %402 = vmatprep.subr.mxu0 0.0
    %403 = vmatpush1.msra.mxu0 0.0
    %404 = vmatprep.subr.mxu0 0.0
    %405 = vmatpush1.msra.mxu0 0.0
    %406 = vmatprep.subr.mxu0 0.0
    %407 = vmatpush1.msra.mxu0 0.0
    %408 = vmatprep.subr.mxu0 0.0
    %409 = vmatpush1.msra.mxu0 0.0
    %410 = vmatprep.subr.mxu0 0.0
    %411 = vmatpush1.msra.mxu0 0.0
    %412 = vmatprep.subr.mxu0 0.0
    %413 = vmatpush1.msra.mxu0 0.0
    %414 = vmatprep.subr.mxu0 0.0
    %415 = vmatpush1.msra.mxu0 0.0
    %416 = vmatprep.subr.mxu0 0.0
    %417 = vmatpush1.msra.mxu0 0.0
    %418 = vmatprep.subr.mxu0 0.0
    %419 = vmatpush1.msra.mxu0 0.0
    %420 = vmatprep.subr.mxu0 0.0
    %421 = vmatpush1.msra.mxu0 0.0
    %422 = vmatprep.subr.mxu0 0.0
    %423 = vmatpush1.msra.mxu0 0.0
    %424 = vmatprep.subr.mxu0 0.0
    %425 = vmatpush1.msra.mxu0 0.0
    %426 = vmatprep.subr.mxu0 0.0
    %427 = vmatpush1.msra.mxu0 0.0
    %428 = vmatprep.subr.mxu0 0.0
    %429 = vmatpush1.msra.mxu0 0.0
    %430 = vmatprep.subr.mxu0 0.0
    %431 = vmatpush1.msra.mxu0 0.0
    %432 = vmatprep.subr.mxu0 0.0
    %433 = vmatpush1.msra.mxu0 0.0
    %434 = vmatprep.subr.mxu0 0.0
    %435 = vmatpush1.msra.mxu0 0.0
    %436 = vmatprep.subr.mxu0 0.0
    %437 = vmatpush1.msra.mxu0 0.0
    %438 = vmatprep.subr.mxu0 0.0
    %439 = vmatpush1.msra.mxu0 0.0
    %440 = vmatprep.subr.mxu0 0.0
    %441 = vmatpush1.msra.mxu0 0.0
    %442 = vmatprep.mubr.f32.mxu0 0.0
    %443 = vmatmul.mubr.f32.gmra.mrb[0].mxu0 %v376
    %v444 = vpop.f32.mrb[0].mxu0
    %v445 = vadd.f32 0.0, %v444
    %v446 = vpop.f32.mrb[0].mxu0
    %447 = vdwg.mxu0
    %s448 = scalar_lea.vmem %s0, 32
    %v449 = vld [vmem:[%s448] sm:$0xff]
    %v451 = vsel %vm296, %v449, 0
    %453 = vmatprep.subr.mxu0 0.0
    %454 = vmatpush1.msra.mxu0 %v277
    %455 = vmatprep.subr.mxu0 0.0
    %456 = vmatpush1.msra.mxu0 0.0
    %457 = vmatprep.subr.mxu0 0.0
    %458 = vmatpush1.msra.mxu0 0.0
    %459 = vmatprep.subr.mxu0 0.0
    %460 = vmatpush1.msra.mxu0 0.0
    %461 = vmatprep.subr.mxu0 0.0
    %462 = vmatpush1.msra.mxu0 0.0
    %463 = vmatprep.subr.mxu0 0.0
    %464 = vmatpush1.msra.mxu0 0.0
    %465 = vmatprep.subr.mxu0 0.0
    %466 = vmatpush1.msra.mxu0 0.0
    %467 = vmatprep.subr.mxu0 0.0
    %468 = vmatpush1.msra.mxu0 0.0
    %469 = vmatprep.subr.mxu0 0.0
    %470 = vmatpush1.msra.mxu0 0.0
    %471 = vmatprep.subr.mxu0 0.0
    %472 = vmatpush1.msra.mxu0 0.0
    %473 = vmatprep.subr.mxu0 0.0
    %474 = vmatpush1.msra.mxu0 0.0
    %475 = vmatprep.subr.mxu0 0.0
    %476 = vmatpush1.msra.mxu0 0.0
    %477 = vmatprep.subr.mxu0 0.0
    %478 = vmatpush1.msra.mxu0 0.0
    %479 = vmatprep.subr.mxu0 0.0
    %480 = vmatpush1.msra.mxu0 0.0
    %481 = vmatprep.subr.mxu0 0.0
    %482 = vmatpush1.msra.mxu0 0.0
    %483 = vmatprep.subr.mxu0 0.0
    %484 = vmatpush1.msra.mxu0 0.0
    %485 = vmatprep.subr.mxu0 0.0
    %486 = vmatpush1.msra.mxu0 0.0
    %487 = vmatprep.subr.mxu0 0.0
    %488 = vmatpush1.msra.mxu0 0.0
    %489 = vmatprep.subr.mxu0 0.0
    %490 = vmatpush1.msra.mxu0 0.0
    %491 = vmatprep.subr.mxu0 0.0
    %492 = vmatpush1.msra.mxu0 0.0
    %493 = vmatprep.subr.mxu0 0.0
    %494 = vmatpush1.msra.mxu0 0.0
    %495 = vmatprep.subr.mxu0 0.0
    %496 = vmatpush1.msra.mxu0 0.0
    %497 = vmatprep.subr.mxu0 0.0
    %498 = vmatpush1.msra.mxu0 0.0
    %499 = vmatprep.subr.mxu0 0.0
    %500 = vmatpush1.msra.mxu0 0.0
    %501 = vmatprep.subr.mxu0 0.0
    %502 = vmatpush1.msra.mxu0 0.0
    %503 = vmatprep.subr.mxu0 0.0
    %504 = vmatpush1.msra.mxu0 0.0
    %505 = vmatprep.subr.mxu0 0.0
    %506 = vmatpush1.msra.mxu0 0.0
    %507 = vmatprep.subr.mxu0 0.0
    %508 = vmatpush1.msra.mxu0 0.0
    %509 = vmatprep.subr.mxu0 0.0
    %510 = vmatpush1.msra.mxu0 0.0
    %511 = vmatprep.subr.mxu0 0.0
    %512 = vmatpush1.msra.mxu0 0.0
    %513 = vmatprep.subr.mxu0 0.0
    %514 = vmatpush1.msra.mxu0 0.0
    %515 = vmatprep.subr.mxu0 0.0
    %516 = vmatpush1.msra.mxu0 0.0
    %517 = vmatprep.mubr.f32.mxu0 0.0
    %518 = vmatmul.mubr.f32.gmra.mrb[0].mxu0 %v451
    %v519 = vpop.f32.mrb[0].mxu0
    %v520 = vadd.f32 0.0, %v519
    %v521 = vpop.f32.mrb[0].mxu0
    %522 = vdwg.mxu0
    %s523 = scalar_lea.vmem %s1, 32
    %v524 = vld [vmem:[%s523] sm:$0xff]
    %526 = vrot.lane.b32.xlu0 %v277, 124
    %v527 = vpop.permute.xlu0 %526
    %v530 = vsel %vm296, %v524, 0
    %532 = vmatprep.subr.mxu0 0.0
    %533 = vmatpush1.msra.mxu0 %v527
    %534 = vmatprep.subr.mxu0 0.0
    %535 = vmatpush1.msra.mxu0 0.0
    %536 = vmatprep.subr.mxu0 0.0
    %537 = vmatpush1.msra.mxu0 0.0
    %538 = vmatprep.subr.mxu0 0.0
    %539 = vmatpush1.msra.mxu0 0.0
    %540 = vmatprep.subr.mxu0 0.0
    %541 = vmatpush1.msra.mxu0 0.0
    %542 = vmatprep.subr.mxu0 0.0
    %543 = vmatpush1.msra.mxu0 0.0
    %544 = vmatprep.subr.mxu0 0.0
    %545 = vmatpush1.msra.mxu0 0.0
    %546 = vmatprep.subr.mxu0 0.0
    %547 = vmatpush1.msra.mxu0 0.0
    %548 = vmatprep.subr.mxu0 0.0
    %549 = vmatpush1.msra.mxu0 0.0
    %550 = vmatprep.subr.mxu0 0.0
    %551 = vmatpush1.msra.mxu0 0.0
    %552 = vmatprep.subr.mxu0 0.0
    %553 = vmatpush1.msra.mxu0 0.0
    %554 = vmatprep.subr.mxu0 0.0
    %555 = vmatpush1.msra.mxu0 0.0
    %556 = vmatprep.subr.mxu0 0.0
    %557 = vmatpush1.msra.mxu0 0.0
    %558 = vmatprep.subr.mxu0 0.0
    %559 = vmatpush1.msra.mxu0 0.0
    %560 = vmatprep.subr.mxu0 0.0
    %561 = vmatpush1.msra.mxu0 0.0
    %562 = vmatprep.subr.mxu0 0.0
    %563 = vmatpush1.msra.mxu0 0.0
    %564 = vmatprep.subr.mxu0 0.0
    %565 = vmatpush1.msra.mxu0 0.0
    %566 = vmatprep.subr.mxu0 0.0
    %567 = vmatpush1.msra.mxu0 0.0
    %568 = vmatprep.subr.mxu0 0.0
    %569 = vmatpush1.msra.mxu0 0.0
    %570 = vmatprep.subr.mxu0 0.0
    %571 = vmatpush1.msra.mxu0 0.0
    %572 = vmatprep.subr.mxu0 0.0
    %573 = vmatpush1.msra.mxu0 0.0
    %574 = vmatprep.subr.mxu0 0.0
    %575 = vmatpush1.msra.mxu0 0.0
    %576 = vmatprep.subr.mxu0 0.0
    %577 = vmatpush1.msra.mxu0 0.0
    %578 = vmatprep.subr.mxu0 0.0
    %579 = vmatpush1.msra.mxu0 0.0
    %580 = vmatprep.subr.mxu0 0.0
    %581 = vmatpush1.msra.mxu0 0.0
    %582 = vmatprep.subr.mxu0 0.0
    %583 = vmatpush1.msra.mxu0 0.0
    %584 = vmatprep.subr.mxu0 0.0
    %585 = vmatpush1.msra.mxu0 0.0
    %586 = vmatprep.subr.mxu0 0.0
    %587 = vmatpush1.msra.mxu0 0.0
    %588 = vmatprep.subr.mxu0 0.0
    %589 = vmatpush1.msra.mxu0 0.0
    %590 = vmatprep.subr.mxu0 0.0
    %591 = vmatpush1.msra.mxu0 0.0
    %592 = vmatprep.subr.mxu0 0.0
    %593 = vmatpush1.msra.mxu0 0.0
    %594 = vmatprep.subr.mxu0 0.0
    %595 = vmatpush1.msra.mxu0 0.0
    %596 = vmatprep.mubr.f32.mxu0 0.0
    %597 = vmatmul.mubr.f32.gmra.mrb[0].mxu0 %v530
    %v598 = vpop.f32.mrb[0].mxu0
    %v599 = vadd.f32 0.0, %v598
    %v600 = vpop.f32.mrb[0].mxu0
    %601 = vdwg.mxu0
    %s602 = scalar_lea.vmem %s0, 8
    %v603 = vld [vmem:[%s602] sm:$0xff]
    %v605 = vsel %vm296, %v603, 0
    %607 = vmatprep.subr.mxu0 0.0
    %608 = vmatpush1.msra.mxu0 %v262
    %609 = vmatprep.subr.mxu0 0.0
    %610 = vmatpush1.msra.mxu0 0.0
    %611 = vmatprep.subr.mxu0 0.0
    %612 = vmatpush1.msra.mxu0 0.0
    %613 = vmatprep.subr.mxu0 0.0
    %614 = vmatpush1.msra.mxu0 0.0
    %615 = vmatprep.subr.mxu0 0.0
    %616 = vmatpush1.msra.mxu0 0.0
    %617 = vmatprep.subr.mxu0 0.0
    %618 = vmatpush1.msra.mxu0 0.0
    %619 = vmatprep.subr.mxu0 0.0
    %620 = vmatpush1.msra.mxu0 0.0
    %621 = vmatprep.subr.mxu0 0.0
    %622 = vmatpush1.msra.mxu0 0.0
    %623 = vmatprep.subr.mxu0 0.0
    %624 = vmatpush1.msra.mxu0 0.0
    %625 = vmatprep.subr.mxu0 0.0
    %626 = vmatpush1.msra.mxu0 0.0
    %627 = vmatprep.subr.mxu0 0.0
    %628 = vmatpush1.msra.mxu0 0.0
    %629 = vmatprep.subr.mxu0 0.0
    %630 = vmatpush1.msra.mxu0 0.0
    %631 = vmatprep.subr.mxu0 0.0
    %632 = vmatpush1.msra.mxu0 0.0
    %633 = vmatprep.subr.mxu0 0.0
    %634 = vmatpush1.msra.mxu0 0.0
    %635 = vmatprep.subr.mxu0 0.0
    %636 = vmatpush1.msra.mxu0 0.0
    %637 = vmatprep.subr.mxu0 0.0
    %638 = vmatpush1.msra.mxu0 0.0
    %639 = vmatprep.subr.mxu0 0.0
    %640 = vmatpush1.msra.mxu0 0.0
    %641 = vmatprep.subr.mxu0 0.0
    %642 = vmatpush1.msra.mxu0 0.0
    %643 = vmatprep.subr.mxu0 0.0
    %644 = vmatpush1.msra.mxu0 0.0
    %645 = vmatprep.subr.mxu0 0.0
    %646 = vmatpush1.msra.mxu0 0.0
    %647 = vmatprep.subr.mxu0 0.0
    %648 = vmatpush1.msra.mxu0 0.0
    %649 = vmatprep.subr.mxu0 0.0
    %650 = vmatpush1.msra.mxu0 0.0
    %651 = vmatprep.subr.mxu0 0.0
    %652 = vmatpush1.msra.mxu0 0.0
    %653 = vmatprep.subr.mxu0 0.0
    %654 = vmatpush1.msra.mxu0 0.0
    %655 = vmatprep.subr.mxu0 0.0
    %656 = vmatpush1.msra.mxu0 0.0
    %657 = vmatprep.subr.mxu0 0.0
    %658 = vmatpush1.msra.mxu0 0.0
    %659 = vmatprep.subr.mxu0 0.0
    %660 = vmatpush1.msra.mxu0 0.0
    %661 = vmatprep.subr.mxu0 0.0
    %662 = vmatpush1.msra.mxu0 0.0
    %663 = vmatprep.subr.mxu0 0.0
    %664 = vmatpush1.msra.mxu0 0.0
    %665 = vmatprep.subr.mxu0 0.0
    %666 = vmatpush1.msra.mxu0 0.0
    %667 = vmatprep.subr.mxu0 0.0
    %668 = vmatpush1.msra.mxu0 0.0
    %669 = vmatprep.subr.mxu0 0.0
    %670 = vmatpush1.msra.mxu0 0.0
    %671 = vmatprep.mubr.f32.mxu0 0.0
    %672 = vmatmul.mubr.f32.gmra.mrb[0].mxu0 %v605
    %v673 = vpop.f32.mrb[0].mxu0
    %v674 = vadd.f32 0.0, %v673
    %v675 = vpop.f32.mrb[0].mxu0
    %676 = vdwg.mxu0
    %s677 = scalar_lea.vmem %s1, 8
    %v678 = vld [vmem:[%s677] sm:$0xff]
    %680 = vrot.lane.b32.xlu0 %v262, 124
    %v681 = vpop.permute.xlu0 %680
    %v684 = vsel %vm296, %v678, 0
    %686 = vmatprep.subr.mxu0 0.0
    %687 = vmatpush1.msra.mxu0 %v681
    %688 = vmatprep.subr.mxu0 0.0
    %689 = vmatpush1.msra.mxu0 0.0
    %690 = vmatprep.subr.mxu0 0.0
    %691 = vmatpush1.msra.mxu0 0.0
    %692 = vmatprep.subr.mxu0 0.0
    %693 = vmatpush1.msra.mxu0 0.0
    %694 = vmatprep.subr.mxu0 0.0
    %695 = vmatpush1.msra.mxu0 0.0
    %696 = vmatprep.subr.mxu0 0.0
    %697 = vmatpush1.msra.mxu0 0.0
    %698 = vmatprep.subr.mxu0 0.0
    %699 = vmatpush1.msra.mxu0 0.0
    %700 = vmatprep.subr.mxu0 0.0
    %701 = vmatpush1.msra.mxu0 0.0
    %702 = vmatprep.subr.mxu0 0.0
    %703 = vmatpush1.msra.mxu0 0.0
    %704 = vmatprep.subr.mxu0 0.0
    %705 = vmatpush1.msra.mxu0 0.0
    %706 = vmatprep.subr.mxu0 0.0
    %707 = vmatpush1.msra.mxu0 0.0
    %708 = vmatprep.subr.mxu0 0.0
    %709 = vmatpush1.msra.mxu0 0.0
    %710 = vmatprep.subr.mxu0 0.0
    %711 = vmatpush1.msra.mxu0 0.0
    %712 = vmatprep.subr.mxu0 0.0
    %713 = vmatpush1.msra.mxu0 0.0
    %714 = vmatprep.subr.mxu0 0.0
    %715 = vmatpush1.msra.mxu0 0.0
    %716 = vmatprep.subr.mxu0 0.0
    %717 = vmatpush1.msra.mxu0 0.0
    %718 = vmatprep.subr.mxu0 0.0
    %719 = vmatpush1.msra.mxu0 0.0
    %720 = vmatprep.subr.mxu0 0.0
    %721 = vmatpush1.msra.mxu0 0.0
    %722 = vmatprep.subr.mxu0 0.0
    %723 = vmatpush1.msra.mxu0 0.0
    %724 = vmatprep.subr.mxu0 0.0
    %725 = vmatpush1.msra.mxu0 0.0
    %726 = vmatprep.subr.mxu0 0.0
    %727 = vmatpush1.msra.mxu0 0.0
    %728 = vmatprep.subr.mxu0 0.0
    %729 = vmatpush1.msra.mxu0 0.0
    %730 = vmatprep.subr.mxu0 0.0
    %731 = vmatpush1.msra.mxu0 0.0
    %732 = vmatprep.subr.mxu0 0.0
    %733 = vmatpush1.msra.mxu0 0.0
    %734 = vmatprep.subr.mxu0 0.0
    %735 = vmatpush1.msra.mxu0 0.0
    %736 = vmatprep.subr.mxu0 0.0
    %737 = vmatpush1.msra.mxu0 0.0
    %738 = vmatprep.subr.mxu0 0.0
    %739 = vmatpush1.msra.mxu0 0.0
    %740 = vmatprep.subr.mxu0 0.0
    %741 = vmatpush1.msra.mxu0 0.0
    %742 = vmatprep.subr.mxu0 0.0
    %743 = vmatpush1.msra.mxu0 0.0
    %744 = vmatprep.subr.mxu0 0.0
    %745 = vmatpush1.msra.mxu0 0.0
    %746 = vmatprep.subr.mxu0 0.0
    %747 = vmatpush1.msra.mxu0 0.0
    %748 = vmatprep.subr.mxu0 0.0
    %749 = vmatpush1.msra.mxu0 0.0
    %750 = vmatprep.mubr.f32.mxu0 0.0
    %751 = vmatmul.mubr.f32.gmra.mrb[0].mxu0 %v684
    %v752 = vpop.f32.mrb[0].mxu0
    %v753 = vadd.f32 0.0, %v752
    %v754 = vpop.f32.mrb[0].mxu0
    %755 = vdwg.mxu0
    %s756 = scalar_lea.vmem %s0, 40
    %v757 = vld [vmem:[%s756] sm:$0xff]
    %v759 = vsel %vm296, %v757, 0
    %761 = vmatprep.subr.mxu0 0.0
    %762 = vmatpush1.msra.mxu0 %v282
    %763 = vmatprep.subr.mxu0 0.0
    %764 = vmatpush1.msra.mxu0 0.0
    %765 = vmatprep.subr.mxu0 0.0
    %766 = vmatpush1.msra.mxu0 0.0
    %767 = vmatprep.subr.mxu0 0.0
    %768 = vmatpush1.msra.mxu0 0.0
    %769 = vmatprep.subr.mxu0 0.0
    %770 = vmatpush1.msra.mxu0 0.0
    %771 = vmatprep.subr.mxu0 0.0
    %772 = vmatpush1.msra.mxu0 0.0
    %773 = vmatprep.subr.mxu0 0.0
    %774 = vmatpush1.msra.mxu0 0.0
    %775 = vmatprep.subr.mxu0 0.0
    %776 = vmatpush1.msra.mxu0 0.0
    %777 = vmatprep.subr.mxu0 0.0
    %778 = vmatpush1.msra.mxu0 0.0
    %779 = vmatprep.subr.mxu0 0.0
    %780 = vmatpush1.msra.mxu0 0.0
    %781 = vmatprep.subr.mxu0 0.0
    %782 = vmatpush1.msra.mxu0 0.0
    %783 = vmatprep.subr.mxu0 0.0
    %784 = vmatpush1.msra.mxu0 0.0
    %785 = vmatprep.subr.mxu0 0.0
    %786 = vmatpush1.msra.mxu0 0.0
    %787 = vmatprep.subr.mxu0 0.0
    %788 = vmatpush1.msra.mxu0 0.0
    %789 = vmatprep.subr.mxu0 0.0
    %790 = vmatpush1.msra.mxu0 0.0
    %791 = vmatprep.subr.mxu0 0.0
    %792 = vmatpush1.msra.mxu0 0.0
    %793 = vmatprep.subr.mxu0 0.0
    %794 = vmatpush1.msra.mxu0 0.0
    %795 = vmatprep.subr.mxu0 0.0
    %796 = vmatpush1.msra.mxu0 0.0
    %797 = vmatprep.subr.mxu0 0.0
    %798 = vmatpush1.msra.mxu0 0.0
    %799 = vmatprep.subr.mxu0 0.0
    %800 = vmatpush1.msra.mxu0 0.0
    %801 = vmatprep.subr.mxu0 0.0
    %802 = vmatpush1.msra.mxu0 0.0
    %803 = vmatprep.subr.mxu0 0.0
    %804 = vmatpush1.msra.mxu0 0.0
    %805 = vmatprep.subr.mxu0 0.0
    %806 = vmatpush1.msra.mxu0 0.0
    %807 = vmatprep.subr.mxu0 0.0
    %808 = vmatpush1.msra.mxu0 0.0
    %809 = vmatprep.subr.mxu0 0.0
    %810 = vmatpush1.msra.mxu0 0.0
    %811 = vmatprep.subr.mxu0 0.0
    %812 = vmatpush1.msra.mxu0 0.0
    %813 = vmatprep.subr.mxu0 0.0
    %814 = vmatpush1.msra.mxu0 0.0
    %815 = vmatprep.subr.mxu0 0.0
    %816 = vmatpush1.msra.mxu0 0.0
    %817 = vmatprep.subr.mxu0 0.0
    %818 = vmatpush1.msra.mxu0 0.0
    %819 = vmatprep.subr.mxu0 0.0
    %820 = vmatpush1.msra.mxu0 0.0
    %821 = vmatprep.subr.mxu0 0.0
    %822 = vmatpush1.msra.mxu0 0.0
    %823 = vmatprep.subr.mxu0 0.0
    %824 = vmatpush1.msra.mxu0 0.0
    %825 = vmatprep.mubr.f32.mxu0 0.0
    %826 = vmatmul.mubr.f32.gmra.mrb[0].mxu0 %v759
    %v827 = vpop.f32.mrb[0].mxu0
    %v828 = vadd.f32 0.0, %v827
    %v829 = vpop.f32.mrb[0].mxu0
    %830 = vdwg.mxu0
    %s831 = scalar_lea.vmem %s1, 40
    %v832 = vld [vmem:[%s831] sm:$0xff]
    %834 = vrot.lane.b32.xlu0 %v282, 124
    %v835 = vpop.permute.xlu0 %834
    %v838 = vsel %vm296, %v832, 0
    %840 = vmatprep.subr.mxu0 0.0
    %841 = vmatpush1.msra.mxu0 %v835
    %842 = vmatprep.subr.mxu0 0.0
    %843 = vmatpush1.msra.mxu0 0.0
    %844 = vmatprep.subr.mxu0 0.0
    %845 = vmatpush1.msra.mxu0 0.0
    %846 = vmatprep.subr.mxu0 0.0
    %847 = vmatpush1.msra.mxu0 0.0
    %848 = vmatprep.subr.mxu0 0.0
    %849 = vmatpush1.msra.mxu0 0.0
    %850 = vmatprep.subr.mxu0 0.0
    %851 = vmatpush1.msra.mxu0 0.0
    %852 = vmatprep.subr.mxu0 0.0
    %853 = vmatpush1.msra.mxu0 0.0
    %854 = vmatprep.subr.mxu0 0.0
    %855 = vmatpush1.msra.mxu0 0.0
    %856 = vmatprep.subr.mxu0 0.0
    %857 = vmatpush1.msra.mxu0 0.0
    %858 = vmatprep.subr.mxu0 0.0
    %859 = vmatpush1.msra.mxu0 0.0
    %860 = vmatprep.subr.mxu0 0.0
    %861 = vmatpush1.msra.mxu0 0.0
    %862 = vmatprep.subr.mxu0 0.0
    %863 = vmatpush1.msra.mxu0 0.0
    %864 = vmatprep.subr.mxu0 0.0
    %865 = vmatpush1.msra.mxu0 0.0
    %866 = vmatprep.subr.mxu0 0.0
    %867 = vmatpush1.msra.mxu0 0.0
    %868 = vmatprep.subr.mxu0 0.0
    %869 = vmatpush1.msra.mxu0 0.0
    %870 = vmatprep.subr.mxu0 0.0
    %871 = vmatpush1.msra.mxu0 0.0
    %872 = vmatprep.subr.mxu0 0.0
    %873 = vmatpush1.msra.mxu0 0.0
    %874 = vmatprep.subr.mxu0 0.0
    %875 = vmatpush1.msra.mxu0 0.0
    %876 = vmatprep.subr.mxu0 0.0
    %877 = vmatpush1.msra.mxu0 0.0
    %878 = vmatprep.subr.mxu0 0.0
    %879 = vmatpush1.msra.mxu0 0.0
    %880 = vmatprep.subr.mxu0 0.0
    %881 = vmatpush1.msra.mxu0 0.0
    %882 = vmatprep.subr.mxu0 0.0
    %883 = vmatpush1.msra.mxu0 0.0
    %884 = vmatprep.subr.mxu0 0.0
    %885 = vmatpush1.msra.mxu0 0.0
    %886 = vmatprep.subr.mxu0 0.0
    %887 = vmatpush1.msra.mxu0 0.0
    %888 = vmatprep.subr.mxu0 0.0
    %889 = vmatpush1.msra.mxu0 0.0
    %890 = vmatprep.subr.mxu0 0.0
    %891 = vmatpush1.msra.mxu0 0.0
    %892 = vmatprep.subr.mxu0 0.0
    %893 = vmatpush1.msra.mxu0 0.0
    %894 = vmatprep.subr.mxu0 0.0
    %895 = vmatpush1.msra.mxu0 0.0
    %896 = vmatprep.subr.mxu0 0.0
    %897 = vmatpush1.msra.mxu0 0.0
    %898 = vmatprep.subr.mxu0 0.0
    %899 = vmatpush1.msra.mxu0 0.0
    %900 = vmatprep.subr.mxu0 0.0
    %901 = vmatpush1.msra.mxu0 0.0
    %902 = vmatprep.subr.mxu0 0.0
    %903 = vmatpush1.msra.mxu0 0.0
    %904 = vmatprep.mubr.f32.mxu0 0.0
    %905 = vmatmul.mubr.f32.gmra.mrb[0].mxu0 %v838
    %v906 = vpop.f32.mrb[0].mxu0
    %v907 = vadd.f32 0.0, %v906
    %v908 = vpop.f32.mrb[0].mxu0
    %909 = vdwg.mxu0
    %s910 = scalar_lea.vmem %s0, 16
    %v911 = vld [vmem:[%s910] sm:$0xff]
    %v913 = vsel %vm296, %v911, 0
    %915 = vmatprep.subr.mxu0 0.0
    %916 = vmatpush1.msra.mxu0 %v267
    %917 = vmatprep.subr.mxu0 0.0
    %918 = vmatpush1.msra.mxu0 0.0
    %919 = vmatprep.subr.mxu0 0.0
    %920 = vmatpush1.msra.mxu0 0.0
    %921 = vmatprep.subr.mxu0 0.0
    %922 = vmatpush1.msra.mxu0 0.0
    %923 = vmatprep.subr.mxu0 0.0
    %924 = vmatpush1.msra.mxu0 0.0
    %925 = vmatprep.subr.mxu0 0.0
    %926 = vmatpush1.msra.mxu0 0.0
    %927 = vmatprep.subr.mxu0 0.0
    %928 = vmatpush1.msra.mxu0 0.0
    %929 = vmatprep.subr.mxu0 0.0
    %930 = vmatpush1.msra.mxu0 0.0
    %931 = vmatprep.subr.mxu0 0.0
    %932 = vmatpush1.msra.mxu0 0.0
    %933 = vmatprep.subr.mxu0 0.0
    %934 = vmatpush1.msra.mxu0 0.0
    %935 = vmatprep.subr.mxu0 0.0
    %936 = vmatpush1.msra.mxu0 0.0
    %937 = vmatprep.subr.mxu0 0.0
    %938 = vmatpush1.msra.mxu0 0.0
    %939 = vmatprep.subr.mxu0 0.0
    %940 = vmatpush1.msra.mxu0 0.0
    %941 = vmatprep.subr.mxu0 0.0
    %942 = vmatpush1.msra.mxu0 0.0
    %943 = vmatprep.subr.mxu0 0.0
    %944 = vmatpush1.msra.mxu0 0.0
    %945 = vmatprep.subr.mxu0 0.0
    %946 = vmatpush1.msra.mxu0 0.0
    %947 = vmatprep.subr.mxu0 0.0
    %948 = vmatpush1.msra.mxu0 0.0
    %949 = vmatprep.subr.mxu0 0.0
    %950 = vmatpush1.msra.mxu0 0.0
    %951 = vmatprep.subr.mxu0 0.0
    %952 = vmatpush1.msra.mxu0 0.0
    %953 = vmatprep.subr.mxu0 0.0
    %954 = vmatpush1.msra.mxu0 0.0
    %955 = vmatprep.subr.mxu0 0.0
    %956 = vmatpush1.msra.mxu0 0.0
    %957 = vmatprep.subr.mxu0 0.0
    %958 = vmatpush1.msra.mxu0 0.0
    %959 = vmatprep.subr.mxu0 0.0
    %960 = vmatpush1.msra.mxu0 0.0
    %961 = vmatprep.subr.mxu0 0.0
    %962 = vmatpush1.msra.mxu0 0.0
    %963 = vmatprep.subr.mxu0 0.0
    %964 = vmatpush1.msra.mxu0 0.0
    %965 = vmatprep.subr.mxu0 0.0
    %966 = vmatpush1.msra.mxu0 0.0
    %967 = vmatprep.subr.mxu0 0.0
    %968 = vmatpush1.msra.mxu0 0.0
    %969 = vmatprep.subr.mxu0 0.0
    %970 = vmatpush1.msra.mxu0 0.0
    %971 = vmatprep.subr.mxu0 0.0
    %972 = vmatpush1.msra.mxu0 0.0
    %973 = vmatprep.subr.mxu0 0.0
    %974 = vmatpush1.msra.mxu0 0.0
    %975 = vmatprep.subr.mxu0 0.0
    %976 = vmatpush1.msra.mxu0 0.0
    %977 = vmatprep.subr.mxu0 0.0
    %978 = vmatpush1.msra.mxu0 0.0
    %979 = vmatprep.mubr.f32.mxu0 0.0
    %980 = vmatmul.mubr.f32.gmra.mrb[0].mxu0 %v913
    %v981 = vpop.f32.mrb[0].mxu0
    %v982 = vadd.f32 0.0, %v981
    %v983 = vpop.f32.mrb[0].mxu0
    %984 = vdwg.mxu0
    %s985 = scalar_lea.vmem %s1, 16
    %v986 = vld [vmem:[%s985] sm:$0xff]
    %988 = vrot.lane.b32.xlu0 %v267, 124
    %v989 = vpop.permute.xlu0 %988
    %v992 = vsel %vm296, %v986, 0
    %994 = vmatprep.subr.mxu0 0.0
    %995 = vmatpush1.msra.mxu0 %v989
    %996 = vmatprep.subr.mxu0 0.0
    %997 = vmatpush1.msra.mxu0 0.0
    %998 = vmatprep.subr.mxu0 0.0
    %999 = vmatpush1.msra.mxu0 0.0
    %1000 = vmatprep.subr.mxu0 0.0
    %1001 = vmatpush1.msra.mxu0 0.0
    %1002 = vmatprep.subr.mxu0 0.0
    %1003 = vmatpush1.msra.mxu0 0.0
    %1004 = vmatprep.subr.mxu0 0.0
    %1005 = vmatpush1.msra.mxu0 0.0
    %1006 = vmatprep.subr.mxu0 0.0
    %1007 = vmatpush1.msra.mxu0 0.0
    %1008 = vmatprep.subr.mxu0 0.0
    %1009 = vmatpush1.msra.mxu0 0.0
    %1010 = vmatprep.subr.mxu0 0.0
    %1011 = vmatpush1.msra.mxu0 0.0
    %1012 = vmatprep.subr.mxu0 0.0
    %1013 = vmatpush1.msra.mxu0 0.0
    %1014 = vmatprep.subr.mxu0 0.0
    %1015 = vmatpush1.msra.mxu0 0.0
    %1016 = vmatprep.subr.mxu0 0.0
    %1017 = vmatpush1.msra.mxu0 0.0
    %1018 = vmatprep.subr.mxu0 0.0
    %1019 = vmatpush1.msra.mxu0 0.0
    %1020 = vmatprep.subr.mxu0 0.0
    %1021 = vmatpush1.msra.mxu0 0.0
    %1022 = vmatprep.subr.mxu0 0.0
    %1023 = vmatpush1.msra.mxu0 0.0
    %1024 = vmatprep.subr.mxu0 0.0
    %1025 = vmatpush1.msra.mxu0 0.0
    %1026 = vmatprep.subr.mxu0 0.0
    %1027 = vmatpush1.msra.mxu0 0.0
    %1028 = vmatprep.subr.mxu0 0.0
    %1029 = vmatpush1.msra.mxu0 0.0
    %1030 = vmatprep.subr.mxu0 0.0
    %1031 = vmatpush1.msra.mxu0 0.0
    %1032 = vmatprep.subr.mxu0 0.0
    %1033 = vmatpush1.msra.mxu0 0.0
    %1034 = vmatprep.subr.mxu0 0.0
    %1035 = vmatpush1.msra.mxu0 0.0
    %1036 = vmatprep.subr.mxu0 0.0
    %1037 = vmatpush1.msra.mxu0 0.0
    %1038 = vmatprep.subr.mxu0 0.0
    %1039 = vmatpush1.msra.mxu0 0.0
    %1040 = vmatprep.subr.mxu0 0.0
    %1041 = vmatpush1.msra.mxu0 0.0
    %1042 = vmatprep.subr.mxu0 0.0
    %1043 = vmatpush1.msra.mxu0 0.0
    %1044 = vmatprep.subr.mxu0 0.0
    %1045 = vmatpush1.msra.mxu0 0.0
    %1046 = vmatprep.subr.mxu0 0.0
    %1047 = vmatpush1.msra.mxu0 0.0
    %1048 = vmatprep.subr.mxu0 0.0
    %1049 = vmatpush1.msra.mxu0 0.0
    %1050 = vmatprep.subr.mxu0 0.0
    %1051 = vmatpush1.msra.mxu0 0.0
    %1052 = vmatprep.subr.mxu0 0.0
    %1053 = vmatpush1.msra.mxu0 0.0
    %1054 = vmatprep.subr.mxu0 0.0
    %1055 = vmatpush1.msra.mxu0 0.0
    %1056 = vmatprep.subr.mxu0 0.0
    %1057 = vmatpush1.msra.mxu0 0.0
    %1058 = vmatprep.mubr.f32.mxu0 0.0
    %1059 = vmatmul.mubr.f32.gmra.mrb[0].mxu0 %v992
    %v1060 = vpop.f32.mrb[0].mxu0
    %v1061 = vadd.f32 0.0, %v1060
    %v1062 = vpop.f32.mrb[0].mxu0
    %1063 = vdwg.mxu0
    %s1064 = scalar_lea.vmem %s0, 48
    %v1065 = vld [vmem:[%s1064] sm:$0xff]
    %v1067 = vsel %vm296, %v1065, 0
    %1069 = vmatprep.subr.mxu0 0.0
    %1070 = vmatpush1.msra.mxu0 %v287
    %1071 = vmatprep.subr.mxu0 0.0
    %1072 = vmatpush1.msra.mxu0 0.0
    %1073 = vmatprep.subr.mxu0 0.0
    %1074 = vmatpush1.msra.mxu0 0.0
    %1075 = vmatprep.subr.mxu0 0.0
    %1076 = vmatpush1.msra.mxu0 0.0
    %1077 = vmatprep.subr.mxu0 0.0
    %1078 = vmatpush1.msra.mxu0 0.0
    %1079 = vmatprep.subr.mxu0 0.0
    %1080 = vmatpush1.msra.mxu0 0.0
    %1081 = vmatprep.subr.mxu0 0.0
    %1082 = vmatpush1.msra.mxu0 0.0
    %1083 = vmatprep.subr.mxu0 0.0
    %1084 = vmatpush1.msra.mxu0 0.0
    %1085 = vmatprep.subr.mxu0 0.0
    %1086 = vmatpush1.msra.mxu0 0.0
    %1087 = vmatprep.subr.mxu0 0.0
    %1088 = vmatpush1.msra.mxu0 0.0
    %1089 = vmatprep.subr.mxu0 0.0
    %1090 = vmatpush1.msra.mxu0 0.0
    %1091 = vmatprep.subr.mxu0 0.0
    %1092 = vmatpush1.msra.mxu0 0.0
    %1093 = vmatprep.subr.mxu0 0.0
    %1094 = vmatpush1.msra.mxu0 0.0
    %1095 = vmatprep.subr.mxu0 0.0
    %1096 = vmatpush1.msra.mxu0 0.0
    %1097 = vmatprep.subr.mxu0 0.0
    %1098 = vmatpush1.msra.mxu0 0.0
    %1099 = vmatprep.subr.mxu0 0.0
    %1100 = vmatpush1.msra.mxu0 0.0
    %1101 = vmatprep.subr.mxu0 0.0
    %1102 = vmatpush1.msra.mxu0 0.0
    %1103 = vmatprep.subr.mxu0 0.0
    %1104 = vmatpush1.msra.mxu0 0.0
    %1105 = vmatprep.subr.mxu0 0.0
    %1106 = vmatpush1.msra.mxu0 0.0
    %1107 = vmatprep.subr.mxu0 0.0
    %1108 = vmatpush1.msra.mxu0 0.0
    %1109 = vmatprep.subr.mxu0 0.0
    %1110 = vmatpush1.msra.mxu0 0.0
    %1111 = vmatprep.subr.mxu0 0.0
    %1112 = vmatpush1.msra.mxu0 0.0
    %1113 = vmatprep.subr.mxu0 0.0
    %1114 = vmatpush1.msra.mxu0 0.0
    %1115 = vmatprep.subr.mxu0 0.0
    %1116 = vmatpush1.msra.mxu0 0.0
    %1117 = vmatprep.subr.mxu0 0.0
    %1118 = vmatpush1.msra.mxu0 0.0
    %1119 = vmatprep.subr.mxu0 0.0
    %1120 = vmatpush1.msra.mxu0 0.0
    %1121 = vmatprep.subr.mxu0 0.0
    %1122 = vmatpush1.msra.mxu0 0.0
    %1123 = vmatprep.subr.mxu0 0.0
    %1124 = vmatpush1.msra.mxu0 0.0
    %1125 = vmatprep.subr.mxu0 0.0
    %1126 = vmatpush1.msra.mxu0 0.0
    %1127 = vmatprep.subr.mxu0 0.0
    %1128 = vmatpush1.msra.mxu0 0.0
    %1129 = vmatprep.subr.mxu0 0.0
    %1130 = vmatpush1.msra.mxu0 0.0
    %1131 = vmatprep.subr.mxu0 0.0
    %1132 = vmatpush1.msra.mxu0 0.0
    %1133 = vmatprep.mubr.f32.mxu0 0.0
    %1134 = vmatmul.mubr.f32.gmra.mrb[0].mxu0 %v1067
    %v1135 = vpop.f32.mrb[0].mxu0
    %v1136 = vadd.f32 0.0, %v1135
    %v1137 = vpop.f32.mrb[0].mxu0
    %1138 = vdwg.mxu0
    %s1139 = scalar_lea.vmem %s1, 48
    %v1140 = vld [vmem:[%s1139] sm:$0xff]
    %1142 = vrot.lane.b32.xlu0 %v287, 124
    %v1143 = vpop.permute.xlu0 %1142
    %v1146 = vsel %vm296, %v1140, 0
    %1148 = vmatprep.subr.mxu0 0.0
    %1149 = vmatpush1.msra.mxu0 %v1143
    %1150 = vmatprep.subr.mxu0 0.0
    %1151 = vmatpush1.msra.mxu0 0.0
    %1152 = vmatprep.subr.mxu0 0.0
    %1153 = vmatpush1.msra.mxu0 0.0
    %1154 = vmatprep.subr.mxu0 0.0
    %1155 = vmatpush1.msra.mxu0 0.0
    %1156 = vmatprep.subr.mxu0 0.0
    %1157 = vmatpush1.msra.mxu0 0.0
    %1158 = vmatprep.subr.mxu0 0.0
    %1159 = vmatpush1.msra.mxu0 0.0
    %1160 = vmatprep.subr.mxu0 0.0
    %1161 = vmatpush1.msra.mxu0 0.0
    %1162 = vmatprep.subr.mxu0 0.0
    %1163 = vmatpush1.msra.mxu0 0.0
    %1164 = vmatprep.subr.mxu0 0.0
    %1165 = vmatpush1.msra.mxu0 0.0
    %1166 = vmatprep.subr.mxu0 0.0
    %1167 = vmatpush1.msra.mxu0 0.0
    %1168 = vmatprep.subr.mxu0 0.0
    %1169 = vmatpush1.msra.mxu0 0.0
    %1170 = vmatprep.subr.mxu0 0.0
    %1171 = vmatpush1.msra.mxu0 0.0
    %1172 = vmatprep.subr.mxu0 0.0
    %1173 = vmatpush1.msra.mxu0 0.0
    %1174 = vmatprep.subr.mxu0 0.0
    %1175 = vmatpush1.msra.mxu0 0.0
    %1176 = vmatprep.subr.mxu0 0.0
    %1177 = vmatpush1.msra.mxu0 0.0
    %1178 = vmatprep.subr.mxu0 0.0
    %1179 = vmatpush1.msra.mxu0 0.0
    %1180 = vmatprep.subr.mxu0 0.0
    %1181 = vmatpush1.msra.mxu0 0.0
    %1182 = vmatprep.subr.mxu0 0.0
    %1183 = vmatpush1.msra.mxu0 0.0
    %1184 = vmatprep.subr.mxu0 0.0
    %1185 = vmatpush1.msra.mxu0 0.0
    %1186 = vmatprep.subr.mxu0 0.0
    %1187 = vmatpush1.msra.mxu0 0.0
    %1188 = vmatprep.subr.mxu0 0.0
    %1189 = vmatpush1.msra.mxu0 0.0
    %1190 = vmatprep.subr.mxu0 0.0
    %1191 = vmatpush1.msra.mxu0 0.0
    %1192 = vmatprep.subr.mxu0 0.0
    %1193 = vmatpush1.msra.mxu0 0.0
    %1194 = vmatprep.subr.mxu0 0.0
    %1195 = vmatpush1.msra.mxu0 0.0
    %1196 = vmatprep.subr.mxu0 0.0
    %1197 = vmatpush1.msra.mxu0 0.0
    %1198 = vmatprep.subr.mxu0 0.0
    %1199 = vmatpush1.msra.mxu0 0.0
    %1200 = vmatprep.subr.mxu0 0.0
    %1201 = vmatpush1.msra.mxu0 0.0
    %1202 = vmatprep.subr.mxu0 0.0
    %1203 = vmatpush1.msra.mxu0 0.0
    %1204 = vmatprep.subr.mxu0 0.0
    %1205 = vmatpush1.msra.mxu0 0.0
    %1206 = vmatprep.subr.mxu0 0.0
    %1207 = vmatpush1.msra.mxu0 0.0
    %1208 = vmatprep.subr.mxu0 0.0
    %1209 = vmatpush1.msra.mxu0 0.0
    %1210 = vmatprep.subr.mxu0 0.0
    %1211 = vmatpush1.msra.mxu0 0.0
    %1212 = vmatprep.mubr.f32.mxu0 0.0
    %1213 = vmatmul.mubr.f32.gmra.mrb[0].mxu0 %v1146
    %v1214 = vpop.f32.mrb[0].mxu0
    %v1215 = vadd.f32 0.0, %v1214
    %v1216 = vpop.f32.mrb[0].mxu0
    %1217 = vdwg.mxu0
    %s1218 = scalar_lea.vmem %s0, 24
    %v1219 = vld [vmem:[%s1218] sm:$0xff]
    %v1221 = vsel %vm296, %v1219, 0
    %1223 = vmatprep.subr.mxu0 0.0
    %1224 = vmatpush1.msra.mxu0 %v272
    %1225 = vmatprep.subr.mxu0 0.0
    %1226 = vmatpush1.msra.mxu0 0.0
    %1227 = vmatprep.subr.mxu0 0.0
    %1228 = vmatpush1.msra.mxu0 0.0
    %1229 = vmatprep.subr.mxu0 0.0
    %1230 = vmatpush1.msra.mxu0 0.0
    %1231 = vmatprep.subr.mxu0 0.0
    %1232 = vmatpush1.msra.mxu0 0.0
    %1233 = vmatprep.subr.mxu0 0.0
    %1234 = vmatpush1.msra.mxu0 0.0
    %1235 = vmatprep.subr.mxu0 0.0
    %1236 = vmatpush1.msra.mxu0 0.0
    %1237 = vmatprep.subr.mxu0 0.0
    %1238 = vmatpush1.msra.mxu0 0.0
    %1239 = vmatprep.subr.mxu0 0.0
    %1240 = vmatpush1.msra.mxu0 0.0
    %1241 = vmatprep.subr.mxu0 0.0
    %1242 = vmatpush1.msra.mxu0 0.0
    %1243 = vmatprep.subr.mxu0 0.0
    %1244 = vmatpush1.msra.mxu0 0.0
    %1245 = vmatprep.subr.mxu0 0.0
    %1246 = vmatpush1.msra.mxu0 0.0
    %1247 = vmatprep.subr.mxu0 0.0
    %1248 = vmatpush1.msra.mxu0 0.0
    %1249 = vmatprep.subr.mxu0 0.0
    %1250 = vmatpush1.msra.mxu0 0.0
    %1251 = vmatprep.subr.mxu0 0.0
    %1252 = vmatpush1.msra.mxu0 0.0
    %1253 = vmatprep.subr.mxu0 0.0
    %1254 = vmatpush1.msra.mxu0 0.0
    %1255 = vmatprep.subr.mxu0 0.0
    %1256 = vmatpush1.msra.mxu0 0.0
    %1257 = vmatprep.subr.mxu0 0.0
    %1258 = vmatpush1.msra.mxu0 0.0
    %1259 = vmatprep.subr.mxu0 0.0
    %1260 = vmatpush1.msra.mxu0 0.0
    %1261 = vmatprep.subr.mxu0 0.0
    %1262 = vmatpush1.msra.mxu0 0.0
    %1263 = vmatprep.subr.mxu0 0.0
    %1264 = vmatpush1.msra.mxu0 0.0
    %1265 = vmatprep.subr.mxu0 0.0
    %1266 = vmatpush1.msra.mxu0 0.0
    %1267 = vmatprep.subr.mxu0 0.0
    %1268 = vmatpush1.msra.mxu0 0.0
    %1269 = vmatprep.subr.mxu0 0.0
    %1270 = vmatpush1.msra.mxu0 0.0
    %1271 = vmatprep.subr.mxu0 0.0
    %1272 = vmatpush1.msra.mxu0 0.0
    %1273 = vmatprep.subr.mxu0 0.0
    %1274 = vmatpush1.msra.mxu0 0.0
    %1275 = vmatprep.subr.mxu0 0.0
    %1276 = vmatpush1.msra.mxu0 0.0
    %1277 = vmatprep.subr.mxu0 0.0
    %1278 = vmatpush1.msra.mxu0 0.0
    %1279 = vmatprep.subr.mxu0 0.0
    %1280 = vmatpush1.msra.mxu0 0.0
    %1281 = vmatprep.subr.mxu0 0.0
    %1282 = vmatpush1.msra.mxu0 0.0
    %1283 = vmatprep.subr.mxu0 0.0
    %1284 = vmatpush1.msra.mxu0 0.0
    %1285 = vmatprep.subr.mxu0 0.0
    %1286 = vmatpush1.msra.mxu0 0.0
    %1287 = vmatprep.mubr.f32.mxu0 0.0
    %1288 = vmatmul.mubr.f32.gmra.mrb[0].mxu0 %v1221
    %v1289 = vpop.f32.mrb[0].mxu0
    %v1290 = vadd.f32 0.0, %v1289
    %v1291 = vpop.f32.mrb[0].mxu0
    %1292 = vdwg.mxu0
    %s1293 = scalar_lea.vmem %s1, 24
    %v1294 = vld [vmem:[%s1293] sm:$0xff]
    %1296 = vrot.lane.b32.xlu0 %v272, 124
    %v1297 = vpop.permute.xlu0 %1296
    %v1300 = vsel %vm296, %v1294, 0
    %1302 = vmatprep.subr.mxu0 0.0
    %1303 = vmatpush1.msra.mxu0 %v1297
    %1304 = vmatprep.subr.mxu0 0.0
    %1305 = vmatpush1.msra.mxu0 0.0
    %1306 = vmatprep.subr.mxu0 0.0
    %1307 = vmatpush1.msra.mxu0 0.0
    %1308 = vmatprep.subr.mxu0 0.0
    %1309 = vmatpush1.msra.mxu0 0.0
    %1310 = vmatprep.subr.mxu0 0.0
    %1311 = vmatpush1.msra.mxu0 0.0
    %1312 = vmatprep.subr.mxu0 0.0
    %1313 = vmatpush1.msra.mxu0 0.0
    %1314 = vmatprep.subr.mxu0 0.0
    %1315 = vmatpush1.msra.mxu0 0.0
    %1316 = vmatprep.subr.mxu0 0.0
    %1317 = vmatpush1.msra.mxu0 0.0
    %1318 = vmatprep.subr.mxu0 0.0
    %1319 = vmatpush1.msra.mxu0 0.0
    %1320 = vmatprep.subr.mxu0 0.0
    %1321 = vmatpush1.msra.mxu0 0.0
    %1322 = vmatprep.subr.mxu0 0.0
    %1323 = vmatpush1.msra.mxu0 0.0
    %1324 = vmatprep.subr.mxu0 0.0
    %1325 = vmatpush1.msra.mxu0 0.0
    %1326 = vmatprep.subr.mxu0 0.0
    %1327 = vmatpush1.msra.mxu0 0.0
    %1328 = vmatprep.subr.mxu0 0.0
    %1329 = vmatpush1.msra.mxu0 0.0
    %1330 = vmatprep.subr.mxu0 0.0
    %1331 = vmatpush1.msra.mxu0 0.0
    %1332 = vmatprep.subr.mxu0 0.0
    %1333 = vmatpush1.msra.mxu0 0.0
    %1334 = vmatprep.subr.mxu0 0.0
    %1335 = vmatpush1.msra.mxu0 0.0
    %1336 = vmatprep.subr.mxu0 0.0
    %1337 = vmatpush1.msra.mxu0 0.0
    %1338 = vmatprep.subr.mxu0 0.0
    %1339 = vmatpush1.msra.mxu0 0.0
    %1340 = vmatprep.subr.mxu0 0.0
    %1341 = vmatpush1.msra.mxu0 0.0
    %1342 = vmatprep.subr.mxu0 0.0
    %1343 = vmatpush1.msra.mxu0 0.0
    %1344 = vmatprep.subr.mxu0 0.0
    %1345 = vmatpush1.msra.mxu0 0.0
    %1346 = vmatprep.subr.mxu0 0.0
    %1347 = vmatpush1.msra.mxu0 0.0
    %1348 = vmatprep.subr.mxu0 0.0
    %1349 = vmatpush1.msra.mxu0 0.0
    %1350 = vmatprep.subr.mxu0 0.0
    %1351 = vmatpush1.msra.mxu0 0.0
    %1352 = vmatprep.subr.mxu0 0.0
    %1353 = vmatpush1.msra.mxu0 0.0
    %1354 = vmatprep.subr.mxu0 0.0
    %1355 = vmatpush1.msra.mxu0 0.0
    %1356 = vmatprep.subr.mxu0 0.0
    %1357 = vmatpush1.msra.mxu0 0.0
    %1358 = vmatprep.subr.mxu0 0.0
    %1359 = vmatpush1.msra.mxu0 0.0
    %1360 = vmatprep.subr.mxu0 0.0
    %1361 = vmatpush1.msra.mxu0 0.0
    %1362 = vmatprep.subr.mxu0 0.0
    %1363 = vmatpush1.msra.mxu0 0.0
    %1364 = vmatprep.subr.mxu0 0.0
    %1365 = vmatpush1.msra.mxu0 0.0
    %1366 = vmatprep.mubr.f32.mxu0 0.0
    %1367 = vmatmul.mubr.f32.gmra.mrb[0].mxu0 %v1300
    %v1368 = vpop.f32.mrb[0].mxu0
    %v1369 = vadd.f32 0.0, %v1368
    %v1370 = vpop.f32.mrb[0].mxu0
    %1371 = vdwg.mxu0
    %s1372 = scalar_lea.vmem %s0, 56
    %v1373 = vld [vmem:[%s1372] sm:$0xff]
    %v1375 = vsel %vm296, %v1373, 0
    %1377 = vmatprep.subr.mxu0 0.0
    %1378 = vmatpush1.msra.mxu0 %v292
    %1379 = vmatprep.subr.mxu0 0.0
    %1380 = vmatpush1.msra.mxu0 0.0
    %1381 = vmatprep.subr.mxu0 0.0
    %1382 = vmatpush1.msra.mxu0 0.0
    %1383 = vmatprep.subr.mxu0 0.0
    %1384 = vmatpush1.msra.mxu0 0.0
    %1385 = vmatprep.subr.mxu0 0.0
    %1386 = vmatpush1.msra.mxu0 0.0
    %1387 = vmatprep.subr.mxu0 0.0
    %1388 = vmatpush1.msra.mxu0 0.0
    %1389 = vmatprep.subr.mxu0 0.0
    %1390 = vmatpush1.msra.mxu0 0.0
    %1391 = vmatprep.subr.mxu0 0.0
    %1392 = vmatpush1.msra.mxu0 0.0
    %1393 = vmatprep.subr.mxu0 0.0
    %1394 = vmatpush1.msra.mxu0 0.0
    %1395 = vmatprep.subr.mxu0 0.0
    %1396 = vmatpush1.msra.mxu0 0.0
    %1397 = vmatprep.subr.mxu0 0.0
    %1398 = vmatpush1.msra.mxu0 0.0
    %1399 = vmatprep.subr.mxu0 0.0
    %1400 = vmatpush1.msra.mxu0 0.0
    %1401 = vmatprep.subr.mxu0 0.0
    %1402 = vmatpush1.msra.mxu0 0.0
    %1403 = vmatprep.subr.mxu0 0.0
    %1404 = vmatpush1.msra.mxu0 0.0
    %1405 = vmatprep.subr.mxu0 0.0
    %1406 = vmatpush1.msra.mxu0 0.0
    %1407 = vmatprep.subr.mxu0 0.0
    %1408 = vmatpush1.msra.mxu0 0.0
    %1409 = vmatprep.subr.mxu0 0.0
    %1410 = vmatpush1.msra.mxu0 0.0
    %1411 = vmatprep.subr.mxu0 0.0
    %1412 = vmatpush1.msra.mxu0 0.0
    %1413 = vmatprep.subr.mxu0 0.0
    %1414 = vmatpush1.msra.mxu0 0.0
    %1415 = vmatprep.subr.mxu0 0.0
    %1416 = vmatpush1.msra.mxu0 0.0
    %1417 = vmatprep.subr.mxu0 0.0
    %1418 = vmatpush1.msra.mxu0 0.0
    %1419 = vmatprep.subr.mxu0 0.0
    %1420 = vmatpush1.msra.mxu0 0.0
    %1421 = vmatprep.subr.mxu0 0.0
    %1422 = vmatpush1.msra.mxu0 0.0
    %1423 = vmatprep.subr.mxu0 0.0
    %1424 = vmatpush1.msra.mxu0 0.0
    %1425 = vmatprep.subr.mxu0 0.0
    %1426 = vmatpush1.msra.mxu0 0.0
    %1427 = vmatprep.subr.mxu0 0.0
    %1428 = vmatpush1.msra.mxu0 0.0
    %1429 = vmatprep.subr.mxu0 0.0
    %1430 = vmatpush1.msra.mxu0 0.0
    %1431 = vmatprep.subr.mxu0 0.0
    %1432 = vmatpush1.msra.mxu0 0.0
    %1433 = vmatprep.subr.mxu0 0.0
    %1434 = vmatpush1.msra.mxu0 0.0
    %1435 = vmatprep.subr.mxu0 0.0
    %1436 = vmatpush1.msra.mxu0 0.0
    %1437 = vmatprep.subr.mxu0 0.0
    %1438 = vmatpush1.msra.mxu0 0.0
    %1439 = vmatprep.subr.mxu0 0.0
    %1440 = vmatpush1.msra.mxu0 0.0
    %1441 = vmatprep.mubr.f32.mxu0 0.0
    %1442 = vmatmul.mubr.f32.gmra.mrb[0].mxu0 %v1375
    %v1443 = vpop.f32.mrb[0].mxu0
    %v1444 = vadd.f32 0.0, %v1443
    %v1445 = vpop.f32.mrb[0].mxu0
    %1446 = vdwg.mxu0
    %s1447 = scalar_lea.vmem %s1, 56
    %v1448 = vld [vmem:[%s1447] sm:$0xff]
    %1450 = vrot.lane.b32.xlu0 %v292, 124
    %v1451 = vpop.permute.xlu0 %1450
    %v1454 = vsel %vm296, %v1448, 0
    %1456 = vmatprep.subr.mxu0 0.0
    %1457 = vmatpush1.msra.mxu0 %v1451
    %1458 = vmatprep.subr.mxu0 0.0
    %1459 = vmatpush1.msra.mxu0 0.0
    %1460 = vmatprep.subr.mxu0 0.0
    %1461 = vmatpush1.msra.mxu0 0.0
    %1462 = vmatprep.subr.mxu0 0.0
    %1463 = vmatpush1.msra.mxu0 0.0
    %1464 = vmatprep.subr.mxu0 0.0
    %1465 = vmatpush1.msra.mxu0 0.0
    %1466 = vmatprep.subr.mxu0 0.0
    %1467 = vmatpush1.msra.mxu0 0.0
    %1468 = vmatprep.subr.mxu0 0.0
    %1469 = vmatpush1.msra.mxu0 0.0
    %1470 = vmatprep.subr.mxu0 0.0
    %1471 = vmatpush1.msra.mxu0 0.0
    %1472 = vmatprep.subr.mxu0 0.0
    %1473 = vmatpush1.msra.mxu0 0.0
    %1474 = vmatprep.subr.mxu0 0.0
    %1475 = vmatpush1.msra.mxu0 0.0
    %1476 = vmatprep.subr.mxu0 0.0
    %1477 = vmatpush1.msra.mxu0 0.0
    %1478 = vmatprep.subr.mxu0 0.0
    %1479 = vmatpush1.msra.mxu0 0.0
    %1480 = vmatprep.subr.mxu0 0.0
    %1481 = vmatpush1.msra.mxu0 0.0
    %1482 = vmatprep.subr.mxu0 0.0
    %1483 = vmatpush1.msra.mxu0 0.0
    %1484 = vmatprep.subr.mxu0 0.0
    %1485 = vmatpush1.msra.mxu0 0.0
    %1486 = vmatprep.subr.mxu0 0.0
    %1487 = vmatpush1.msra.mxu0 0.0
    %1488 = vmatprep.subr.mxu0 0.0
    %1489 = vmatpush1.msra.mxu0 0.0
    %1490 = vmatprep.subr.mxu0 0.0
    %1491 = vmatpush1.msra.mxu0 0.0
    %1492 = vmatprep.subr.mxu0 0.0
    %1493 = vmatpush1.msra.mxu0 0.0
    %1494 = vmatprep.subr.mxu0 0.0
    %1495 = vmatpush1.msra.mxu0 0.0
    %1496 = vmatprep.subr.mxu0 0.0
    %1497 = vmatpush1.msra.mxu0 0.0
    %1498 = vmatprep.subr.mxu0 0.0
    %1499 = vmatpush1.msra.mxu0 0.0
    %1500 = vmatprep.subr.mxu0 0.0
    %1501 = vmatpush1.msra.mxu0 0.0
    %1502 = vmatprep.subr.mxu0 0.0
    %1503 = vmatpush1.msra.mxu0 0.0
    %1504 = vmatprep.subr.mxu0 0.0
    %1505 = vmatpush1.msra.mxu0 0.0
    %1506 = vmatprep.subr.mxu0 0.0
    %1507 = vmatpush1.msra.mxu0 0.0
    %1508 = vmatprep.subr.mxu0 0.0
    %1509 = vmatpush1.msra.mxu0 0.0
    %1510 = vmatprep.subr.mxu0 0.0
    %1511 = vmatpush1.msra.mxu0 0.0
    %1512 = vmatprep.subr.mxu0 0.0
    %1513 = vmatpush1.msra.mxu0 0.0
    %1514 = vmatprep.subr.mxu0 0.0
    %1515 = vmatpush1.msra.mxu0 0.0
    %1516 = vmatprep.subr.mxu0 0.0
    %1517 = vmatpush1.msra.mxu0 0.0
    %1518 = vmatprep.subr.mxu0 0.0
    %1519 = vmatpush1.msra.mxu0 0.0
    %1520 = vmatprep.mubr.f32.mxu0 0.0
    %1521 = vmatmul.mubr.f32.gmra.mrb[0].mxu0 %v1454
    %v1522 = vpop.f32.mrb[0].mxu0
    %v1523 = vadd.f32 0.0, %v1522
    %v1524 = vpop.f32.mrb[0].mxu0
    %1525 = vdwg.mxu0
    %1534 = vrot.lane.b32.xlu0 %v445, 4
    %v1535 = vpop.permute.xlu0 %1534
    %1536 = vrot.lane.b32.xlu0 %v599, 4
    %v1537 = vpop.permute.xlu0 %1536
    %1538 = vrot.lane.b32.xlu0 %v753, 4
    %v1539 = vpop.permute.xlu0 %1538
    %1540 = vrot.lane.b32.xlu0 %v907, 4
    %v1541 = vpop.permute.xlu0 %1540
    %1542 = vrot.lane.b32.xlu0 %v1061, 4
    %v1543 = vpop.permute.xlu0 %1542
    %1544 = vrot.lane.b32.xlu0 %v1215, 4
    %v1545 = vpop.permute.xlu0 %1544
    %1546 = vrot.lane.b32.xlu0 %v1369, 4
    %v1547 = vpop.permute.xlu0 %1546
    %1548 = vrot.lane.b32.xlu0 %v1523, 4
    %v1549 = vpop.permute.xlu0 %1548
    %v1558 = vsel %vm161, %v367, %v1535
    %v1559 = vsel %vm161, %v520, %v1537
    %v1560 = vsel %vm161, %v674, %v1539
    %v1561 = vsel %vm161, %v828, %v1541
    %v1562 = vsel %vm161, %v982, %v1543
    %v1563 = vsel %vm161, %v1136, %v1545
    %v1564 = vsel %vm161, %v1290, %v1547
    %v1565 = vsel %vm161, %v1444, %v1549
    %v1566 = vld [vmem:[#allocation5] sm:$0x1]
    %v1568 = vlaneseq
    %v1569 = vshrl.u32 %v1568, 7
    %v1570 = vsub.s32 0, %v1569
    %v1571 = vrot.slane %v1566, %v1570
    %v1573 = vadd.f32 %v1558, %v1571
    %v1574 = vadd.f32 %v1559, %v1571
    %v1575 = vadd.f32 %v1560, %v1571
    %v1576 = vadd.f32 %v1561, %v1571
    %v1577 = vadd.f32 %v1562, %v1571
    %v1578 = vadd.f32 %v1563, %v1571
    %v1579 = vadd.f32 %v1564, %v1571
    %v1580 = vadd.f32 %v1565, %v1571
    %v1581 = vmax.f32 %v1573, 0.0
    %v1582 = vmax.f32 %v1574, 0.0
    %v1583 = vmax.f32 %v1575, 0.0
    %v1584 = vmax.f32 %v1576, 0.0
    %v1585 = vmax.f32 %v1577, 0.0
    %v1586 = vmax.f32 %v1578, 0.0
    %v1587 = vmax.f32 %v1579, 0.0
    %v1588 = vmax.f32 %v1580, 0.0
    %v1589 = vld [vmem:[%s5] sm:$0xff]
    %v1590 = vld [vmem:[%s5 + $0x8] sm:$0xff]
    %v1591 = vld [vmem:[%s5 + $0x10] sm:$0xff]
    %v1592 = vld [vmem:[%s5 + $0x18] sm:$0xff]
    %v1593 = vld [vmem:[%s5 + $0x20] sm:$0xff]
    %v1594 = vld [vmem:[%s5 + $0x28] sm:$0xff]
    %v1595 = vld [vmem:[%s5 + $0x30] sm:$0xff]
    %v1596 = vld [vmem:[%s5 + $0x38] sm:$0xff]
    %vm1597 = vcmask 523264
    %v1599 = vsel %vm1597, %v1589, 0
    %v1602 = vsel %vm1597, %v1590, 0
    %v1605 = vsel %vm1597, %v1591, 0
    %v1608 = vsel %vm1597, %v1592, 0
    %v1611 = vsel %vm1597, %v1593, 0
    %v1614 = vsel %vm1597, %v1594, 0
    %v1617 = vsel %vm1597, %v1595, 0
    %v1620 = vsel %vm1597, %v1596, 0
    %1622 = vmatprep.subr.mxu0 0.0
    %1623 = vmatpush1.msra.mxu0 %v1581
    %1624 = vmatprep.subr.mxu0 0.0
    %1625 = vmatpush1.msra.mxu0 %v1582
    %1626 = vmatprep.subr.mxu0 0.0
    %1627 = vmatpush1.msra.mxu0 %v1583
    %1628 = vmatprep.subr.mxu0 0.0
    %1629 = vmatpush1.msra.mxu0 %v1584
    %1630 = vmatprep.subr.mxu0 0.0
    %1631 = vmatpush1.msra.mxu0 %v1585
    %1632 = vmatprep.subr.mxu0 0.0
    %1633 = vmatpush1.msra.mxu0 %v1586
    %1634 = vmatprep.subr.mxu0 0.0
    %1635 = vmatpush1.msra.mxu0 %v1587
    %1636 = vmatprep.subr.mxu0 0.0
    %1637 = vmatpush1.msra.mxu0 %v1588
    %1638 = vmatprep.subr.mxu0 0.0
    %1639 = vmatpush1.msra.mxu0 0.0
    %1640 = vmatprep.subr.mxu0 0.0
    %1641 = vmatpush1.msra.mxu0 0.0
    %1642 = vmatprep.subr.mxu0 0.0
    %1643 = vmatpush1.msra.mxu0 0.0
    %1644 = vmatprep.subr.mxu0 0.0
    %1645 = vmatpush1.msra.mxu0 0.0
    %1646 = vmatprep.subr.mxu0 0.0
    %1647 = vmatpush1.msra.mxu0 0.0
    %1648 = vmatprep.subr.mxu0 0.0
    %1649 = vmatpush1.msra.mxu0 0.0
    %1650 = vmatprep.subr.mxu0 0.0
    %1651 = vmatpush1.msra.mxu0 0.0
    %1652 = vmatprep.subr.mxu0 0.0
    %1653 = vmatpush1.msra.mxu0 0.0
    %1654 = vmatprep.subr.mxu0 0.0
    %1655 = vmatpush1.msra.mxu0 0.0
    %1656 = vmatprep.subr.mxu0 0.0
    %1657 = vmatpush1.msra.mxu0 0.0
    %1658 = vmatprep.subr.mxu0 0.0
    %1659 = vmatpush1.msra.mxu0 0.0
    %1660 = vmatprep.subr.mxu0 0.0
    %1661 = vmatpush1.msra.mxu0 0.0
    %1662 = vmatprep.subr.mxu0 0.0
    %1663 = vmatpush1.msra.mxu0 0.0
    %1664 = vmatprep.subr.mxu0 0.0
    %1665 = vmatpush1.msra.mxu0 0.0
    %1666 = vmatprep.subr.mxu0 0.0
    %1667 = vmatpush1.msra.mxu0 0.0
    %1668 = vmatprep.subr.mxu0 0.0
    %1669 = vmatpush1.msra.mxu0 0.0
    %1670 = vmatprep.subr.mxu0 0.0
    %1671 = vmatpush1.msra.mxu0 0.0
    %1672 = vmatprep.subr.mxu0 0.0
    %1673 = vmatpush1.msra.mxu0 0.0
    %1674 = vmatprep.subr.mxu0 0.0
    %1675 = vmatpush1.msra.mxu0 0.0
    %1676 = vmatprep.subr.mxu0 0.0
    %1677 = vmatpush1.msra.mxu0 0.0
    %1678 = vmatprep.subr.mxu0 0.0
    %1679 = vmatpush1.msra.mxu0 0.0
    %1680 = vmatprep.subr.mxu0 0.0
    %1681 = vmatpush1.msra.mxu0 0.0
    %1682 = vmatprep.subr.mxu0 0.0
    %1683 = vmatpush1.msra.mxu0 0.0
    %1684 = vmatprep.subr.mxu0 0.0
    %1685 = vmatpush1.msra.mxu0 0.0
    %1686 = vmatprep.mubr.f32.mxu0 0.0
    %1687 = vmatmul.mubr.f32.gmra.mrb[0].mxu0 %v1599
    %v1688 = vpop.f32.mrb[0].mxu0
    %v1689 = vadd.f32 0.0, %v1688
    %v1690 = vpop.f32.mrb[0].mxu0
    %1691 = vmatprep.mubr.f32.mxu0 0.0
    %1692 = vmatmul.mubr.f32.gmra.mrb[0].mxu0 %v1602
    %v1693 = vpop.f32.mrb[0].mxu0
    %v1694 = vadd.f32 0.0, %v1693
    %v1695 = vpop.f32.mrb[0].mxu0
    %1696 = vmatprep.mubr.f32.mxu0 0.0
    %1697 = vmatmul.mubr.f32.gmra.mrb[0].mxu0 %v1605
    %v1698 = vpop.f32.mrb[0].mxu0
    %v1699 = vadd.f32 0.0, %v1698
    %v1700 = vpop.f32.mrb[0].mxu0
    %1701 = vmatprep.mubr.f32.mxu0 0.0
    %1702 = vmatmul.mubr.f32.gmra.mrb[0].mxu0 %v1608
    %v1703 = vpop.f32.mrb[0].mxu0
    %v1704 = vadd.f32 0.0, %v1703
    %v1705 = vpop.f32.mrb[0].mxu0
    %1706 = vmatprep.mubr.f32.mxu0 0.0
    %1707 = vmatmul.mubr.f32.gmra.mrb[0].mxu0 %v1611
    %v1708 = vpop.f32.mrb[0].mxu0
    %v1709 = vadd.f32 0.0, %v1708
    %v1710 = vpop.f32.mrb[0].mxu0
    %1711 = vmatprep.mubr.f32.mxu0 0.0
    %1712 = vmatmul.mubr.f32.gmra.mrb[0].mxu0 %v1614
    %v1713 = vpop.f32.mrb[0].mxu0
    %v1714 = vadd.f32 0.0, %v1713
    %v1715 = vpop.f32.mrb[0].mxu0
    %1716 = vmatprep.mubr.f32.mxu0 0.0
    %1717 = vmatmul.mubr.f32.gmra.mrb[0].mxu0 %v1617
    %v1718 = vpop.f32.mrb[0].mxu0
    %v1719 = vadd.f32 0.0, %v1718
    %v1720 = vpop.f32.mrb[0].mxu0
    %1721 = vmatprep.mubr.f32.mxu0 0.0
    %1722 = vmatmul.mubr.f32.gmra.mrb[0].mxu0 %v1620
    %v1723 = vpop.f32.mrb[0].mxu0
    %v1724 = vadd.f32 0.0, %v1723
    %v1725 = vpop.f32.mrb[0].mxu0
    %1726 = vdwg.mxu0
    %v1727 = vld [vmem:[%s6] sm:$0xff]
    %s1728 = scalar_lea.vmem %s6, 8
    %v1729 = vld [vmem:[%s1728] sm:$0xff]
    %v1731 = vsel %vm296, %v1694, 0
    %1733 = vmatprep.subr.mxu0 0.0
    %1734 = vmatpush1.msra.mxu0 %v1729
    %1735 = vmatprep.subr.mxu0 0.0
    %1736 = vmatpush1.msra.mxu0 0.0
    %1737 = vmatprep.subr.mxu0 0.0
    %1738 = vmatpush1.msra.mxu0 0.0
    %1739 = vmatprep.subr.mxu0 0.0
    %1740 = vmatpush1.msra.mxu0 0.0
    %1741 = vmatprep.subr.mxu0 0.0
    %1742 = vmatpush1.msra.mxu0 0.0
    %1743 = vmatprep.subr.mxu0 0.0
    %1744 = vmatpush1.msra.mxu0 0.0
    %1745 = vmatprep.subr.mxu0 0.0
    %1746 = vmatpush1.msra.mxu0 0.0
    %1747 = vmatprep.subr.mxu0 0.0
    %1748 = vmatpush1.msra.mxu0 0.0
    %1749 = vmatprep.subr.mxu0 0.0
    %1750 = vmatpush1.msra.mxu0 0.0
    %1751 = vmatprep.subr.mxu0 0.0
    %1752 = vmatpush1.msra.mxu0 0.0
    %1753 = vmatprep.subr.mxu0 0.0
    %1754 = vmatpush1.msra.mxu0 0.0
    %1755 = vmatprep.subr.mxu0 0.0
    %1756 = vmatpush1.msra.mxu0 0.0
    %1757 = vmatprep.subr.mxu0 0.0
    %1758 = vmatpush1.msra.mxu0 0.0
    %1759 = vmatprep.subr.mxu0 0.0
    %1760 = vmatpush1.msra.mxu0 0.0
    %1761 = vmatprep.subr.mxu0 0.0
    %1762 = vmatpush1.msra.mxu0 0.0
    %1763 = vmatprep.subr.mxu0 0.0
    %1764 = vmatpush1.msra.mxu0 0.0
    %1765 = vmatprep.subr.mxu0 0.0
    %1766 = vmatpush1.msra.mxu0 0.0
    %1767 = vmatprep.subr.mxu0 0.0
    %1768 = vmatpush1.msra.mxu0 0.0
    %1769 = vmatprep.subr.mxu0 0.0
    %1770 = vmatpush1.msra.mxu0 0.0
    %1771 = vmatprep.subr.mxu0 0.0
    %1772 = vmatpush1.msra.mxu0 0.0
    %1773 = vmatprep.subr.mxu0 0.0
    %1774 = vmatpush1.msra.mxu0 0.0
    %1775 = vmatprep.subr.mxu0 0.0
    %1776 = vmatpush1.msra.mxu0 0.0
    %1777 = vmatprep.subr.mxu0 0.0
    %1778 = vmatpush1.msra.mxu0 0.0
    %1779 = vmatprep.subr.mxu0 0.0
    %1780 = vmatpush1.msra.mxu0 0.0
    %1781 = vmatprep.subr.mxu0 0.0
    %1782 = vmatpush1.msra.mxu0 0.0
    %1783 = vmatprep.subr.mxu0 0.0
    %1784 = vmatpush1.msra.mxu0 0.0
    %1785 = vmatprep.subr.mxu0 0.0
    %1786 = vmatpush1.msra.mxu0 0.0
    %1787 = vmatprep.subr.mxu0 0.0
    %1788 = vmatpush1.msra.mxu0 0.0
    %1789 = vmatprep.subr.mxu0 0.0
    %1790 = vmatpush1.msra.mxu0 0.0
    %1791 = vmatprep.subr.mxu0 0.0
    %1792 = vmatpush1.msra.mxu0 0.0
    %1793 = vmatprep.subr.mxu0 0.0
    %1794 = vmatpush1.msra.mxu0 0.0
    %1795 = vmatprep.subr.mxu0 0.0
    %1796 = vmatpush1.msra.mxu0 0.0
    %1797 = vmatprep.mubr.f32.mxu0 0.0
    %1798 = vmatmul.mubr.f32.gmra.mrb[0].mxu0 %v1731
    %v1799 = vpop.f32.mrb[0].mxu0
    %v1800 = vadd.f32 0.0, %v1799
    %v1801 = vpop.f32.mrb[0].mxu0
    %1802 = vdwg.mxu0
    %v1804 = vsel %vm296, %v1689, 0
    %1806 = vmatprep.subr.mxu0 0.0
    %1807 = vmatpush1.msra.mxu0 %v1727
    %1808 = vmatprep.subr.mxu0 0.0
    %1809 = vmatpush1.msra.mxu0 0.0
    %1810 = vmatprep.subr.mxu0 0.0
    %1811 = vmatpush1.msra.mxu0 0.0
    %1812 = vmatprep.subr.mxu0 0.0
    %1813 = vmatpush1.msra.mxu0 0.0
    %1814 = vmatprep.subr.mxu0 0.0
    %1815 = vmatpush1.msra.mxu0 0.0
    %1816 = vmatprep.subr.mxu0 0.0
    %1817 = vmatpush1.msra.mxu0 0.0
    %1818 = vmatprep.subr.mxu0 0.0
    %1819 = vmatpush1.msra.mxu0 0.0
    %1820 = vmatprep.subr.mxu0 0.0
    %1821 = vmatpush1.msra.mxu0 0.0
    %1822 = vmatprep.subr.mxu0 0.0
    %1823 = vmatpush1.msra.mxu0 0.0
    %1824 = vmatprep.subr.mxu0 0.0
    %1825 = vmatpush1.msra.mxu0 0.0
    %1826 = vmatprep.subr.mxu0 0.0
    %1827 = vmatpush1.msra.mxu0 0.0
    %1828 = vmatprep.subr.mxu0 0.0
    %1829 = vmatpush1.msra.mxu0 0.0
    %1830 = vmatprep.subr.mxu0 0.0
    %1831 = vmatpush1.msra.mxu0 0.0
    %1832 = vmatprep.subr.mxu0 0.0
    %1833 = vmatpush1.msra.mxu0 0.0
    %1834 = vmatprep.subr.mxu0 0.0
    %1835 = vmatpush1.msra.mxu0 0.0
    %1836 = vmatprep.subr.mxu0 0.0
    %1837 = vmatpush1.msra.mxu0 0.0
    %1838 = vmatprep.subr.mxu0 0.0
    %1839 = vmatpush1.msra.mxu0 0.0
    %1840 = vmatprep.subr.mxu0 0.0
    %1841 = vmatpush1.msra.mxu0 0.0
    %1842 = vmatprep.subr.mxu0 0.0
    %1843 = vmatpush1.msra.mxu0 0.0
    %1844 = vmatprep.subr.mxu0 0.0
    %1845 = vmatpush1.msra.mxu0 0.0
    %1846 = vmatprep.subr.mxu0 0.0
    %1847 = vmatpush1.msra.mxu0 0.0
    %1848 = vmatprep.subr.mxu0 0.0
    %1849 = vmatpush1.msra.mxu0 0.0
    %1850 = vmatprep.subr.mxu0 0.0
    %1851 = vmatpush1.msra.mxu0 0.0
    %1852 = vmatprep.subr.mxu0 0.0
    %1853 = vmatpush1.msra.mxu0 0.0
    %1854 = vmatprep.subr.mxu0 0.0
    %1855 = vmatpush1.msra.mxu0 0.0
    %1856 = vmatprep.subr.mxu0 0.0
    %1857 = vmatpush1.msra.mxu0 0.0
    %1858 = vmatprep.subr.mxu0 0.0
    %1859 = vmatpush1.msra.mxu0 0.0
    %1860 = vmatprep.subr.mxu0 0.0
    %1861 = vmatpush1.msra.mxu0 0.0
    %1862 = vmatprep.subr.mxu0 0.0
    %1863 = vmatpush1.msra.mxu0 0.0
    %1864 = vmatprep.subr.mxu0 0.0
    %1865 = vmatpush1.msra.mxu0 0.0
    %1866 = vmatprep.subr.mxu0 0.0
    %1867 = vmatpush1.msra.mxu0 0.0
    %1868 = vmatprep.subr.mxu0 0.0
    %1869 = vmatpush1.msra.mxu0 0.0
    %1870 = vmatprep.mubr.f32.mxu0 0.0
    %1871 = vmatmul.mubr.f32.gmra.mrb[0].mxu0 %v1804
    %v1872 = vpop.f32.mrb[0].mxu0
    %v1873 = vadd.f32 %v1800, %v1872
    %v1874 = vpop.f32.mrb[0].mxu0
    %1875 = vdwg.mxu0
    %s1876 = scalar_lea.vmem %s6, 16
    %v1877 = vld [vmem:[%s1876] sm:$0xff]
    %v1879 = vsel %vm296, %v1699, 0
    %1881 = vmatprep.subr.mxu0 0.0
    %1882 = vmatpush1.msra.mxu0 %v1877
    %1883 = vmatprep.subr.mxu0 0.0
    %1884 = vmatpush1.msra.mxu0 0.0
    %1885 = vmatprep.subr.mxu0 0.0
    %1886 = vmatpush1.msra.mxu0 0.0
    %1887 = vmatprep.subr.mxu0 0.0
    %1888 = vmatpush1.msra.mxu0 0.0
    %1889 = vmatprep.subr.mxu0 0.0
    %1890 = vmatpush1.msra.mxu0 0.0
    %1891 = vmatprep.subr.mxu0 0.0
    %1892 = vmatpush1.msra.mxu0 0.0
    %1893 = vmatprep.subr.mxu0 0.0
    %1894 = vmatpush1.msra.mxu0 0.0
    %1895 = vmatprep.subr.mxu0 0.0
    %1896 = vmatpush1.msra.mxu0 0.0
    %1897 = vmatprep.subr.mxu0 0.0
    %1898 = vmatpush1.msra.mxu0 0.0
    %1899 = vmatprep.subr.mxu0 0.0
    %1900 = vmatpush1.msra.mxu0 0.0
    %1901 = vmatprep.subr.mxu0 0.0
    %1902 = vmatpush1.msra.mxu0 0.0
    %1903 = vmatprep.subr.mxu0 0.0
    %1904 = vmatpush1.msra.mxu0 0.0
    %1905 = vmatprep.subr.mxu0 0.0
    %1906 = vmatpush1.msra.mxu0 0.0
    %1907 = vmatprep.subr.mxu0 0.0
    %1908 = vmatpush1.msra.mxu0 0.0
    %1909 = vmatprep.subr.mxu0 0.0
    %1910 = vmatpush1.msra.mxu0 0.0
    %1911 = vmatprep.subr.mxu0 0.0
    %1912 = vmatpush1.msra.mxu0 0.0
    %1913 = vmatprep.subr.mxu0 0.0
    %1914 = vmatpush1.msra.mxu0 0.0
    %1915 = vmatprep.subr.mxu0 0.0
    %1916 = vmatpush1.msra.mxu0 0.0
    %1917 = vmatprep.subr.mxu0 0.0
    %1918 = vmatpush1.msra.mxu0 0.0
    %1919 = vmatprep.subr.mxu0 0.0
    %1920 = vmatpush1.msra.mxu0 0.0
    %1921 = vmatprep.subr.mxu0 0.0
    %1922 = vmatpush1.msra.mxu0 0.0
    %1923 = vmatprep.subr.mxu0 0.0
    %1924 = vmatpush1.msra.mxu0 0.0
    %1925 = vmatprep.subr.mxu0 0.0
    %1926 = vmatpush1.msra.mxu0 0.0
    %1927 = vmatprep.subr.mxu0 0.0
    %1928 = vmatpush1.msra.mxu0 0.0
    %1929 = vmatprep.subr.mxu0 0.0
    %1930 = vmatpush1.msra.mxu0 0.0
    %1931 = vmatprep.subr.mxu0 0.0
    %1932 = vmatpush1.msra.mxu0 0.0
    %1933 = vmatprep.subr.mxu0 0.0
    %1934 = vmatpush1.msra.mxu0 0.0
    %1935 = vmatprep.subr.mxu0 0.0
    %1936 = vmatpush1.msra.mxu0 0.0
    %1937 = vmatprep.subr.mxu0 0.0
    %1938 = vmatpush1.msra.mxu0 0.0
    %1939 = vmatprep.subr.mxu0 0.0
    %1940 = vmatpush1.msra.mxu0 0.0
    %1941 = vmatprep.subr.mxu0 0.0
    %1942 = vmatpush1.msra.mxu0 0.0
    %1943 = vmatprep.subr.mxu0 0.0
    %1944 = vmatpush1.msra.mxu0 0.0
    %1945 = vmatprep.mubr.f32.mxu0 0.0
    %1946 = vmatmul.mubr.f32.gmra.mrb[0].mxu0 %v1879
    %v1947 = vpop.f32.mrb[0].mxu0
    %v1948 = vadd.f32 0.0, %v1947
    %v1949 = vpop.f32.mrb[0].mxu0
    %1950 = vdwg.mxu0
    %v1951 = vadd.f32 %v1873, %v1948
    %s1952 = scalar_lea.vmem %s6, 24
    %v1953 = vld [vmem:[%s1952] sm:$0xff]
    %v1955 = vsel %vm296, %v1704, 0
    %1957 = vmatprep.subr.mxu0 0.0
    %1958 = vmatpush1.msra.mxu0 %v1953
    %1959 = vmatprep.subr.mxu0 0.0
    %1960 = vmatpush1.msra.mxu0 0.0
    %1961 = vmatprep.subr.mxu0 0.0
    %1962 = vmatpush1.msra.mxu0 0.0
    %1963 = vmatprep.subr.mxu0 0.0
    %1964 = vmatpush1.msra.mxu0 0.0
    %1965 = vmatprep.subr.mxu0 0.0
    %1966 = vmatpush1.msra.mxu0 0.0
    %1967 = vmatprep.subr.mxu0 0.0
    %1968 = vmatpush1.msra.mxu0 0.0
    %1969 = vmatprep.subr.mxu0 0.0
    %1970 = vmatpush1.msra.mxu0 0.0
    %1971 = vmatprep.subr.mxu0 0.0
    %1972 = vmatpush1.msra.mxu0 0.0
    %1973 = vmatprep.subr.mxu0 0.0
    %1974 = vmatpush1.msra.mxu0 0.0
    %1975 = vmatprep.subr.mxu0 0.0
    %1976 = vmatpush1.msra.mxu0 0.0
    %1977 = vmatprep.subr.mxu0 0.0
    %1978 = vmatpush1.msra.mxu0 0.0
    %1979 = vmatprep.subr.mxu0 0.0
    %1980 = vmatpush1.msra.mxu0 0.0
    %1981 = vmatprep.subr.mxu0 0.0
    %1982 = vmatpush1.msra.mxu0 0.0
    %1983 = vmatprep.subr.mxu0 0.0
    %1984 = vmatpush1.msra.mxu0 0.0
    %1985 = vmatprep.subr.mxu0 0.0
    %1986 = vmatpush1.msra.mxu0 0.0
    %1987 = vmatprep.subr.mxu0 0.0
    %1988 = vmatpush1.msra.mxu0 0.0
    %1989 = vmatprep.subr.mxu0 0.0
    %1990 = vmatpush1.msra.mxu0 0.0
    %1991 = vmatprep.subr.mxu0 0.0
    %1992 = vmatpush1.msra.mxu0 0.0
    %1993 = vmatprep.subr.mxu0 0.0
    %1994 = vmatpush1.msra.mxu0 0.0
    %1995 = vmatprep.subr.mxu0 0.0
    %1996 = vmatpush1.msra.mxu0 0.0
    %1997 = vmatprep.subr.mxu0 0.0
    %1998 = vmatpush1.msra.mxu0 0.0
    %1999 = vmatprep.subr.mxu0 0.0
    %2000 = vmatpush1.msra.mxu0 0.0
    %2001 = vmatprep.subr.mxu0 0.0
    %2002 = vmatpush1.msra.mxu0 0.0
    %2003 = vmatprep.subr.mxu0 0.0
    %2004 = vmatpush1.msra.mxu0 0.0
    %2005 = vmatprep.subr.mxu0 0.0
    %2006 = vmatpush1.msra.mxu0 0.0
    %2007 = vmatprep.subr.mxu0 0.0
    %2008 = vmatpush1.msra.mxu0 0.0
    %2009 = vmatprep.subr.mxu0 0.0
    %2010 = vmatpush1.msra.mxu0 0.0
    %2011 = vmatprep.subr.mxu0 0.0
    %2012 = vmatpush1.msra.mxu0 0.0
    %2013 = vmatprep.subr.mxu0 0.0
    %2014 = vmatpush1.msra.mxu0 0.0
    %2015 = vmatprep.subr.mxu0 0.0
    %2016 = vmatpush1.msra.mxu0 0.0
    %2017 = vmatprep.subr.mxu0 0.0
    %2018 = vmatpush1.msra.mxu0 0.0
    %2019 = vmatprep.subr.mxu0 0.0
    %2020 = vmatpush1.msra.mxu0 0.0
    %2021 = vmatprep.mubr.f32.mxu0 0.0
    %2022 = vmatmul.mubr.f32.gmra.mrb[0].mxu0 %v1955
    %v2023 = vpop.f32.mrb[0].mxu0
    %v2024 = vadd.f32 0.0, %v2023
    %v2025 = vpop.f32.mrb[0].mxu0
    %2026 = vdwg.mxu0
    %v2027 = vadd.f32 %v1951, %v2024
    %s2028 = scalar_lea.vmem %s6, 32
    %v2029 = vld [vmem:[%s2028] sm:$0xff]
    %v2031 = vsel %vm296, %v1709, 0
    %2033 = vmatprep.subr.mxu0 0.0
    %2034 = vmatpush1.msra.mxu0 %v2029
    %2035 = vmatprep.subr.mxu0 0.0
    %2036 = vmatpush1.msra.mxu0 0.0
    %2037 = vmatprep.subr.mxu0 0.0
    %2038 = vmatpush1.msra.mxu0 0.0
    %2039 = vmatprep.subr.mxu0 0.0
    %2040 = vmatpush1.msra.mxu0 0.0
    %2041 = vmatprep.subr.mxu0 0.0
    %2042 = vmatpush1.msra.mxu0 0.0
    %2043 = vmatprep.subr.mxu0 0.0
    %2044 = vmatpush1.msra.mxu0 0.0
    %2045 = vmatprep.subr.mxu0 0.0
    %2046 = vmatpush1.msra.mxu0 0.0
    %2047 = vmatprep.subr.mxu0 0.0
    %2048 = vmatpush1.msra.mxu0 0.0
    %2049 = vmatprep.subr.mxu0 0.0
    %2050 = vmatpush1.msra.mxu0 0.0
    %2051 = vmatprep.subr.mxu0 0.0
    %2052 = vmatpush1.msra.mxu0 0.0
    %2053 = vmatprep.subr.mxu0 0.0
    %2054 = vmatpush1.msra.mxu0 0.0
    %2055 = vmatprep.subr.mxu0 0.0
    %2056 = vmatpush1.msra.mxu0 0.0
    %2057 = vmatprep.subr.mxu0 0.0
    %2058 = vmatpush1.msra.mxu0 0.0
    %2059 = vmatprep.subr.mxu0 0.0
    %2060 = vmatpush1.msra.mxu0 0.0
    %2061 = vmatprep.subr.mxu0 0.0
    %2062 = vmatpush1.msra.mxu0 0.0
    %2063 = vmatprep.subr.mxu0 0.0
    %2064 = vmatpush1.msra.mxu0 0.0
    %2065 = vmatprep.subr.mxu0 0.0
    %2066 = vmatpush1.msra.mxu0 0.0
    %2067 = vmatprep.subr.mxu0 0.0
    %2068 = vmatpush1.msra.mxu0 0.0
    %2069 = vmatprep.subr.mxu0 0.0
    %2070 = vmatpush1.msra.mxu0 0.0
    %2071 = vmatprep.subr.mxu0 0.0
    %2072 = vmatpush1.msra.mxu0 0.0
    %2073 = vmatprep.subr.mxu0 0.0
    %2074 = vmatpush1.msra.mxu0 0.0
    %2075 = vmatprep.subr.mxu0 0.0
    %2076 = vmatpush1.msra.mxu0 0.0
    %2077 = vmatprep.subr.mxu0 0.0
    %2078 = vmatpush1.msra.mxu0 0.0
    %2079 = vmatprep.subr.mxu0 0.0
    %2080 = vmatpush1.msra.mxu0 0.0
    %2081 = vmatprep.subr.mxu0 0.0
    %2082 = vmatpush1.msra.mxu0 0.0
    %2083 = vmatprep.subr.mxu0 0.0
    %2084 = vmatpush1.msra.mxu0 0.0
    %2085 = vmatprep.subr.mxu0 0.0
    %2086 = vmatpush1.msra.mxu0 0.0
    %2087 = vmatprep.subr.mxu0 0.0
    %2088 = vmatpush1.msra.mxu0 0.0
    %2089 = vmatprep.subr.mxu0 0.0
    %2090 = vmatpush1.msra.mxu0 0.0
    %2091 = vmatprep.subr.mxu0 0.0
    %2092 = vmatpush1.msra.mxu0 0.0
    %2093 = vmatprep.subr.mxu0 0.0
    %2094 = vmatpush1.msra.mxu0 0.0
    %2095 = vmatprep.subr.mxu0 0.0
    %2096 = vmatpush1.msra.mxu0 0.0
    %2097 = vmatprep.mubr.f32.mxu0 0.0
    %2098 = vmatmul.mubr.f32.gmra.mrb[0].mxu0 %v2031
    %v2099 = vpop.f32.mrb[0].mxu0
    %v2100 = vadd.f32 0.0, %v2099
    %v2101 = vpop.f32.mrb[0].mxu0
    %2102 = vdwg.mxu0
    %v2103 = vadd.f32 %v2027, %v2100
    %s2104 = scalar_lea.vmem %s6, 40
    %v2105 = vld [vmem:[%s2104] sm:$0xff]
    %v2107 = vsel %vm296, %v1714, 0
    %2109 = vmatprep.subr.mxu0 0.0
    %2110 = vmatpush1.msra.mxu0 %v2105
    %2111 = vmatprep.subr.mxu0 0.0
    %2112 = vmatpush1.msra.mxu0 0.0
    %2113 = vmatprep.subr.mxu0 0.0
    %2114 = vmatpush1.msra.mxu0 0.0
    %2115 = vmatprep.subr.mxu0 0.0
    %2116 = vmatpush1.msra.mxu0 0.0
    %2117 = vmatprep.subr.mxu0 0.0
    %2118 = vmatpush1.msra.mxu0 0.0
    %2119 = vmatprep.subr.mxu0 0.0
    %2120 = vmatpush1.msra.mxu0 0.0
    %2121 = vmatprep.subr.mxu0 0.0
    %2122 = vmatpush1.msra.mxu0 0.0
    %2123 = vmatprep.subr.mxu0 0.0
    %2124 = vmatpush1.msra.mxu0 0.0
    %2125 = vmatprep.subr.mxu0 0.0
    %2126 = vmatpush1.msra.mxu0 0.0
    %2127 = vmatprep.subr.mxu0 0.0
    %2128 = vmatpush1.msra.mxu0 0.0
    %2129 = vmatprep.subr.mxu0 0.0
    %2130 = vmatpush1.msra.mxu0 0.0
    %2131 = vmatprep.subr.mxu0 0.0
    %2132 = vmatpush1.msra.mxu0 0.0
    %2133 = vmatprep.subr.mxu0 0.0
    %2134 = vmatpush1.msra.mxu0 0.0
    %2135 = vmatprep.subr.mxu0 0.0
    %2136 = vmatpush1.msra.mxu0 0.0
    %2137 = vmatprep.subr.mxu0 0.0
    %2138 = vmatpush1.msra.mxu0 0.0
    %2139 = vmatprep.subr.mxu0 0.0
    %2140 = vmatpush1.msra.mxu0 0.0
    %2141 = vmatprep.subr.mxu0 0.0
    %2142 = vmatpush1.msra.mxu0 0.0
    %2143 = vmatprep.subr.mxu0 0.0
    %2144 = vmatpush1.msra.mxu0 0.0
    %2145 = vmatprep.subr.mxu0 0.0
    %2146 = vmatpush1.msra.mxu0 0.0
    %2147 = vmatprep.subr.mxu0 0.0
    %2148 = vmatpush1.msra.mxu0 0.0
    %2149 = vmatprep.subr.mxu0 0.0
    %2150 = vmatpush1.msra.mxu0 0.0
    %2151 = vmatprep.subr.mxu0 0.0
    %2152 = vmatpush1.msra.mxu0 0.0
    %2153 = vmatprep.subr.mxu0 0.0
    %2154 = vmatpush1.msra.mxu0 0.0
    %2155 = vmatprep.subr.mxu0 0.0
    %2156 = vmatpush1.msra.mxu0 0.0
    %2157 = vmatprep.subr.mxu0 0.0
    %2158 = vmatpush1.msra.mxu0 0.0
    %2159 = vmatprep.subr.mxu0 0.0
    %2160 = vmatpush1.msra.mxu0 0.0
    %2161 = vmatprep.subr.mxu0 0.0
    %2162 = vmatpush1.msra.mxu0 0.0
    %2163 = vmatprep.subr.mxu0 0.0
    %2164 = vmatpush1.msra.mxu0 0.0
    %2165 = vmatprep.subr.mxu0 0.0
    %2166 = vmatpush1.msra.mxu0 0.0
    %2167 = vmatprep.subr.mxu0 0.0
    %2168 = vmatpush1.msra.mxu0 0.0
    %2169 = vmatprep.subr.mxu0 0.0
    %2170 = vmatpush1.msra.mxu0 0.0
    %2171 = vmatprep.subr.mxu0 0.0
    %2172 = vmatpush1.msra.mxu0 0.0
    %2173 = vmatprep.mubr.f32.mxu0 0.0
    %2174 = vmatmul.mubr.f32.gmra.mrb[0].mxu0 %v2107
    %v2175 = vpop.f32.mrb[0].mxu0
    %v2176 = vadd.f32 0.0, %v2175
    %v2177 = vpop.f32.mrb[0].mxu0
    %2178 = vdwg.mxu0
    %v2179 = vadd.f32 %v2103, %v2176
    %s2180 = scalar_lea.vmem %s6, 48
    %v2181 = vld [vmem:[%s2180] sm:$0xff]
    %v2183 = vsel %vm296, %v1719, 0
    %2185 = vmatprep.subr.mxu0 0.0
    %2186 = vmatpush1.msra.mxu0 %v2181
    %2187 = vmatprep.subr.mxu0 0.0
    %2188 = vmatpush1.msra.mxu0 0.0
    %2189 = vmatprep.subr.mxu0 0.0
    %2190 = vmatpush1.msra.mxu0 0.0
    %2191 = vmatprep.subr.mxu0 0.0
    %2192 = vmatpush1.msra.mxu0 0.0
    %2193 = vmatprep.subr.mxu0 0.0
    %2194 = vmatpush1.msra.mxu0 0.0
    %2195 = vmatprep.subr.mxu0 0.0
    %2196 = vmatpush1.msra.mxu0 0.0
    %2197 = vmatprep.subr.mxu0 0.0
    %2198 = vmatpush1.msra.mxu0 0.0
    %2199 = vmatprep.subr.mxu0 0.0
    %2200 = vmatpush1.msra.mxu0 0.0
    %2201 = vmatprep.subr.mxu0 0.0
    %2202 = vmatpush1.msra.mxu0 0.0
    %2203 = vmatprep.subr.mxu0 0.0
    %2204 = vmatpush1.msra.mxu0 0.0
    %2205 = vmatprep.subr.mxu0 0.0
    %2206 = vmatpush1.msra.mxu0 0.0
    %2207 = vmatprep.subr.mxu0 0.0
    %2208 = vmatpush1.msra.mxu0 0.0
    %2209 = vmatprep.subr.mxu0 0.0
    %2210 = vmatpush1.msra.mxu0 0.0
    %2211 = vmatprep.subr.mxu0 0.0
    %2212 = vmatpush1.msra.mxu0 0.0
    %2213 = vmatprep.subr.mxu0 0.0
    %2214 = vmatpush1.msra.mxu0 0.0
    %2215 = vmatprep.subr.mxu0 0.0
    %2216 = vmatpush1.msra.mxu0 0.0
    %2217 = vmatprep.subr.mxu0 0.0
    %2218 = vmatpush1.msra.mxu0 0.0
    %2219 = vmatprep.subr.mxu0 0.0
    %2220 = vmatpush1.msra.mxu0 0.0
    %2221 = vmatprep.subr.mxu0 0.0
    %2222 = vmatpush1.msra.mxu0 0.0
    %2223 = vmatprep.subr.mxu0 0.0
    %2224 = vmatpush1.msra.mxu0 0.0
    %2225 = vmatprep.subr.mxu0 0.0
    %2226 = vmatpush1.msra.mxu0 0.0
    %2227 = vmatprep.subr.mxu0 0.0
    %2228 = vmatpush1.msra.mxu0 0.0
    %2229 = vmatprep.subr.mxu0 0.0
    %2230 = vmatpush1.msra.mxu0 0.0
    %2231 = vmatprep.subr.mxu0 0.0
    %2232 = vmatpush1.msra.mxu0 0.0
    %2233 = vmatprep.subr.mxu0 0.0
    %2234 = vmatpush1.msra.mxu0 0.0
    %2235 = vmatprep.subr.mxu0 0.0
    %2236 = vmatpush1.msra.mxu0 0.0
    %2237 = vmatprep.subr.mxu0 0.0
    %2238 = vmatpush1.msra.mxu0 0.0
    %2239 = vmatprep.subr.mxu0 0.0
    %2240 = vmatpush1.msra.mxu0 0.0
    %2241 = vmatprep.subr.mxu0 0.0
    %2242 = vmatpush1.msra.mxu0 0.0
    %2243 = vmatprep.subr.mxu0 0.0
    %2244 = vmatpush1.msra.mxu0 0.0
    %2245 = vmatprep.subr.mxu0 0.0
    %2246 = vmatpush1.msra.mxu0 0.0
    %2247 = vmatprep.subr.mxu0 0.0
    %2248 = vmatpush1.msra.mxu0 0.0
    %2249 = vmatprep.mubr.f32.mxu0 0.0
    %2250 = vmatmul.mubr.f32.gmra.mrb[0].mxu0 %v2183
    %v2251 = vpop.f32.mrb[0].mxu0
    %v2252 = vadd.f32 0.0, %v2251
    %v2253 = vpop.f32.mrb[0].mxu0
    %2254 = vdwg.mxu0
    %v2255 = vadd.f32 %v2179, %v2252
    %s2256 = scalar_lea.vmem %s6, 56
    %v2257 = vld [vmem:[%s2256] sm:$0xff]
    %v2259 = vsel %vm296, %v1724, 0
    %2261 = vmatprep.subr.mxu0 0.0
    %2262 = vmatpush1.msra.mxu0 %v2257
    %2263 = vmatprep.subr.mxu0 0.0
    %2264 = vmatpush1.msra.mxu0 0.0
    %2265 = vmatprep.subr.mxu0 0.0
    %2266 = vmatpush1.msra.mxu0 0.0
    %2267 = vmatprep.subr.mxu0 0.0
    %2268 = vmatpush1.msra.mxu0 0.0
    %2269 = vmatprep.subr.mxu0 0.0
    %2270 = vmatpush1.msra.mxu0 0.0
    %2271 = vmatprep.subr.mxu0 0.0
    %2272 = vmatpush1.msra.mxu0 0.0
    %2273 = vmatprep.subr.mxu0 0.0
    %2274 = vmatpush1.msra.mxu0 0.0
    %2275 = vmatprep.subr.mxu0 0.0
    %2276 = vmatpush1.msra.mxu0 0.0
    %2277 = vmatprep.subr.mxu0 0.0
    %2278 = vmatpush1.msra.mxu0 0.0
    %2279 = vmatprep.subr.mxu0 0.0
    %2280 = vmatpush1.msra.mxu0 0.0
    %2281 = vmatprep.subr.mxu0 0.0
    %2282 = vmatpush1.msra.mxu0 0.0
    %2283 = vmatprep.subr.mxu0 0.0
    %2284 = vmatpush1.msra.mxu0 0.0
    %2285 = vmatprep.subr.mxu0 0.0
    %2286 = vmatpush1.msra.mxu0 0.0
    %2287 = vmatprep.subr.mxu0 0.0
    %2288 = vmatpush1.msra.mxu0 0.0
    %2289 = vmatprep.subr.mxu0 0.0
    %2290 = vmatpush1.msra.mxu0 0.0
    %2291 = vmatprep.subr.mxu0 0.0
    %2292 = vmatpush1.msra.mxu0 0.0
    %2293 = vmatprep.subr.mxu0 0.0
    %2294 = vmatpush1.msra.mxu0 0.0
    %2295 = vmatprep.subr.mxu0 0.0
    %2296 = vmatpush1.msra.mxu0 0.0
    %2297 = vmatprep.subr.mxu0 0.0
    %2298 = vmatpush1.msra.mxu0 0.0
    %2299 = vmatprep.subr.mxu0 0.0
    %2300 = vmatpush1.msra.mxu0 0.0
    %2301 = vmatprep.subr.mxu0 0.0
    %2302 = vmatpush1.msra.mxu0 0.0
    %2303 = vmatprep.subr.mxu0 0.0
    %2304 = vmatpush1.msra.mxu0 0.0
    %2305 = vmatprep.subr.mxu0 0.0
    %2306 = vmatpush1.msra.mxu0 0.0
    %2307 = vmatprep.subr.mxu0 0.0
    %2308 = vmatpush1.msra.mxu0 0.0
    %2309 = vmatprep.subr.mxu0 0.0
    %2310 = vmatpush1.msra.mxu0 0.0
    %2311 = vmatprep.subr.mxu0 0.0
    %2312 = vmatpush1.msra.mxu0 0.0
    %2313 = vmatprep.subr.mxu0 0.0
    %2314 = vmatpush1.msra.mxu0 0.0
    %2315 = vmatprep.subr.mxu0 0.0
    %2316 = vmatpush1.msra.mxu0 0.0
    %2317 = vmatprep.subr.mxu0 0.0
    %2318 = vmatpush1.msra.mxu0 0.0
    %2319 = vmatprep.subr.mxu0 0.0
    %2320 = vmatpush1.msra.mxu0 0.0
    %2321 = vmatprep.subr.mxu0 0.0
    %2322 = vmatpush1.msra.mxu0 0.0
    %2323 = vmatprep.subr.mxu0 0.0
    %2324 = vmatpush1.msra.mxu0 0.0
    %2325 = vmatprep.mubr.f32.mxu0 0.0
    %2326 = vmatmul.mubr.f32.gmra.mrb[0].mxu0 %v2259
    %v2327 = vpop.f32.mrb[0].mxu0
    %v2328 = vadd.f32 0.0, %v2327
    %v2329 = vpop.f32.mrb[0].mxu0
    %2330 = vdwg.mxu0
    %v2331 = vadd.f32 %v2255, %v2328
    %v2332 = vld [vmem:[#allocation7] sm:$0x1]
    %v2334 = vlaneseq
    %v2335 = vshrl.u32 %v2334, 7
    %v2336 = vsub.s32 0, %v2335
    %v2337 = vrot.slane %v2332, %v2336
    %v2339 = vadd.f32 %v2331, %v2337
    %2340 = vst [vmem:[#allocation2] sm:$0xff] %v2339
    %v2341 = vld [vmem:[#allocation2] sm:$0x3]
    %v2342 = vld [vmem:[%s8] sm:$0xff]
    %v2343 = vld [vmem:[%s8 + $0x8] sm:$0xff]
    %v2344 = vld [vmem:[%s8 + $0x10] sm:$0xff]
    %v2345 = vld [vmem:[%s8 + $0x18] sm:$0xff]
    %vm2346 = vcmask 261120
    %v2348 = vsel %vm2346, 0.0, 0
    %2350 = vmatprep.subr.mxu0 0.0
    %2351 = vmatpush1.msra.mxu0 %v2342
    %2352 = vmatprep.subr.mxu0 0.0
    %2353 = vmatpush1.msra.mxu0 %v2343
    %2354 = vmatprep.subr.mxu0 0.0
    %2355 = vmatpush1.msra.mxu0 %v2344
    %2356 = vmatprep.subr.mxu0 0.0
    %2357 = vmatpush1.msra.mxu0 %v2345
    %2358 = vmatprep.subr.mxu0 0.0
    %2359 = vmatpush1.msra.mxu0 0.0
    %2360 = vmatprep.subr.mxu0 0.0
    %2361 = vmatpush1.msra.mxu0 0.0
    %2362 = vmatprep.subr.mxu0 0.0
    %2363 = vmatpush1.msra.mxu0 0.0
    %2364 = vmatprep.subr.mxu0 0.0
    %2365 = vmatpush1.msra.mxu0 0.0
    %2366 = vmatprep.subr.mxu0 0.0
    %2367 = vmatpush1.msra.mxu0 0.0
    %2368 = vmatprep.subr.mxu0 0.0
    %2369 = vmatpush1.msra.mxu0 0.0
    %2370 = vmatprep.subr.mxu0 0.0
    %2371 = vmatpush1.msra.mxu0 0.0
    %2372 = vmatprep.subr.mxu0 0.0
    %2373 = vmatpush1.msra.mxu0 0.0
    %2374 = vmatprep.subr.mxu0 0.0
    %2375 = vmatpush1.msra.mxu0 0.0
    %2376 = vmatprep.subr.mxu0 0.0
    %2377 = vmatpush1.msra.mxu0 0.0
    %2378 = vmatprep.subr.mxu0 0.0
    %2379 = vmatpush1.msra.mxu0 0.0
    %2380 = vmatprep.subr.mxu0 0.0
    %2381 = vmatpush1.msra.mxu0 0.0
    %2382 = vmatprep.subr.mxu0 0.0
    %2383 = vmatpush1.msra.mxu0 0.0
    %2384 = vmatprep.subr.mxu0 0.0
    %2385 = vmatpush1.msra.mxu0 0.0
    %2386 = vmatprep.subr.mxu0 0.0
    %2387 = vmatpush1.msra.mxu0 0.0
    %2388 = vmatprep.subr.mxu0 0.0
    %2389 = vmatpush1.msra.mxu0 0.0
    %2390 = vmatprep.subr.mxu0 0.0
    %2391 = vmatpush1.msra.mxu0 0.0
    %2392 = vmatprep.subr.mxu0 0.0
    %2393 = vmatpush1.msra.mxu0 0.0
    %2394 = vmatprep.subr.mxu0 0.0
    %2395 = vmatpush1.msra.mxu0 0.0
    %2396 = vmatprep.subr.mxu0 0.0
    %2397 = vmatpush1.msra.mxu0 0.0
    %2398 = vmatprep.subr.mxu0 0.0
    %2399 = vmatpush1.msra.mxu0 0.0
    %2400 = vmatprep.subr.mxu0 0.0
    %2401 = vmatpush1.msra.mxu0 0.0
    %2402 = vmatprep.subr.mxu0 0.0
    %2403 = vmatpush1.msra.mxu0 0.0
    %2404 = vmatprep.subr.mxu0 0.0
    %2405 = vmatpush1.msra.mxu0 0.0
    %2406 = vmatprep.subr.mxu0 0.0
    %2407 = vmatpush1.msra.mxu0 0.0
    %2408 = vmatprep.subr.mxu0 0.0
    %2409 = vmatpush1.msra.mxu0 0.0
    %2410 = vmatprep.subr.mxu0 0.0
    %2411 = vmatpush1.msra.mxu0 0.0
    %2412 = vmatprep.subr.mxu0 0.0
    %2413 = vmatpush1.msra.mxu0 0.0
    %2414 = vmatprep.mubr.f32.mxu0 0.0
    %2415 = vmatmul.mubr.f32.gmra.mrb[0].mxu0 %v2348
    %v2416 = vpop.f32.mrb[0].mxu0
    %v2417 = vadd.f32 0.0, %v2416
    %v2418 = vpop.f32.mrb[0].mxu0
    %2419 = vdwg.mxu0
    %v2420 = vadd.f32 %v2341, %v2417
    %v2421 = vxor.u32 %v2420, 2147483648
    %v2422 = vmul.f32 %v2421, 1.442695
    %v2423 = vpow.pop %v2422
    %v2424 = vadd.f32 %v2423, 1.0
    %v2425 = vrcp.pop %v2424
    %v2426 = vmul.f32 1.0, %v2425
    %v2427 = vtanh.pop %v2420
    %v2428 = vmul.f32 %v2426, 0.0
    %2430 = vrot.lane.b32.xlu0 %v2427, 32
    %v2431 = vpop.permute.xlu0 %2430
    %v2433 = vmul.f32 %v2426, %v2431
    %2435 = vrot.lane.b32.xlu0 %v2433, 32
    %v2436 = vpop.permute.xlu0 %2435
    %v2438 = vadd.f32 %v2428, %v2436
    %v2439 = vtanh.pop %v2438
    %2441 = vrot.lane.b32.xlu0 %v2439, 32
    %v2442 = vpop.permute.xlu0 %2441
    %v2444 = vmul.f32 %v2426, %v2442
    %2446 = vrot.lane.b32.xlu0 %v2444, 64
    %v2447 = vpop.permute.xlu0 %2446
    %v2449 = vsel %vm2346, %v2447, 0.0
    %v2450 = vld [vmem:[%s9] sm:$0xff]
    %v2451 = vld [vmem:[%s9 + $0x8] sm:$0xff]
    %v2452 = vld [vmem:[%s9 + $0x10] sm:$0xff]
    %v2453 = vld [vmem:[%s9 + $0x18] sm:$0xff]
    %v2454 = vld [vmem:[%s9 + $0x20] sm:$0xff]
    %v2455 = vld [vmem:[%s9 + $0x28] sm:$0xff]
    %v2456 = vld [vmem:[%s9 + $0x30] sm:$0xff]
    %v2457 = vld [vmem:[%s9 + $0x38] sm:$0xff]
    %v2458 = vld [vmem:[#allocation8] sm:$0x1]
    %v2460 = vlaneseq
    %v2461 = vshrl.u32 %v2460, 7
    %v2462 = vsub.s32 0, %v2461
    %v2463 = vrot.slane %v2458, %v2462
    %v2466 = vsel %vm1597, %v2449, 0
    %2468 = vmatprep.subr.mxu0 0.0
    %2469 = vmatpush1.msra.mxu0 %v2450
    %2470 = vmatprep.subr.mxu0 0.0
    %2471 = vmatpush1.msra.mxu0 %v2451
    %2472 = vmatprep.subr.mxu0 0.0
    %2473 = vmatpush1.msra.mxu0 %v2452
    %2474 = vmatprep.subr.mxu0 0.0
    %2475 = vmatpush1.msra.mxu0 %v2453
    %2476 = vmatprep.subr.mxu0 0.0
    %2477 = vmatpush1.msra.mxu0 %v2454
    %2478 = vmatprep.subr.mxu0 0.0
    %2479 = vmatpush1.msra.mxu0 %v2455
    %2480 = vmatprep.subr.mxu0 0.0
    %2481 = vmatpush1.msra.mxu0 %v2456
    %2482 = vmatprep.subr.mxu0 0.0
    %2483 = vmatpush1.msra.mxu0 %v2457
    %2484 = vmatprep.subr.mxu0 0.0
    %2485 = vmatpush1.msra.mxu0 0.0
    %2486 = vmatprep.subr.mxu0 0.0
    %2487 = vmatpush1.msra.mxu0 0.0
    %2488 = vmatprep.subr.mxu0 0.0
    %2489 = vmatpush1.msra.mxu0 0.0
    %2490 = vmatprep.subr.mxu0 0.0
    %2491 = vmatpush1.msra.mxu0 0.0
    %2492 = vmatprep.subr.mxu0 0.0
    %2493 = vmatpush1.msra.mxu0 0.0
    %2494 = vmatprep.subr.mxu0 0.0
    %2495 = vmatpush1.msra.mxu0 0.0
    %2496 = vmatprep.subr.mxu0 0.0
    %2497 = vmatpush1.msra.mxu0 0.0
    %2498 = vmatprep.subr.mxu0 0.0
    %2499 = vmatpush1.msra.mxu0 0.0
    %2500 = vmatprep.subr.mxu0 0.0
    %2501 = vmatpush1.msra.mxu0 0.0
    %2502 = vmatprep.subr.mxu0 0.0
    %2503 = vmatpush1.msra.mxu0 0.0
    %2504 = vmatprep.subr.mxu0 0.0
    %2505 = vmatpush1.msra.mxu0 0.0
    %2506 = vmatprep.subr.mxu0 0.0
    %2507 = vmatpush1.msra.mxu0 0.0
    %2508 = vmatprep.subr.mxu0 0.0
    %2509 = vmatpush1.msra.mxu0 0.0
    %2510 = vmatprep.subr.mxu0 0.0
    %2511 = vmatpush1.msra.mxu0 0.0
    %2512 = vmatprep.subr.mxu0 0.0
    %2513 = vmatpush1.msra.mxu0 0.0
    %2514 = vmatprep.subr.mxu0 0.0
    %2515 = vmatpush1.msra.mxu0 0.0
    %2516 = vmatprep.subr.mxu0 0.0
    %2517 = vmatpush1.msra.mxu0 0.0
    %2518 = vmatprep.subr.mxu0 0.0
    %2519 = vmatpush1.msra.mxu0 0.0
    %2520 = vmatprep.subr.mxu0 0.0
    %2521 = vmatpush1.msra.mxu0 0.0
    %2522 = vmatprep.subr.mxu0 0.0
    %2523 = vmatpush1.msra.mxu0 0.0
    %2524 = vmatprep.subr.mxu0 0.0
    %2525 = vmatpush1.msra.mxu0 0.0
    %2526 = vmatprep.subr.mxu0 0.0
    %2527 = vmatpush1.msra.mxu0 0.0
    %2528 = vmatprep.subr.mxu0 0.0
    %2529 = vmatpush1.msra.mxu0 0.0
    %2530 = vmatprep.subr.mxu0 0.0
    %2531 = vmatpush1.msra.mxu0 0.0
    %2532 = vmatprep.mubr.f32.mxu0 0.0
    %2533 = vmatmul.mubr.f32.gmra.mrb[0].mxu0 %v2466
    %v2534 = vpop.f32.mrb[0].mxu0
    %v2535 = vadd.f32 %v2463, %v2534
    %v2536 = vpop.f32.mrb[0].mxu0
    %2537 = vdwg.mxu0
    %v2538 = vxor.u32 %v2535, 2147483648
    %v2539 = vmul.f32 %v2538, 1.442695
    %v2540 = vpow.pop %v2539
    %v2541 = vadd.f32 %v2540, 1.0
    %v2542 = vrcp.pop %v2541
    %v2543 = vmul.f32 1.0, %v2542
    %v2544 = vtanh.pop %v2535
    %v2545 = vmul.f32 %v2543, 0.0
    %2547 = vrot.lane.b32.xlu0 %v2544, 32
    %v2548 = vpop.permute.xlu0 %2547
    %v2550 = vmul.f32 %v2543, %v2548
    %2552 = vrot.lane.b32.xlu0 %v2550, 32
    %v2553 = vpop.permute.xlu0 %2552
    %v2555 = vadd.f32 %v2545, %v2553
    %v2556 = vtanh.pop %v2555
    %2558 = vrot.lane.b32.xlu0 %v2556, 32
    %v2559 = vpop.permute.xlu0 %2558
    %v2561 = vmul.f32 %v2543, %v2559
    %v2562 = vld [vmem:[%s11] sm:$0xff]
    %v2563 = vld [vmem:[%s11 + $0x8] sm:$0xff]
    %v2564 = vld [vmem:[%s11 + $0x10] sm:$0xff]
    %v2565 = vld [vmem:[%s11 + $0x18] sm:$0xff]
    %2567 = vrot.lane.b32.xlu0 %v2561, 64
    %v2568 = vpop.permute.xlu0 %2567
    %v2569 = vsel %vm2346, %v2568, 0
    %2571 = vmatprep.subr.mxu0 0.0
    %2572 = vmatpush1.msra.mxu0 %v2562
    %2573 = vmatprep.subr.mxu0 0.0
    %2574 = vmatpush1.msra.mxu0 %v2563
    %2575 = vmatprep.subr.mxu0 0.0
    %2576 = vmatpush1.msra.mxu0 %v2564
    %2577 = vmatprep.subr.mxu0 0.0
    %2578 = vmatpush1.msra.mxu0 %v2565
    %2579 = vmatprep.subr.mxu0 0.0
    %2580 = vmatpush1.msra.mxu0 0.0
    %2581 = vmatprep.subr.mxu0 0.0
    %2582 = vmatpush1.msra.mxu0 0.0
    %2583 = vmatprep.subr.mxu0 0.0
    %2584 = vmatpush1.msra.mxu0 0.0
    %2585 = vmatprep.subr.mxu0 0.0
    %2586 = vmatpush1.msra.mxu0 0.0
    %2587 = vmatprep.subr.mxu0 0.0
    %2588 = vmatpush1.msra.mxu0 0.0
    %2589 = vmatprep.subr.mxu0 0.0
    %2590 = vmatpush1.msra.mxu0 0.0
    %2591 = vmatprep.subr.mxu0 0.0
    %2592 = vmatpush1.msra.mxu0 0.0
    %2593 = vmatprep.subr.mxu0 0.0
    %2594 = vmatpush1.msra.mxu0 0.0
    %2595 = vmatprep.subr.mxu0 0.0
    %2596 = vmatpush1.msra.mxu0 0.0
    %2597 = vmatprep.subr.mxu0 0.0
    %2598 = vmatpush1.msra.mxu0 0.0
    %2599 = vmatprep.subr.mxu0 0.0
    %2600 = vmatpush1.msra.mxu0 0.0
    %2601 = vmatprep.subr.mxu0 0.0
    %2602 = vmatpush1.msra.mxu0 0.0
    %2603 = vmatprep.subr.mxu0 0.0
    %2604 = vmatpush1.msra.mxu0 0.0
    %2605 = vmatprep.subr.mxu0 0.0
    %2606 = vmatpush1.msra.mxu0 0.0
    %2607 = vmatprep.subr.mxu0 0.0
    %2608 = vmatpush1.msra.mxu0 0.0
    %2609 = vmatprep.subr.mxu0 0.0
    %2610 = vmatpush1.msra.mxu0 0.0
    %2611 = vmatprep.subr.mxu0 0.0
    %2612 = vmatpush1.msra.mxu0 0.0
    %2613 = vmatprep.subr.mxu0 0.0
    %2614 = vmatpush1.msra.mxu0 0.0
    %2615 = vmatprep.subr.mxu0 0.0
    %2616 = vmatpush1.msra.mxu0 0.0
    %2617 = vmatprep.subr.mxu0 0.0
    %2618 = vmatpush1.msra.mxu0 0.0
    %2619 = vmatprep.subr.mxu0 0.0
    %2620 = vmatpush1.msra.mxu0 0.0
    %2621 = vmatprep.subr.mxu0 0.0
    %2622 = vmatpush1.msra.mxu0 0.0
    %2623 = vmatprep.subr.mxu0 0.0
    %2624 = vmatpush1.msra.mxu0 0.0
    %2625 = vmatprep.subr.mxu0 0.0
    %2626 = vmatpush1.msra.mxu0 0.0
    %2627 = vmatprep.subr.mxu0 0.0
    %2628 = vmatpush1.msra.mxu0 0.0
    %2629 = vmatprep.subr.mxu0 0.0
    %2630 = vmatpush1.msra.mxu0 0.0
    %2631 = vmatprep.subr.mxu0 0.0
    %2632 = vmatpush1.msra.mxu0 0.0
    %2633 = vmatprep.subr.mxu0 0.0
    %2634 = vmatpush1.msra.mxu0 0.0
    %2635 = vmatprep.mubr.f32.mxu0 0.0
    %2636 = vmatmul.mubr.f32.gmra.mrb[0].mxu0 %v2569
    %v2637 = vpop.f32.mrb[0].mxu0
    %v2638 = vadd.f32 0.0, %v2637
    %v2639 = vpop.f32.mrb[0].mxu0
    %2640 = vdwg.mxu0
    %v2641 = vtanh.pop %v2638
    %v2642 = vmul.f32 %v2641, 1.442695
    %v2643 = vpow.pop %v2642
    %v2644 = vld [vmem:[#allocation2 + $0x2] sm:$0x3]
    %v2645 = vsel %vm2346, %v2447, 0
    %2647 = vmatprep.subr.mxu0 0.0
    %2648 = vmatpush1.msra.mxu0 %v2342
    %2649 = vmatprep.subr.mxu0 0.0
    %2650 = vmatpush1.msra.mxu0 %v2343
    %2651 = vmatprep.subr.mxu0 0.0
    %2652 = vmatpush1.msra.mxu0 %v2344
    %2653 = vmatprep.subr.mxu0 0.0
    %2654 = vmatpush1.msra.mxu0 %v2345
    %2655 = vmatprep.subr.mxu0 0.0
    %2656 = vmatpush1.msra.mxu0 0.0
    %2657 = vmatprep.subr.mxu0 0.0
    %2658 = vmatpush1.msra.mxu0 0.0
    %2659 = vmatprep.subr.mxu0 0.0
    %2660 = vmatpush1.msra.mxu0 0.0
    %2661 = vmatprep.subr.mxu0 0.0
    %2662 = vmatpush1.msra.mxu0 0.0
    %2663 = vmatprep.subr.mxu0 0.0
    %2664 = vmatpush1.msra.mxu0 0.0
    %2665 = vmatprep.subr.mxu0 0.0
    %2666 = vmatpush1.msra.mxu0 0.0
    %2667 = vmatprep.subr.mxu0 0.0
    %2668 = vmatpush1.msra.mxu0 0.0
    %2669 = vmatprep.subr.mxu0 0.0
    %2670 = vmatpush1.msra.mxu0 0.0
    %2671 = vmatprep.subr.mxu0 0.0
    %2672 = vmatpush1.msra.mxu0 0.0
    %2673 = vmatprep.subr.mxu0 0.0
    %2674 = vmatpush1.msra.mxu0 0.0
    %2675 = vmatprep.subr.mxu0 0.0
    %2676 = vmatpush1.msra.mxu0 0.0
    %2677 = vmatprep.subr.mxu0 0.0
    %2678 = vmatpush1.msra.mxu0 0.0
    %2679 = vmatprep.subr.mxu0 0.0
    %2680 = vmatpush1.msra.mxu0 0.0
    %2681 = vmatprep.subr.mxu0 0.0
    %2682 = vmatpush1.msra.mxu0 0.0
    %2683 = vmatprep.subr.mxu0 0.0
    %2684 = vmatpush1.msra.mxu0 0.0
    %2685 = vmatprep.subr.mxu0 0.0
    %2686 = vmatpush1.msra.mxu0 0.0
    %2687 = vmatprep.subr.mxu0 0.0
    %2688 = vmatpush1.msra.mxu0 0.0
    %2689 = vmatprep.subr.mxu0 0.0
    %2690 = vmatpush1.msra.mxu0 0.0
    %2691 = vmatprep.subr.mxu0 0.0
    %2692 = vmatpush1.msra.mxu0 0.0
    %2693 = vmatprep.subr.mxu0 0.0
    %2694 = vmatpush1.msra.mxu0 0.0
    %2695 = vmatprep.subr.mxu0 0.0
    %2696 = vmatpush1.msra.mxu0 0.0
    %2697 = vmatprep.subr.mxu0 0.0
    %2698 = vmatpush1.msra.mxu0 0.0
    %2699 = vmatprep.subr.mxu0 0.0
    %2700 = vmatpush1.msra.mxu0 0.0
    %2701 = vmatprep.subr.mxu0 0.0
    %2702 = vmatpush1.msra.mxu0 0.0
    %2703 = vmatprep.subr.mxu0 0.0
    %2704 = vmatpush1.msra.mxu0 0.0
    %2705 = vmatprep.subr.mxu0 0.0
    %2706 = vmatpush1.msra.mxu0 0.0
    %2707 = vmatprep.subr.mxu0 0.0
    %2708 = vmatpush1.msra.mxu0 0.0
    %2709 = vmatprep.subr.mxu0 0.0
    %2710 = vmatpush1.msra.mxu0 0.0
    %2711 = vmatprep.mubr.f32.mxu0 0.0
    %2712 = vmatmul.mubr.f32.gmra.mrb[0].mxu0 %v2645
    %v2713 = vpop.f32.mrb[0].mxu0
    %v2714 = vadd.f32 0.0, %v2713
    %v2715 = vpop.f32.mrb[0].mxu0
    %2716 = vdwg.mxu0
    %v2717 = vadd.f32 %v2644, %v2714
    %v2718 = vxor.u32 %v2717, 2147483648
    %v2719 = vmul.f32 %v2718, 1.442695
    %v2720 = vpow.pop %v2719
    %v2721 = vadd.f32 %v2720, 1.0
    %v2722 = vrcp.pop %v2721
    %v2723 = vmul.f32 1.0, %v2722
    %v2724 = vtanh.pop %v2717
    %v2725 = vmul.f32 %v2723, %v2438
    %2727 = vrot.lane.b32.xlu0 %v2724, 32
    %v2728 = vpop.permute.xlu0 %2727
    %v2730 = vmul.f32 %v2723, %v2728
    %2732 = vrot.lane.b32.xlu0 %v2730, 32
    %v2733 = vpop.permute.xlu0 %2732
    %v2735 = vadd.f32 %v2725, %v2733
    %v2736 = vtanh.pop %v2735
    %2738 = vrot.lane.b32.xlu0 %v2736, 32
    %v2739 = vpop.permute.xlu0 %2738
    %v2741 = vmul.f32 %v2723, %v2739
    %2743 = vrot.lane.b32.xlu0 %v2741, 64
    %v2744 = vpop.permute.xlu0 %2743
    %2746 = vrot.lane.b32.xlu0 %v2561, 96
    %v2747 = vpop.permute.xlu0 %2746
    %v2749 = vsel %vm2346, %v2744, %v2747
    %v2751 = vsel %vm1597, %v2749, 0
    %2753 = vmatprep.subr.mxu0 0.0
    %2754 = vmatpush1.msra.mxu0 %v2450
    %2755 = vmatprep.subr.mxu0 0.0
    %2756 = vmatpush1.msra.mxu0 %v2451
    %2757 = vmatprep.subr.mxu0 0.0
    %2758 = vmatpush1.msra.mxu0 %v2452
    %2759 = vmatprep.subr.mxu0 0.0
    %2760 = vmatpush1.msra.mxu0 %v2453
    %2761 = vmatprep.subr.mxu0 0.0
    %2762 = vmatpush1.msra.mxu0 %v2454
    %2763 = vmatprep.subr.mxu0 0.0
    %2764 = vmatpush1.msra.mxu0 %v2455
    %2765 = vmatprep.subr.mxu0 0.0
    %2766 = vmatpush1.msra.mxu0 %v2456
    %2767 = vmatprep.subr.mxu0 0.0
    %2768 = vmatpush1.msra.mxu0 %v2457
    %2769 = vmatprep.subr.mxu0 0.0
    %2770 = vmatpush1.msra.mxu0 0.0
    %2771 = vmatprep.subr.mxu0 0.0
    %2772 = vmatpush1.msra.mxu0 0.0
    %2773 = vmatprep.subr.mxu0 0.0
    %2774 = vmatpush1.msra.mxu0 0.0
    %2775 = vmatprep.subr.mxu0 0.0
    %2776 = vmatpush1.msra.mxu0 0.0
    %2777 = vmatprep.subr.mxu0 0.0
    %2778 = vmatpush1.msra.mxu0 0.0
    %2779 = vmatprep.subr.mxu0 0.0
    %2780 = vmatpush1.msra.mxu0 0.0
    %2781 = vmatprep.subr.mxu0 0.0
    %2782 = vmatpush1.msra.mxu0 0.0
    %2783 = vmatprep.subr.mxu0 0.0
    %2784 = vmatpush1.msra.mxu0 0.0
    %2785 = vmatprep.subr.mxu0 0.0
    %2786 = vmatpush1.msra.mxu0 0.0
    %2787 = vmatprep.subr.mxu0 0.0
    %2788 = vmatpush1.msra.mxu0 0.0
    %2789 = vmatprep.subr.mxu0 0.0
    %2790 = vmatpush1.msra.mxu0 0.0
    %2791 = vmatprep.subr.mxu0 0.0
    %2792 = vmatpush1.msra.mxu0 0.0
    %2793 = vmatprep.subr.mxu0 0.0
    %2794 = vmatpush1.msra.mxu0 0.0
    %2795 = vmatprep.subr.mxu0 0.0
    %2796 = vmatpush1.msra.mxu0 0.0
    %2797 = vmatprep.subr.mxu0 0.0
    %2798 = vmatpush1.msra.mxu0 0.0
    %2799 = vmatprep.subr.mxu0 0.0
    %2800 = vmatpush1.msra.mxu0 0.0
    %2801 = vmatprep.subr.mxu0 0.0
    %2802 = vmatpush1.msra.mxu0 0.0
    %2803 = vmatprep.subr.mxu0 0.0
    %2804 = vmatpush1.msra.mxu0 0.0
    %2805 = vmatprep.subr.mxu0 0.0
    %2806 = vmatpush1.msra.mxu0 0.0
    %2807 = vmatprep.subr.mxu0 0.0
    %2808 = vmatpush1.msra.mxu0 0.0
    %2809 = vmatprep.subr.mxu0 0.0
    %2810 = vmatpush1.msra.mxu0 0.0
    %2811 = vmatprep.subr.mxu0 0.0
    %2812 = vmatpush1.msra.mxu0 0.0
    %2813 = vmatprep.subr.mxu0 0.0
    %2814 = vmatpush1.msra.mxu0 0.0
    %2815 = vmatprep.subr.mxu0 0.0
    %2816 = vmatpush1.msra.mxu0 0.0
    %2817 = vmatprep.mubr.f32.mxu0 0.0
    %2818 = vmatmul.mubr.f32.gmra.mrb[0].mxu0 %v2751
    %v2819 = vpop.f32.mrb[0].mxu0
    %v2820 = vadd.f32 %v2463, %v2819
    %v2821 = vpop.f32.mrb[0].mxu0
    %2822 = vdwg.mxu0
    %v2823 = vxor.u32 %v2820, 2147483648
    %v2824 = vmul.f32 %v2823, 1.442695
    %v2825 = vpow.pop %v2824
    %v2826 = vadd.f32 %v2825, 1.0
    %v2827 = vrcp.pop %v2826
    %v2828 = vmul.f32 1.0, %v2827
    %v2829 = vtanh.pop %v2820
    %v2830 = vmul.f32 %v2828, %v2555
    %2832 = vrot.lane.b32.xlu0 %v2829, 32
    %v2833 = vpop.permute.xlu0 %2832
    %v2835 = vmul.f32 %v2828, %v2833
    %2837 = vrot.lane.b32.xlu0 %v2835, 32
    %v2838 = vpop.permute.xlu0 %2837
    %v2840 = vadd.f32 %v2830, %v2838
    %v2841 = vtanh.pop %v2840
    %2843 = vrot.lane.b32.xlu0 %v2841, 32
    %v2844 = vpop.permute.xlu0 %2843
    %v2846 = vmul.f32 %v2828, %v2844
    %2848 = vrot.lane.b32.xlu0 %v2846, 64
    %v2849 = vpop.permute.xlu0 %2848
    %v2850 = vsel %vm2346, %v2849, 0
    %2852 = vmatprep.subr.mxu0 0.0
    %2853 = vmatpush1.msra.mxu0 %v2562
    %2854 = vmatprep.subr.mxu0 0.0
    %2855 = vmatpush1.msra.mxu0 %v2563
    %2856 = vmatprep.subr.mxu0 0.0
    %2857 = vmatpush1.msra.mxu0 %v2564
    %2858 = vmatprep.subr.mxu0 0.0
    %2859 = vmatpush1.msra.mxu0 %v2565
    %2860 = vmatprep.subr.mxu0 0.0
    %2861 = vmatpush1.msra.mxu0 0.0
    %2862 = vmatprep.subr.mxu0 0.0
    %2863 = vmatpush1.msra.mxu0 0.0
    %2864 = vmatprep.subr.mxu0 0.0
    %2865 = vmatpush1.msra.mxu0 0.0
    %2866 = vmatprep.subr.mxu0 0.0
    %2867 = vmatpush1.msra.mxu0 0.0
    %2868 = vmatprep.subr.mxu0 0.0
    %2869 = vmatpush1.msra.mxu0 0.0
    %2870 = vmatprep.subr.mxu0 0.0
    %2871 = vmatpush1.msra.mxu0 0.0
    %2872 = vmatprep.subr.mxu0 0.0
    %2873 = vmatpush1.msra.mxu0 0.0
    %2874 = vmatprep.subr.mxu0 0.0
    %2875 = vmatpush1.msra.mxu0 0.0
    %2876 = vmatprep.subr.mxu0 0.0
    %2877 = vmatpush1.msra.mxu0 0.0
    %2878 = vmatprep.subr.mxu0 0.0
    %2879 = vmatpush1.msra.mxu0 0.0
    %2880 = vmatprep.subr.mxu0 0.0
    %2881 = vmatpush1.msra.mxu0 0.0
    %2882 = vmatprep.subr.mxu0 0.0
    %2883 = vmatpush1.msra.mxu0 0.0
    %2884 = vmatprep.subr.mxu0 0.0
    %2885 = vmatpush1.msra.mxu0 0.0
    %2886 = vmatprep.subr.mxu0 0.0
    %2887 = vmatpush1.msra.mxu0 0.0
    %2888 = vmatprep.subr.mxu0 0.0
    %2889 = vmatpush1.msra.mxu0 0.0
    %2890 = vmatprep.subr.mxu0 0.0
    %2891 = vmatpush1.msra.mxu0 0.0
    %2892 = vmatprep.subr.mxu0 0.0
    %2893 = vmatpush1.msra.mxu0 0.0
    %2894 = vmatprep.subr.mxu0 0.0
    %2895 = vmatpush1.msra.mxu0 0.0
    %2896 = vmatprep.subr.mxu0 0.0
    %2897 = vmatpush1.msra.mxu0 0.0
    %2898 = vmatprep.subr.mxu0 0.0
    %2899 = vmatpush1.msra.mxu0 0.0
    %2900 = vmatprep.subr.mxu0 0.0
    %2901 = vmatpush1.msra.mxu0 0.0
    %2902 = vmatprep.subr.mxu0 0.0
    %2903 = vmatpush1.msra.mxu0 0.0
    %2904 = vmatprep.subr.mxu0 0.0
    %2905 = vmatpush1.msra.mxu0 0.0
    %2906 = vmatprep.subr.mxu0 0.0
    %2907 = vmatpush1.msra.mxu0 0.0
    %2908 = vmatprep.subr.mxu0 0.0
    %2909 = vmatpush1.msra.mxu0 0.0
    %2910 = vmatprep.subr.mxu0 0.0
    %2911 = vmatpush1.msra.mxu0 0.0
    %2912 = vmatprep.subr.mxu0 0.0
    %2913 = vmatpush1.msra.mxu0 0.0
    %2914 = vmatprep.subr.mxu0 0.0
    %2915 = vmatpush1.msra.mxu0 0.0
    %2916 = vmatprep.mubr.f32.mxu0 0.0
    %2917 = vmatmul.mubr.f32.gmra.mrb[0].mxu0 %v2850
    %v2918 = vpop.f32.mrb[0].mxu0
    %v2919 = vadd.f32 0.0, %v2918
    %v2920 = vpop.f32.mrb[0].mxu0
    %2921 = vdwg.mxu0
    %v2922 = vtanh.pop %v2919
    %v2923 = vmul.f32 %v2922, 1.442695
    %v2924 = vpow.pop %v2923
    %v2925 = vld [vmem:[#allocation2 + $0x4] sm:$0x3]
    %v2926 = vsel %vm2346, %v2744, 0
    %2928 = vmatprep.subr.mxu0 0.0
    %2929 = vmatpush1.msra.mxu0 %v2342
    %2930 = vmatprep.subr.mxu0 0.0
    %2931 = vmatpush1.msra.mxu0 %v2343
    %2932 = vmatprep.subr.mxu0 0.0
    %2933 = vmatpush1.msra.mxu0 %v2344
    %2934 = vmatprep.subr.mxu0 0.0
    %2935 = vmatpush1.msra.mxu0 %v2345
    %2936 = vmatprep.subr.mxu0 0.0
    %2937 = vmatpush1.msra.mxu0 0.0
    %2938 = vmatprep.subr.mxu0 0.0
    %2939 = vmatpush1.msra.mxu0 0.0
    %2940 = vmatprep.subr.mxu0 0.0
    %2941 = vmatpush1.msra.mxu0 0.0
    %2942 = vmatprep.subr.mxu0 0.0
    %2943 = vmatpush1.msra.mxu0 0.0
    %2944 = vmatprep.subr.mxu0 0.0
    %2945 = vmatpush1.msra.mxu0 0.0
    %2946 = vmatprep.subr.mxu0 0.0
    %2947 = vmatpush1.msra.mxu0 0.0
    %2948 = vmatprep.subr.mxu0 0.0
    %2949 = vmatpush1.msra.mxu0 0.0
    %2950 = vmatprep.subr.mxu0 0.0
    %2951 = vmatpush1.msra.mxu0 0.0
    %2952 = vmatprep.subr.mxu0 0.0
    %2953 = vmatpush1.msra.mxu0 0.0
    %2954 = vmatprep.subr.mxu0 0.0
    %2955 = vmatpush1.msra.mxu0 0.0
    %2956 = vmatprep.subr.mxu0 0.0
    %2957 = vmatpush1.msra.mxu0 0.0
    %2958 = vmatprep.subr.mxu0 0.0
    %2959 = vmatpush1.msra.mxu0 0.0
    %2960 = vmatprep.subr.mxu0 0.0
    %2961 = vmatpush1.msra.mxu0 0.0
    %2962 = vmatprep.subr.mxu0 0.0
    %2963 = vmatpush1.msra.mxu0 0.0
    %2964 = vmatprep.subr.mxu0 0.0
    %2965 = vmatpush1.msra.mxu0 0.0
    %2966 = vmatprep.subr.mxu0 0.0
    %2967 = vmatpush1.msra.mxu0 0.0
    %2968 = vmatprep.subr.mxu0 0.0
    %2969 = vmatpush1.msra.mxu0 0.0
    %2970 = vmatprep.subr.mxu0 0.0
    %2971 = vmatpush1.msra.mxu0 0.0
    %2972 = vmatprep.subr.mxu0 0.0
    %2973 = vmatpush1.msra.mxu0 0.0
    %2974 = vmatprep.subr.mxu0 0.0
    %2975 = vmatpush1.msra.mxu0 0.0
    %2976 = vmatprep.subr.mxu0 0.0
    %2977 = vmatpush1.msra.mxu0 0.0
    %2978 = vmatprep.subr.mxu0 0.0
    %2979 = vmatpush1.msra.mxu0 0.0
    %2980 = vmatprep.subr.mxu0 0.0
    %2981 = vmatpush1.msra.mxu0 0.0
    %2982 = vmatprep.subr.mxu0 0.0
    %2983 = vmatpush1.msra.mxu0 0.0
    %2984 = vmatprep.subr.mxu0 0.0
    %2985 = vmatpush1.msra.mxu0 0.0
    %2986 = vmatprep.subr.mxu0 0.0
    %2987 = vmatpush1.msra.mxu0 0.0
    %2988 = vmatprep.subr.mxu0 0.0
    %2989 = vmatpush1.msra.mxu0 0.0
    %2990 = vmatprep.subr.mxu0 0.0
    %2991 = vmatpush1.msra.mxu0 0.0
    %2992 = vmatprep.mubr.f32.mxu0 0.0
    %2993 = vmatmul.mubr.f32.gmra.mrb[0].mxu0 %v2926
    %v2994 = vpop.f32.mrb[0].mxu0
    %v2995 = vadd.f32 0.0, %v2994
    %v2996 = vpop.f32.mrb[0].mxu0
    %2997 = vdwg.mxu0
    %v2998 = vadd.f32 %v2925, %v2995
    %v2999 = vxor.u32 %v2998, 2147483648
    %v3000 = vmul.f32 %v2999, 1.442695
    %v3001 = vpow.pop %v3000
    %v3002 = vadd.f32 %v3001, 1.0
    %v3003 = vrcp.pop %v3002
    %v3004 = vmul.f32 1.0, %v3003
    %v3005 = vtanh.pop %v2998
    %v3006 = vmul.f32 %v3004, %v2735
    %3008 = vrot.lane.b32.xlu0 %v3005, 32
    %v3009 = vpop.permute.xlu0 %3008
    %v3011 = vmul.f32 %v3004, %v3009
    %3013 = vrot.lane.b32.xlu0 %v3011, 32
    %v3014 = vpop.permute.xlu0 %3013
    %v3016 = vadd.f32 %v3006, %v3014
    %v3017 = vtanh.pop %v3016
    %3019 = vrot.lane.b32.xlu0 %v3017, 32
    %v3020 = vpop.permute.xlu0 %3019
    %v3022 = vmul.f32 %v3004, %v3020
    %3024 = vrot.lane.b32.xlu0 %v3022, 64
    %v3025 = vpop.permute.xlu0 %3024
    %3027 = vrot.lane.b32.xlu0 %v2846, 96
    %v3028 = vpop.permute.xlu0 %3027
    %v3030 = vsel %vm2346, %v3025, %v3028
    %v3032 = vsel %vm1597, %v3030, 0
    %3034 = vmatprep.subr.mxu0 0.0
    %3035 = vmatpush1.msra.mxu0 %v2450
    %3036 = vmatprep.subr.mxu0 0.0
    %3037 = vmatpush1.msra.mxu0 %v2451
    %3038 = vmatprep.subr.mxu0 0.0
    %3039 = vmatpush1.msra.mxu0 %v2452
    %3040 = vmatprep.subr.mxu0 0.0
    %3041 = vmatpush1.msra.mxu0 %v2453
    %3042 = vmatprep.subr.mxu0 0.0
    %3043 = vmatpush1.msra.mxu0 %v2454
    %3044 = vmatprep.subr.mxu0 0.0
    %3045 = vmatpush1.msra.mxu0 %v2455
    %3046 = vmatprep.subr.mxu0 0.0
    %3047 = vmatpush1.msra.mxu0 %v2456
    %3048 = vmatprep.subr.mxu0 0.0
    %3049 = vmatpush1.msra.mxu0 %v2457
    %3050 = vmatprep.subr.mxu0 0.0
    %3051 = vmatpush1.msra.mxu0 0.0
    %3052 = vmatprep.subr.mxu0 0.0
    %3053 = vmatpush1.msra.mxu0 0.0
    %3054 = vmatprep.subr.mxu0 0.0
    %3055 = vmatpush1.msra.mxu0 0.0
    %3056 = vmatprep.subr.mxu0 0.0
    %3057 = vmatpush1.msra.mxu0 0.0
    %3058 = vmatprep.subr.mxu0 0.0
    %3059 = vmatpush1.msra.mxu0 0.0
    %3060 = vmatprep.subr.mxu0 0.0
    %3061 = vmatpush1.msra.mxu0 0.0
    %3062 = vmatprep.subr.mxu0 0.0
    %3063 = vmatpush1.msra.mxu0 0.0
    %3064 = vmatprep.subr.mxu0 0.0
    %3065 = vmatpush1.msra.mxu0 0.0
    %3066 = vmatprep.subr.mxu0 0.0
    %3067 = vmatpush1.msra.mxu0 0.0
    %3068 = vmatprep.subr.mxu0 0.0
    %3069 = vmatpush1.msra.mxu0 0.0
    %3070 = vmatprep.subr.mxu0 0.0
    %3071 = vmatpush1.msra.mxu0 0.0
    %3072 = vmatprep.subr.mxu0 0.0
    %3073 = vmatpush1.msra.mxu0 0.0
    %3074 = vmatprep.subr.mxu0 0.0
    %3075 = vmatpush1.msra.mxu0 0.0
    %3076 = vmatprep.subr.mxu0 0.0
    %3077 = vmatpush1.msra.mxu0 0.0
    %3078 = vmatprep.subr.mxu0 0.0
    %3079 = vmatpush1.msra.mxu0 0.0
    %3080 = vmatprep.subr.mxu0 0.0
    %3081 = vmatpush1.msra.mxu0 0.0
    %3082 = vmatprep.subr.mxu0 0.0
    %3083 = vmatpush1.msra.mxu0 0.0
    %3084 = vmatprep.subr.mxu0 0.0
    %3085 = vmatpush1.msra.mxu0 0.0
    %3086 = vmatprep.subr.mxu0 0.0
    %3087 = vmatpush1.msra.mxu0 0.0
    %3088 = vmatprep.subr.mxu0 0.0
    %3089 = vmatpush1.msra.mxu0 0.0
    %3090 = vmatprep.subr.mxu0 0.0
    %3091 = vmatpush1.msra.mxu0 0.0
    %3092 = vmatprep.subr.mxu0 0.0
    %3093 = vmatpush1.msra.mxu0 0.0
    %3094 = vmatprep.subr.mxu0 0.0
    %3095 = vmatpush1.msra.mxu0 0.0
    %3096 = vmatprep.subr.mxu0 0.0
    %3097 = vmatpush1.msra.mxu0 0.0
    %3098 = vmatprep.mubr.f32.mxu0 0.0
    %3099 = vmatmul.mubr.f32.gmra.mrb[0].mxu0 %v3032
    %v3100 = vpop.f32.mrb[0].mxu0
    %v3101 = vadd.f32 %v2463, %v3100
    %v3102 = vpop.f32.mrb[0].mxu0
    %3103 = vdwg.mxu0
    %v3104 = vxor.u32 %v3101, 2147483648
    %v3105 = vmul.f32 %v3104, 1.442695
    %v3106 = vpow.pop %v3105
    %v3107 = vadd.f32 %v3106, 1.0
    %v3108 = vrcp.pop %v3107
    %v3109 = vmul.f32 1.0, %v3108
    %v3110 = vtanh.pop %v3101
    %v3111 = vmul.f32 %v3109, %v2840
    %3113 = vrot.lane.b32.xlu0 %v3110, 32
    %v3114 = vpop.permute.xlu0 %3113
    %v3116 = vmul.f32 %v3109, %v3114
    %3118 = vrot.lane.b32.xlu0 %v3116, 32
    %v3119 = vpop.permute.xlu0 %3118
    %v3121 = vadd.f32 %v3111, %v3119
    %v3122 = vtanh.pop %v3121
    %3124 = vrot.lane.b32.xlu0 %v3122, 32
    %v3125 = vpop.permute.xlu0 %3124
    %v3127 = vmul.f32 %v3109, %v3125
    %3129 = vrot.lane.b32.xlu0 %v3127, 64
    %v3130 = vpop.permute.xlu0 %3129
    %v3131 = vsel %vm2346, %v3130, 0
    %3133 = vmatprep.subr.mxu0 0.0
    %3134 = vmatpush1.msra.mxu0 %v2562
    %3135 = vmatprep.subr.mxu0 0.0
    %3136 = vmatpush1.msra.mxu0 %v2563
    %3137 = vmatprep.subr.mxu0 0.0
    %3138 = vmatpush1.msra.mxu0 %v2564
    %3139 = vmatprep.subr.mxu0 0.0
    %3140 = vmatpush1.msra.mxu0 %v2565
    %3141 = vmatprep.subr.mxu0 0.0
    %3142 = vmatpush1.msra.mxu0 0.0
    %3143 = vmatprep.subr.mxu0 0.0
    %3144 = vmatpush1.msra.mxu0 0.0
    %3145 = vmatprep.subr.mxu0 0.0
    %3146 = vmatpush1.msra.mxu0 0.0
    %3147 = vmatprep.subr.mxu0 0.0
    %3148 = vmatpush1.msra.mxu0 0.0
    %3149 = vmatprep.subr.mxu0 0.0
    %3150 = vmatpush1.msra.mxu0 0.0
    %3151 = vmatprep.subr.mxu0 0.0
    %3152 = vmatpush1.msra.mxu0 0.0
    %3153 = vmatprep.subr.mxu0 0.0
    %3154 = vmatpush1.msra.mxu0 0.0
    %3155 = vmatprep.subr.mxu0 0.0
    %3156 = vmatpush1.msra.mxu0 0.0
    %3157 = vmatprep.subr.mxu0 0.0
    %3158 = vmatpush1.msra.mxu0 0.0
    %3159 = vmatprep.subr.mxu0 0.0
    %3160 = vmatpush1.msra.mxu0 0.0
    %3161 = vmatprep.subr.mxu0 0.0
    %3162 = vmatpush1.msra.mxu0 0.0
    %3163 = vmatprep.subr.mxu0 0.0
    %3164 = vmatpush1.msra.mxu0 0.0
    %3165 = vmatprep.subr.mxu0 0.0
    %3166 = vmatpush1.msra.mxu0 0.0
    %3167 = vmatprep.subr.mxu0 0.0
    %3168 = vmatpush1.msra.mxu0 0.0
    %3169 = vmatprep.subr.mxu0 0.0
    %3170 = vmatpush1.msra.mxu0 0.0
    %3171 = vmatprep.subr.mxu0 0.0
    %3172 = vmatpush1.msra.mxu0 0.0
    %3173 = vmatprep.subr.mxu0 0.0
    %3174 = vmatpush1.msra.mxu0 0.0
    %3175 = vmatprep.subr.mxu0 0.0
    %3176 = vmatpush1.msra.mxu0 0.0
    %3177 = vmatprep.subr.mxu0 0.0
    %3178 = vmatpush1.msra.mxu0 0.0
    %3179 = vmatprep.subr.mxu0 0.0
    %3180 = vmatpush1.msra.mxu0 0.0
    %3181 = vmatprep.subr.mxu0 0.0
    %3182 = vmatpush1.msra.mxu0 0.0
    %3183 = vmatprep.subr.mxu0 0.0
    %3184 = vmatpush1.msra.mxu0 0.0
    %3185 = vmatprep.subr.mxu0 0.0
    %3186 = vmatpush1.msra.mxu0 0.0
    %3187 = vmatprep.subr.mxu0 0.0
    %3188 = vmatpush1.msra.mxu0 0.0
    %3189 = vmatprep.subr.mxu0 0.0
    %3190 = vmatpush1.msra.mxu0 0.0
    %3191 = vmatprep.subr.mxu0 0.0
    %3192 = vmatpush1.msra.mxu0 0.0
    %3193 = vmatprep.subr.mxu0 0.0
    %3194 = vmatpush1.msra.mxu0 0.0
    %3195 = vmatprep.subr.mxu0 0.0
    %3196 = vmatpush1.msra.mxu0 0.0
    %3197 = vmatprep.mubr.f32.mxu0 0.0
    %3198 = vmatmul.mubr.f32.gmra.mrb[0].mxu0 %v3131
    %v3199 = vpop.f32.mrb[0].mxu0
    %v3200 = vadd.f32 0.0, %v3199
    %v3201 = vpop.f32.mrb[0].mxu0
    %3202 = vdwg.mxu0
    %v3203 = vtanh.pop %v3200
    %v3204 = vmul.f32 %v3203, 1.442695
    %v3205 = vpow.pop %v3204
    %v3206 = vld [vmem:[#allocation2 + $0x6] sm:$0x3]
    %v3207 = vsel %vm2346, %v3025, 0
    %3209 = vmatprep.subr.mxu0 0.0
    %3210 = vmatpush1.msra.mxu0 %v2342
    %3211 = vmatprep.subr.mxu0 0.0
    %3212 = vmatpush1.msra.mxu0 %v2343
    %3213 = vmatprep.subr.mxu0 0.0
    %3214 = vmatpush1.msra.mxu0 %v2344
    %3215 = vmatprep.subr.mxu0 0.0
    %3216 = vmatpush1.msra.mxu0 %v2345
    %3217 = vmatprep.subr.mxu0 0.0
    %3218 = vmatpush1.msra.mxu0 0.0
    %3219 = vmatprep.subr.mxu0 0.0
    %3220 = vmatpush1.msra.mxu0 0.0
    %3221 = vmatprep.subr.mxu0 0.0
    %3222 = vmatpush1.msra.mxu0 0.0
    %3223 = vmatprep.subr.mxu0 0.0
    %3224 = vmatpush1.msra.mxu0 0.0
    %3225 = vmatprep.subr.mxu0 0.0
    %3226 = vmatpush1.msra.mxu0 0.0
    %3227 = vmatprep.subr.mxu0 0.0
    %3228 = vmatpush1.msra.mxu0 0.0
    %3229 = vmatprep.subr.mxu0 0.0
    %3230 = vmatpush1.msra.mxu0 0.0
    %3231 = vmatprep.subr.mxu0 0.0
    %3232 = vmatpush1.msra.mxu0 0.0
    %3233 = vmatprep.subr.mxu0 0.0
    %3234 = vmatpush1.msra.mxu0 0.0
    %3235 = vmatprep.subr.mxu0 0.0
    %3236 = vmatpush1.msra.mxu0 0.0
    %3237 = vmatprep.subr.mxu0 0.0
    %3238 = vmatpush1.msra.mxu0 0.0
    %3239 = vmatprep.subr.mxu0 0.0
    %3240 = vmatpush1.msra.mxu0 0.0
    %3241 = vmatprep.subr.mxu0 0.0
    %3242 = vmatpush1.msra.mxu0 0.0
    %3243 = vmatprep.subr.mxu0 0.0
    %3244 = vmatpush1.msra.mxu0 0.0
    %3245 = vmatprep.subr.mxu0 0.0
    %3246 = vmatpush1.msra.mxu0 0.0
    %3247 = vmatprep.subr.mxu0 0.0
    %3248 = vmatpush1.msra.mxu0 0.0
    %3249 = vmatprep.subr.mxu0 0.0
    %3250 = vmatpush1.msra.mxu0 0.0
    %3251 = vmatprep.subr.mxu0 0.0
    %3252 = vmatpush1.msra.mxu0 0.0
    %3253 = vmatprep.subr.mxu0 0.0
    %3254 = vmatpush1.msra.mxu0 0.0
    %3255 = vmatprep.subr.mxu0 0.0
    %3256 = vmatpush1.msra.mxu0 0.0
    %3257 = vmatprep.subr.mxu0 0.0
    %3258 = vmatpush1.msra.mxu0 0.0
    %3259 = vmatprep.subr.mxu0 0.0
    %3260 = vmatpush1.msra.mxu0 0.0
    %3261 = vmatprep.subr.mxu0 0.0
    %3262 = vmatpush1.msra.mxu0 0.0
    %3263 = vmatprep.subr.mxu0 0.0
    %3264 = vmatpush1.msra.mxu0 0.0
    %3265 = vmatprep.subr.mxu0 0.0
    %3266 = vmatpush1.msra.mxu0 0.0
    %3267 = vmatprep.subr.mxu0 0.0
    %3268 = vmatpush1.msra.mxu0 0.0
    %3269 = vmatprep.subr.mxu0 0.0
    %3270 = vmatpush1.msra.mxu0 0.0
    %3271 = vmatprep.subr.mxu0 0.0
    %3272 = vmatpush1.msra.mxu0 0.0
    %3273 = vmatprep.mubr.f32.mxu0 0.0
    %3274 = vmatmul.mubr.f32.gmra.mrb[0].mxu0 %v3207
    %v3275 = vpop.f32.mrb[0].mxu0
    %v3276 = vadd.f32 0.0, %v3275
    %v3277 = vpop.f32.mrb[0].mxu0
    %3278 = vdwg.mxu0
    %v3279 = vadd.f32 %v3206, %v3276
    %v3280 = vxor.u32 %v3279, 2147483648
    %v3281 = vmul.f32 %v3280, 1.442695
    %v3282 = vpow.pop %v3281
    %v3283 = vadd.f32 %v3282, 1.0
    %v3284 = vrcp.pop %v3283
    %v3285 = vmul.f32 1.0, %v3284
    %v3286 = vtanh.pop %v3279
    %v3287 = vmul.f32 %v3285, %v3016
    %3289 = vrot.lane.b32.xlu0 %v3286, 32
    %v3290 = vpop.permute.xlu0 %3289
    %v3292 = vmul.f32 %v3285, %v3290
    %3294 = vrot.lane.b32.xlu0 %v3292, 32
    %v3295 = vpop.permute.xlu0 %3294
    %v3297 = vadd.f32 %v3287, %v3295
    %v3298 = vtanh.pop %v3297
    %3300 = vrot.lane.b32.xlu0 %v3298, 32
    %v3301 = vpop.permute.xlu0 %3300
    %v3303 = vmul.f32 %v3285, %v3301
    %3305 = vrot.lane.b32.xlu0 %v3303, 64
    %v3306 = vpop.permute.xlu0 %3305
    %3308 = vrot.lane.b32.xlu0 %v3127, 96
    %v3309 = vpop.permute.xlu0 %3308
    %v3311 = vsel %vm2346, %v3306, %v3309
    %v3313 = vsel %vm1597, %v3311, 0
    %3315 = vmatprep.subr.mxu0 0.0
    %3316 = vmatpush1.msra.mxu0 %v2450
    %3317 = vmatprep.subr.mxu0 0.0
    %3318 = vmatpush1.msra.mxu0 %v2451
    %3319 = vmatprep.subr.mxu0 0.0
    %3320 = vmatpush1.msra.mxu0 %v2452
    %3321 = vmatprep.subr.mxu0 0.0
    %3322 = vmatpush1.msra.mxu0 %v2453
    %3323 = vmatprep.subr.mxu0 0.0
    %3324 = vmatpush1.msra.mxu0 %v2454
    %3325 = vmatprep.subr.mxu0 0.0
    %3326 = vmatpush1.msra.mxu0 %v2455
    %3327 = vmatprep.subr.mxu0 0.0
    %3328 = vmatpush1.msra.mxu0 %v2456
    %3329 = vmatprep.subr.mxu0 0.0
    %3330 = vmatpush1.msra.mxu0 %v2457
    %3331 = vmatprep.subr.mxu0 0.0
    %3332 = vmatpush1.msra.mxu0 0.0
    %3333 = vmatprep.subr.mxu0 0.0
    %3334 = vmatpush1.msra.mxu0 0.0
    %3335 = vmatprep.subr.mxu0 0.0
    %3336 = vmatpush1.msra.mxu0 0.0
    %3337 = vmatprep.subr.mxu0 0.0
    %3338 = vmatpush1.msra.mxu0 0.0
    %3339 = vmatprep.subr.mxu0 0.0
    %3340 = vmatpush1.msra.mxu0 0.0
    %3341 = vmatprep.subr.mxu0 0.0
    %3342 = vmatpush1.msra.mxu0 0.0
    %3343 = vmatprep.subr.mxu0 0.0
    %3344 = vmatpush1.msra.mxu0 0.0
    %3345 = vmatprep.subr.mxu0 0.0
    %3346 = vmatpush1.msra.mxu0 0.0
    %3347 = vmatprep.subr.mxu0 0.0
    %3348 = vmatpush1.msra.mxu0 0.0
    %3349 = vmatprep.subr.mxu0 0.0
    %3350 = vmatpush1.msra.mxu0 0.0
    %3351 = vmatprep.subr.mxu0 0.0
    %3352 = vmatpush1.msra.mxu0 0.0
    %3353 = vmatprep.subr.mxu0 0.0
    %3354 = vmatpush1.msra.mxu0 0.0
    %3355 = vmatprep.subr.mxu0 0.0
    %3356 = vmatpush1.msra.mxu0 0.0
    %3357 = vmatprep.subr.mxu0 0.0
    %3358 = vmatpush1.msra.mxu0 0.0
    %3359 = vmatprep.subr.mxu0 0.0
    %3360 = vmatpush1.msra.mxu0 0.0
    %3361 = vmatprep.subr.mxu0 0.0
    %3362 = vmatpush1.msra.mxu0 0.0
    %3363 = vmatprep.subr.mxu0 0.0
    %3364 = vmatpush1.msra.mxu0 0.0
    %3365 = vmatprep.subr.mxu0 0.0
    %3366 = vmatpush1.msra.mxu0 0.0
    %3367 = vmatprep.subr.mxu0 0.0
    %3368 = vmatpush1.msra.mxu0 0.0
    %3369 = vmatprep.subr.mxu0 0.0
    %3370 = vmatpush1.msra.mxu0 0.0
    %3371 = vmatprep.subr.mxu0 0.0
    %3372 = vmatpush1.msra.mxu0 0.0
    %3373 = vmatprep.subr.mxu0 0.0
    %3374 = vmatpush1.msra.mxu0 0.0
    %3375 = vmatprep.subr.mxu0 0.0
    %3376 = vmatpush1.msra.mxu0 0.0
    %3377 = vmatprep.subr.mxu0 0.0
    %3378 = vmatpush1.msra.mxu0 0.0
    %3379 = vmatprep.mubr.f32.mxu0 0.0
    %3380 = vmatmul.mubr.f32.gmra.mrb[0].mxu0 %v3313
    %v3381 = vpop.f32.mrb[0].mxu0
    %v3382 = vadd.f32 %v2463, %v3381
    %v3383 = vpop.f32.mrb[0].mxu0
    %3384 = vdwg.mxu0
    %v3385 = vxor.u32 %v3382, 2147483648
    %v3386 = vmul.f32 %v3385, 1.442695
    %v3387 = vpow.pop %v3386
    %v3388 = vadd.f32 %v3387, 1.0
    %v3389 = vrcp.pop %v3388
    %v3390 = vmul.f32 1.0, %v3389
    %v3391 = vtanh.pop %v3382
    %v3392 = vmul.f32 %v3390, %v3121
    %3394 = vrot.lane.b32.xlu0 %v3391, 32
    %v3395 = vpop.permute.xlu0 %3394
    %v3397 = vmul.f32 %v3390, %v3395
    %3399 = vrot.lane.b32.xlu0 %v3397, 32
    %v3400 = vpop.permute.xlu0 %3399
    %v3402 = vadd.f32 %v3392, %v3400
    %v3403 = vtanh.pop %v3402
    %3405 = vrot.lane.b32.xlu0 %v3403, 32
    %v3406 = vpop.permute.xlu0 %3405
    %v3408 = vmul.f32 %v3390, %v3406
    %3410 = vrot.lane.b32.xlu0 %v3408, 64
    %v3411 = vpop.permute.xlu0 %3410
    %v3412 = vsel %vm2346, %v3411, 0
    %3414 = vmatprep.subr.mxu0 0.0
    %3415 = vmatpush1.msra.mxu0 %v2562
    %3416 = vmatprep.subr.mxu0 0.0
    %3417 = vmatpush1.msra.mxu0 %v2563
    %3418 = vmatprep.subr.mxu0 0.0
    %3419 = vmatpush1.msra.mxu0 %v2564
    %3420 = vmatprep.subr.mxu0 0.0
    %3421 = vmatpush1.msra.mxu0 %v2565
    %3422 = vmatprep.subr.mxu0 0.0
    %3423 = vmatpush1.msra.mxu0 0.0
    %3424 = vmatprep.subr.mxu0 0.0
    %3425 = vmatpush1.msra.mxu0 0.0
    %3426 = vmatprep.subr.mxu0 0.0
    %3427 = vmatpush1.msra.mxu0 0.0
    %3428 = vmatprep.subr.mxu0 0.0
    %3429 = vmatpush1.msra.mxu0 0.0
    %3430 = vmatprep.subr.mxu0 0.0
    %3431 = vmatpush1.msra.mxu0 0.0
    %3432 = vmatprep.subr.mxu0 0.0
    %3433 = vmatpush1.msra.mxu0 0.0
    %3434 = vmatprep.subr.mxu0 0.0
    %3435 = vmatpush1.msra.mxu0 0.0
    %3436 = vmatprep.subr.mxu0 0.0
    %3437 = vmatpush1.msra.mxu0 0.0
    %3438 = vmatprep.subr.mxu0 0.0
    %3439 = vmatpush1.msra.mxu0 0.0
    %3440 = vmatprep.subr.mxu0 0.0
    %3441 = vmatpush1.msra.mxu0 0.0
    %3442 = vmatprep.subr.mxu0 0.0
    %3443 = vmatpush1.msra.mxu0 0.0
    %3444 = vmatprep.subr.mxu0 0.0
    %3445 = vmatpush1.msra.mxu0 0.0
    %3446 = vmatprep.subr.mxu0 0.0
    %3447 = vmatpush1.msra.mxu0 0.0
    %3448 = vmatprep.subr.mxu0 0.0
    %3449 = vmatpush1.msra.mxu0 0.0
    %3450 = vmatprep.subr.mxu0 0.0
    %3451 = vmatpush1.msra.mxu0 0.0
    %3452 = vmatprep.subr.mxu0 0.0
    %3453 = vmatpush1.msra.mxu0 0.0
    %3454 = vmatprep.subr.mxu0 0.0
    %3455 = vmatpush1.msra.mxu0 0.0
    %3456 = vmatprep.subr.mxu0 0.0
    %3457 = vmatpush1.msra.mxu0 0.0
    %3458 = vmatprep.subr.mxu0 0.0
    %3459 = vmatpush1.msra.mxu0 0.0
    %3460 = vmatprep.subr.mxu0 0.0
    %3461 = vmatpush1.msra.mxu0 0.0
    %3462 = vmatprep.subr.mxu0 0.0
    %3463 = vmatpush1.msra.mxu0 0.0
    %3464 = vmatprep.subr.mxu0 0.0
    %3465 = vmatpush1.msra.mxu0 0.0
    %3466 = vmatprep.subr.mxu0 0.0
    %3467 = vmatpush1.msra.mxu0 0.0
    %3468 = vmatprep.subr.mxu0 0.0
    %3469 = vmatpush1.msra.mxu0 0.0
    %3470 = vmatprep.subr.mxu0 0.0
    %3471 = vmatpush1.msra.mxu0 0.0
    %3472 = vmatprep.subr.mxu0 0.0
    %3473 = vmatpush1.msra.mxu0 0.0
    %3474 = vmatprep.subr.mxu0 0.0
    %3475 = vmatpush1.msra.mxu0 0.0
    %3476 = vmatprep.subr.mxu0 0.0
    %3477 = vmatpush1.msra.mxu0 0.0
    %3478 = vmatprep.mubr.f32.mxu0 0.0
    %3479 = vmatmul.mubr.f32.gmra.mrb[0].mxu0 %v3412
    %v3480 = vpop.f32.mrb[0].mxu0
    %v3481 = vadd.f32 0.0, %v3480
    %v3482 = vpop.f32.mrb[0].mxu0
    %3483 = vdwg.mxu0
    %v3484 = vtanh.pop %v3481
    %v3485 = vmul.f32 %v3484, 1.442695
    %v3486 = vpow.pop %v3485
    %v3487 = vadd.f32 %v2643, %v2924
    %v3488 = vadd.f32 %v3487, %v3205
    %v3489 = vadd.f32 %v3488, %v3486
    %v3490 = vrcp.pop %v3489
    %v3491 = vmul.f32 1.0, %v3490
    %v3492 = vmul.f32 %v2643, %v3491
    %3494 = vset.pattern.permute.xlu0 0
    %3495 = vperm.xlu0 %3494, %v3492
    %v3496 = vpop.permute.xlu0 %3495
    %v3498 = vmul.f32 %v3496, %v2561
    %v3499 = vadd.f32 %v3498, 0.0
    %3500 = vset.pattern.permute.xlu0 1
    %3501 = vperm.xlu0 %3500, %v3492
    %v3502 = vpop.permute.xlu0 %3501
    %v3504 = vmul.f32 %v3502, %v2561
    %v3505 = vadd.f32 %v3504, 0.0
    %v3506 = vmul.f32 %v2924, %v3491
    %3508 = vset.pattern.permute.xlu0 0
    %3509 = vperm.xlu0 %3508, %v3506
    %v3510 = vpop.permute.xlu0 %3509
    %v3512 = vmul.f32 %v3510, %v2846
    %v3513 = vadd.f32 %v3499, %v3512
    %3514 = vset.pattern.permute.xlu0 1
    %3515 = vperm.xlu0 %3514, %v3506
    %v3516 = vpop.permute.xlu0 %3515
    %v3518 = vmul.f32 %v3516, %v2846
    %v3519 = vadd.f32 %v3505, %v3518
    %v3520 = vmul.f32 %v3205, %v3491
    %3522 = vset.pattern.permute.xlu0 0
    %3523 = vperm.xlu0 %3522, %v3520
    %v3524 = vpop.permute.xlu0 %3523
    %v3526 = vmul.f32 %v3524, %v3127
    %v3527 = vadd.f32 %v3513, %v3526
    %3528 = vset.pattern.permute.xlu0 1
    %3529 = vperm.xlu0 %3528, %v3520
    %v3530 = vpop.permute.xlu0 %3529
    %v3532 = vmul.f32 %v3530, %v3127
    %v3533 = vadd.f32 %v3519, %v3532
    %v3534 = vmul.f32 %v3486, %v3491
    %3536 = vset.pattern.permute.xlu0 0
    %3537 = vperm.xlu0 %3536, %v3534
    %v3538 = vpop.permute.xlu0 %3537
    %v3540 = vmul.f32 %v3538, %v3408
    %v3541 = vadd.f32 %v3527, %v3540
    %3542 = vset.pattern.permute.xlu0 1
    %3543 = vperm.xlu0 %3542, %v3534
    %v3544 = vpop.permute.xlu0 %3543
    %v3546 = vmul.f32 %v3544, %v3408
    %v3547 = vadd.f32 %v3533, %v3546
    %3549 = vrot.lane.b32.xlu0 %v3541, 64
    %v3550 = vpop.permute.xlu0 %3549
    %3553 = vrot.lane.b32.xlu0 %v3547, 64
    %v3554 = vpop.permute.xlu0 %3553
    %vm3556 = vcmask 130048
    %v3557 = vsel %vm3556, %v3550, %v3554
    %v3558 = vld [vmem:[%s12] sm:$0xff]
    %v3559 = vld [vmem:[%s12 + $0x8] sm:$0xff]
    %v3560 = vld [vmem:[%s12 + $0x10] sm:$0xff]
    %v3561 = vld [vmem:[%s12 + $0x18] sm:$0xff]
    %v3562 = vld [vmem:[#allocation10] sm:$0x1]
    %v3564 = vlaneseq
    %v3565 = vshrl.u32 %v3564, 7
    %v3566 = vsub.s32 0, %v3565
    %v3567 = vrot.slane %v3562, %v3566
    %v3570 = vsel %vm2346, %v3557, 0
    %3572 = vmatprep.subr.mxu0 0.0
    %3573 = vmatpush1.msra.mxu0 %v3558
    %3574 = vmatprep.subr.mxu0 0.0
    %3575 = vmatpush1.msra.mxu0 %v3559
    %3576 = vmatprep.subr.mxu0 0.0
    %3577 = vmatpush1.msra.mxu0 %v3560
    %3578 = vmatprep.subr.mxu0 0.0
    %3579 = vmatpush1.msra.mxu0 %v3561
    %3580 = vmatprep.subr.mxu0 0.0
    %3581 = vmatpush1.msra.mxu0 0.0
    %3582 = vmatprep.subr.mxu0 0.0
    %3583 = vmatpush1.msra.mxu0 0.0
    %3584 = vmatprep.subr.mxu0 0.0
    %3585 = vmatpush1.msra.mxu0 0.0
    %3586 = vmatprep.subr.mxu0 0.0
    %3587 = vmatpush1.msra.mxu0 0.0
    %3588 = vmatprep.subr.mxu0 0.0
    %3589 = vmatpush1.msra.mxu0 0.0
    %3590 = vmatprep.subr.mxu0 0.0
    %3591 = vmatpush1.msra.mxu0 0.0
    %3592 = vmatprep.subr.mxu0 0.0
    %3593 = vmatpush1.msra.mxu0 0.0
    %3594 = vmatprep.subr.mxu0 0.0
    %3595 = vmatpush1.msra.mxu0 0.0
    %3596 = vmatprep.subr.mxu0 0.0
    %3597 = vmatpush1.msra.mxu0 0.0
    %3598 = vmatprep.subr.mxu0 0.0
    %3599 = vmatpush1.msra.mxu0 0.0
    %3600 = vmatprep.subr.mxu0 0.0
    %3601 = vmatpush1.msra.mxu0 0.0
    %3602 = vmatprep.subr.mxu0 0.0
    %3603 = vmatpush1.msra.mxu0 0.0
    %3604 = vmatprep.subr.mxu0 0.0
    %3605 = vmatpush1.msra.mxu0 0.0
    %3606 = vmatprep.subr.mxu0 0.0
    %3607 = vmatpush1.msra.mxu0 0.0
    %3608 = vmatprep.subr.mxu0 0.0
    %3609 = vmatpush1.msra.mxu0 0.0
    %3610 = vmatprep.subr.mxu0 0.0
    %3611 = vmatpush1.msra.mxu0 0.0
    %3612 = vmatprep.subr.mxu0 0.0
    %3613 = vmatpush1.msra.mxu0 0.0
    %3614 = vmatprep.subr.mxu0 0.0
    %3615 = vmatpush1.msra.mxu0 0.0
    %3616 = vmatprep.subr.mxu0 0.0
    %3617 = vmatpush1.msra.mxu0 0.0
    %3618 = vmatprep.subr.mxu0 0.0
    %3619 = vmatpush1.msra.mxu0 0.0
    %3620 = vmatprep.subr.mxu0 0.0
    %3621 = vmatpush1.msra.mxu0 0.0
    %3622 = vmatprep.subr.mxu0 0.0
    %3623 = vmatpush1.msra.mxu0 0.0
    %3624 = vmatprep.subr.mxu0 0.0
    %3625 = vmatpush1.msra.mxu0 0.0
    %3626 = vmatprep.subr.mxu0 0.0
    %3627 = vmatpush1.msra.mxu0 0.0
    %3628 = vmatprep.subr.mxu0 0.0
    %3629 = vmatpush1.msra.mxu0 0.0
    %3630 = vmatprep.subr.mxu0 0.0
    %3631 = vmatpush1.msra.mxu0 0.0
    %3632 = vmatprep.subr.mxu0 0.0
    %3633 = vmatpush1.msra.mxu0 0.0
    %3634 = vmatprep.subr.mxu0 0.0
    %3635 = vmatpush1.msra.mxu0 0.0
    %3636 = vmatprep.mubr.f32.mxu0 0.0
    %3637 = vmatmul.mubr.f32.gmra.mrb[0].mxu0 %v3570
    %v3638 = vpop.f32.mrb[0].mxu0
    %v3639 = vadd.f32 %v3567, %v3638
    %v3640 = vpop.f32.mrb[0].mxu0
    %3641 = vdwg.mxu0
    %3643 = vrot.lane.b32.xlu0 %v3639, 120
    %v3644 = vpop.permute.xlu0 %3643
    %v3646 = vadd.f32 %v3639, %v3644
    %v3647 = vld [vmem:[#allocation11] sm:$0xff]
    %v3648 = vld [vmem:[#allocation13] sm:$0x1]
    %v3650 = vlaneseq
    %v3651 = vshrl.u32 %v3650, 7
    %v3652 = vsub.s32 0, %v3651
    %v3653 = vrot.slane %v3648, %v3652
    %v3656 = vsel %vm296, %v3646, 0
    %3658 = vmatprep.subr.mxu0 0.0
    %3659 = vmatpush1.msra.mxu0 %v3647
    %3660 = vmatprep.subr.mxu0 0.0
    %3661 = vmatpush1.msra.mxu0 0.0
    %3662 = vmatprep.subr.mxu0 0.0
    %3663 = vmatpush1.msra.mxu0 0.0
    %3664 = vmatprep.subr.mxu0 0.0
    %3665 = vmatpush1.msra.mxu0 0.0
    %3666 = vmatprep.subr.mxu0 0.0
    %3667 = vmatpush1.msra.mxu0 0.0
    %3668 = vmatprep.subr.mxu0 0.0
    %3669 = vmatpush1.msra.mxu0 0.0
    %3670 = vmatprep.subr.mxu0 0.0
    %3671 = vmatpush1.msra.mxu0 0.0
    %3672 = vmatprep.subr.mxu0 0.0
    %3673 = vmatpush1.msra.mxu0 0.0
    %3674 = vmatprep.subr.mxu0 0.0
    %3675 = vmatpush1.msra.mxu0 0.0
    %3676 = vmatprep.subr.mxu0 0.0
    %3677 = vmatpush1.msra.mxu0 0.0
    %3678 = vmatprep.subr.mxu0 0.0
    %3679 = vmatpush1.msra.mxu0 0.0
    %3680 = vmatprep.subr.mxu0 0.0
    %3681 = vmatpush1.msra.mxu0 0.0
    %3682 = vmatprep.subr.mxu0 0.0
    %3683 = vmatpush1.msra.mxu0 0.0
    %3684 = vmatprep.subr.mxu0 0.0
    %3685 = vmatpush1.msra.mxu0 0.0
    %3686 = vmatprep.subr.mxu0 0.0
    %3687 = vmatpush1.msra.mxu0 0.0
    %3688 = vmatprep.subr.mxu0 0.0
    %3689 = vmatpush1.msra.mxu0 0.0
    %3690 = vmatprep.subr.mxu0 0.0
    %3691 = vmatpush1.msra.mxu0 0.0
    %3692 = vmatprep.subr.mxu0 0.0
    %3693 = vmatpush1.msra.mxu0 0.0
    %3694 = vmatprep.subr.mxu0 0.0
    %3695 = vmatpush1.msra.mxu0 0.0
    %3696 = vmatprep.subr.mxu0 0.0
    %3697 = vmatpush1.msra.mxu0 0.0
    %3698 = vmatprep.subr.mxu0 0.0
    %3699 = vmatpush1.msra.mxu0 0.0
    %3700 = vmatprep.subr.mxu0 0.0
    %3701 = vmatpush1.msra.mxu0 0.0
    %3702 = vmatprep.subr.mxu0 0.0
    %3703 = vmatpush1.msra.mxu0 0.0
    %3704 = vmatprep.subr.mxu0 0.0
    %3705 = vmatpush1.msra.mxu0 0.0
    %3706 = vmatprep.subr.mxu0 0.0
    %3707 = vmatpush1.msra.mxu0 0.0
    %3708 = vmatprep.subr.mxu0 0.0
    %3709 = vmatpush1.msra.mxu0 0.0
    %3710 = vmatprep.subr.mxu0 0.0
    %3711 = vmatpush1.msra.mxu0 0.0
    %3712 = vmatprep.subr.mxu0 0.0
    %3713 = vmatpush1.msra.mxu0 0.0
    %3714 = vmatprep.subr.mxu0 0.0
    %3715 = vmatpush1.msra.mxu0 0.0
    %3716 = vmatprep.subr.mxu0 0.0
    %3717 = vmatpush1.msra.mxu0 0.0
    %3718 = vmatprep.subr.mxu0 0.0
    %3719 = vmatpush1.msra.mxu0 0.0
    %3720 = vmatprep.subr.mxu0 0.0
    %3721 = vmatpush1.msra.mxu0 0.0
    %3722 = vmatprep.mubr.f32.mxu0 0.0
    %3723 = vmatmul.mubr.f32.gmra.mrb[0].mxu0 %v3656
    %v3724 = vpop.f32.mrb[0].mxu0
    %v3725 = vadd.f32 %v3653, %v3724
    %v3726 = vpop.f32.mrb[0].mxu0
    %3727 = vdwg.mxu0
    %v3728 = vmax.f32 %v3725, 0.0
    %3729 = vrot.lane.b32.xlu0 %v3639, 32
    %v3730 = vpop.permute.xlu0 %3729
    %v3732 = vsel %vm2346, %v3728, %v3730
    %v3733 = vld [vmem:[%s16] sm:$0xff]
    %v3734 = vld [vmem:[%s16 + $0x8] sm:$0xff]
    %v3735 = vld [vmem:[%s16 + $0x10] sm:$0xff]
    %v3736 = vld [vmem:[%s16 + $0x18] sm:$0xff]
    %v3737 = vld [vmem:[%s16 + $0x20] sm:$0xff]
    %v3738 = vld [vmem:[%s16 + $0x28] sm:$0xff]
    %v3739 = vld [vmem:[#allocation14] sm:$0x1]
    %v3741 = vlaneseq
    %v3742 = vshrl.u32 %v3741, 7
    %v3743 = vsub.s32 0, %v3742
    %v3744 = vrot.slane %v3739, %v3743
    %vm3746 = vcmask 392192
    %v3748 = vsel %vm3746, %v3732, 0
    %3750 = vmatprep.subr.mxu0 0.0
    %3751 = vmatpush1.msra.mxu0 %v3733
    %3752 = vmatprep.subr.mxu0 0.0
    %3753 = vmatpush1.msra.mxu0 %v3734
    %3754 = vmatprep.subr.mxu0 0.0
    %3755 = vmatpush1.msra.mxu0 %v3735
    %3756 = vmatprep.subr.mxu0 0.0
    %3757 = vmatpush1.msra.mxu0 %v3736
    %3758 = vmatprep.subr.mxu0 0.0
    %3759 = vmatpush1.msra.mxu0 %v3737
    %3760 = vmatprep.subr.mxu0 0.0
    %3761 = vmatpush1.msra.mxu0 %v3738
    %3762 = vmatprep.subr.mxu0 0.0
    %3763 = vmatpush1.msra.mxu0 0.0
    %3764 = vmatprep.subr.mxu0 0.0
    %3765 = vmatpush1.msra.mxu0 0.0
    %3766 = vmatprep.subr.mxu0 0.0
    %3767 = vmatpush1.msra.mxu0 0.0
    %3768 = vmatprep.subr.mxu0 0.0
    %3769 = vmatpush1.msra.mxu0 0.0
    %3770 = vmatprep.subr.mxu0 0.0
    %3771 = vmatpush1.msra.mxu0 0.0
    %3772 = vmatprep.subr.mxu0 0.0
    %3773 = vmatpush1.msra.mxu0 0.0
    %3774 = vmatprep.subr.mxu0 0.0
    %3775 = vmatpush1.msra.mxu0 0.0
    %3776 = vmatprep.subr.mxu0 0.0
    %3777 = vmatpush1.msra.mxu0 0.0
    %3778 = vmatprep.subr.mxu0 0.0
    %3779 = vmatpush1.msra.mxu0 0.0
    %3780 = vmatprep.subr.mxu0 0.0
    %3781 = vmatpush1.msra.mxu0 0.0
    %3782 = vmatprep.subr.mxu0 0.0
    %3783 = vmatpush1.msra.mxu0 0.0
    %3784 = vmatprep.subr.mxu0 0.0
    %3785 = vmatpush1.msra.mxu0 0.0
    %3786 = vmatprep.subr.mxu0 0.0
    %3787 = vmatpush1.msra.mxu0 0.0
    %3788 = vmatprep.subr.mxu0 0.0
    %3789 = vmatpush1.msra.mxu0 0.0
    %3790 = vmatprep.subr.mxu0 0.0
    %3791 = vmatpush1.msra.mxu0 0.0
    %3792 = vmatprep.subr.mxu0 0.0
    %3793 = vmatpush1.msra.mxu0 0.0
    %3794 = vmatprep.subr.mxu0 0.0
    %3795 = vmatpush1.msra.mxu0 0.0
    %3796 = vmatprep.subr.mxu0 0.0
    %3797 = vmatpush1.msra.mxu0 0.0
    %3798 = vmatprep.subr.mxu0 0.0
    %3799 = vmatpush1.msra.mxu0 0.0
    %3800 = vmatprep.subr.mxu0 0.0
    %3801 = vmatpush1.msra.mxu0 0.0
    %3802 = vmatprep.subr.mxu0 0.0
    %3803 = vmatpush1.msra.mxu0 0.0
    %3804 = vmatprep.subr.mxu0 0.0
    %3805 = vmatpush1.msra.mxu0 0.0
    %3806 = vmatprep.subr.mxu0 0.0
    %3807 = vmatpush1.msra.mxu0 0.0
    %3808 = vmatprep.subr.mxu0 0.0
    %3809 = vmatpush1.msra.mxu0 0.0
    %3810 = vmatprep.subr.mxu0 0.0
    %3811 = vmatpush1.msra.mxu0 0.0
    %3812 = vmatprep.subr.mxu0 0.0
    %3813 = vmatpush1.msra.mxu0 0.0
    %3814 = vmatprep.mubr.f32.mxu0 0.0
    %3815 = vmatmul.mubr.f32.gmra.mrb[0].mxu0 %v3748
    %v3816 = vpop.f32.mrb[0].mxu0
    %v3817 = vadd.f32 %v3744, %v3816
    %v3818 = vpop.f32.mrb[0].mxu0
    %3819 = vdwg.mxu0
    %v3820 = vmax.f32 %v3817, 0.0
    %vm3821 = vcmask 254976
    %3822 = vst.msk [vmem:[%s18] sm:$0x3] %vm3821, %v3820
    // Predicated region
    $region106: #{net_forward_fn.1} parent=1 // pred_check
      _
    $region107: #{net_forward_fn.1} parent=1 // pred_check_branch
      %3824 = sbr.rel (0) target = $region109
    $region108: #{net_forward_fn.1} parent=1 // pred_region
      _
    $region109: #{net_forward_fn.1} parent=1 // pred_fallthru
      _
    // Predicated region
    $region110: #{net_forward_fn.1} parent=1 // pred_check
      _
    $region111: #{net_forward_fn.1} parent=1 // pred_check_branch
      %3826 = sbr.rel (0) target = $region113
    $region112: #{net_forward_fn.1} parent=1 // pred_region
      _
    $region113: #{net_forward_fn.1} parent=1 // pred_fallthru
      _
    %3827 = vsyncpa [#allocation4], 1
    %3828 = vsyncpa [#allocation6], 1
    %3829 = vsyncpa [#allocation9], 1
    %3830 = vsyncpa [#allocation12], 1
    %3831 = vsyncpa [#allocation15], 1

</llo_original>
